<compile_context>
chip_gen: v7x
topology: tpu7x:2x2x1
jax: 0.10.0
libtpu: 0.0.40
codegen_flags: <defaults>
</compile_context>

<pallas_src>
import numpy as np
import jax
import jax.numpy as jnp
from jax.experimental import pallas as pl
from jax.experimental.pallas import tpu as pltpu

# ---------------- configuration ----------------
B, T = 2, 2
OBJ_H, OBJ_W = 2, 2
LAT_H, LAT_W = 4, 4
LO = OBJ_H * OBJ_W            # latent_obj_size = 4
L = LAT_H * LAT_W             # latent_size     = 16
NO = 2                        # num_obj
C = 32                        # embed_dim
NUM_HEADS = 2
DH = C // NUM_HEADS           # 16
DEPTH = 2
MLP_RATIO = 4
HID = MLP_RATIO * C           # 128
POSE_SIZE = 8
SCALE_SIZE = 0                # bound_scale = False
OCC_SIZE = 1
HEAD_OUT = POSE_SIZE + SCALE_SIZE + OCC_SIZE   # 9
HEAD_PAD = 128                # lane-dense head-output width
S = NO * LO + L               # 24 tokens per (b, t)   (has_bg = False)
BT = B * T                    # 4
BTS = BT * S                  # 96 token rows for the whole batch
NH = BT * NO * LO             # 32 object-token rows fed to the head

INIT_SCALE_OBJ = 0.5
ASPECT_RATIO = 1.0
MUL_DELTA_OBJ = 0.1
MUL_SCALE_OBJ = 0.1
USE_DELTA = True
LN_EPS = 1e-5

# ---- layout of the [SLAB_ROWS, 128] "everything else" slab ----
W2T_R0 = BTS                   # rows 96..159 : w2^T per block ([32,128] each)
HW_R0 = W2T_R0 + DEPTH * C     # rows 160..191: folded head weight [32,128]
BIAS_R0 = HW_R0 + C            # rows 192..199: 4 bias rows per block
HB_ROW = BIAS_R0 + DEPTH * 4   # row  200     : folded head bias
SLAB_ROWS = 208                # padded to a multiple of 8 sublanes


# ---------------- helpers ----------------
def get_grid(h, w):
    ys = np.linspace(-1.0, 1.0, h)
    xs = np.linspace(-1.0, 1.0, w)
    gy, gx = np.meshgrid(ys, xs, indexing='ij')
    return np.stack([gx, gy], axis=-1).reshape(h * w, 2).astype(np.float32)


def _unit_ln(z):
    # LayerNorm WITHOUT affine (the affine is folded into the following matmul).
    mu = jnp.mean(z, axis=-1, keepdims=True)
    zc = z - mu
    var = jnp.mean(zc * zc, axis=-1, keepdims=True)
    return zc * jax.lax.rsqrt(var + LN_EPS)


# ---------------- the single fused kernel ----------------
# inputs:
#   xt_ref   [BTS, C]          token activations (objects-first permuted layout)
#   mats_ref [DEPTH, C, 8C]    per block: [wqkv_folded | wproj | w1_folded]
#   slab_ref [SLAB_ROWS, 128]  rows 0..95 mask, 96..159 w2^T, 160..191 head_w,
#                              192..199 bias rows, 200 head_b
# output:
#   out_ref  [NH, HEAD_PAD]    lane-dense head output (cols >= HEAD_OUT are 0)
# scratch:
#   qkv_s    [BTS, 3C]         staged qkv (relieves vreg pressure)
def fused_kernel(xt_ref, mats_ref, slab_ref, out_ref, qkv_s):
    x = xt_ref[...]                                              # [96, 32]

    for d in range(DEPTH):                                       # unrolled, static
        # ---- attention (LN1 affine + softmax scale folded into wqkv/bqkv) ----
        wqkv = mats_ref[d, :, 0:3 * C]                           # [32, 96]
        bqkv = slab_ref[BIAS_R0 + 4 * d: BIAS_R0 + 4 * d + 1, 0:3 * C]
        qkv_s[...] = (jnp.dot(_unit_ln(x), wqkv,
                              preferred_element_type=jnp.float32) + bqkv)

        for hh in range(NUM_HEADS):
            qh = qkv_s[:, hh * DH:(hh + 1) * DH]                 # [96, 16]
            kh = qkv_s[:, C + hh * DH:C + (hh + 1) * DH]
            vh = qkv_s[:, 2 * C + hh * DH:2 * C + (hh + 1) * DH]
            s = jax.lax.dot_general(qh, kh, (((1,), (1,)), ((), ())),
                                    preferred_element_type=jnp.float32)  # [96, 96]
            s = s + slab_ref[0:BTS, 0:BTS]                       # block-diagonal mask bias
            s = s - jnp.max(s, axis=-1, keepdims=True)           # safe softmax
            e = jnp.exp(s)
            p = e * pl.reciprocal(jnp.sum(e, axis=-1, keepdims=True), approx=True)
            oh = jnp.dot(p, vh, preferred_element_type=jnp.float32)          # [96, 16]
            wproj_h = mats_ref[d, hh * DH:(hh + 1) * DH, 3 * C:4 * C]         # [16, 32]
            x = x + jnp.dot(oh, wproj_h, preferred_element_type=jnp.float32)
        x = x + slab_ref[BIAS_R0 + 4 * d + 1: BIAS_R0 + 4 * d + 2, 0:C]       # bproj

        # ---- MLP (LN2 affine folded into w1/b1) ----
        w1 = mats_ref[d, :, 4 * C:4 * C + HID]                                # [32, 128]
        b1 = slab_ref[BIAS_R0 + 4 * d + 2: BIAS_R0 + 4 * d + 3, 0:HID]
        m = jnp.dot(_unit_ln(x), w1, preferred_element_type=jnp.float32) + b1
        m = jax.nn.gelu(m, approximate=True)
        w2t = slab_ref[W2T_R0 + d * C: W2T_R0 + (d + 1) * C, :]               # [32, 128] = w2^T
        b2 = slab_ref[BIAS_R0 + 4 * d + 3: BIAS_R0 + 4 * d + 4, 0:C]
        x = x + jax.lax.dot_general(m, w2t, (((1,), (1,)), ((), ())),
                                    preferred_element_type=jnp.float32) + b2

    # ---- head: object tokens are the first NH rows (wrapper-side layout) ----
    hn = _unit_ln(x[0:NH, :])                                                 # [32, 32]
    hw = slab_ref[HW_R0:HW_R0 + C, :]                                         # [32, 128]
    hb = slab_ref[HB_ROW:HB_ROW + 1, :]                                       # [1, 128]
    out_ref[...] = jnp.dot(hn, hw, preferred_element_type=jnp.float32) + hb


def fused_forward_call(xt_flat, packed):
    # No grid: one invocation, everything resident in VMEM (working set < 0.3 MiB).
    vmem = pl.BlockSpec(memory_space=pltpu.MemorySpace.VMEM)
    return pl.pallas_call(
        fused_kernel,
        out_shape=jax.ShapeDtypeStruct((NH, HEAD_PAD), jnp.float32),
        in_specs=[vmem, vmem, vmem],
        out_specs=vmem,
        scratch_shapes=[pltpu.VMEM((BTS, 3 * C), jnp.float32)],
        cost_estimate=pl.CostEstimate(flops=8_000_000, transcendentals=64_000,
                                      bytes_accessed=220_000),
    )(xt_flat, packed['matsA'], packed['slabB'])


# ---------------- parameters ----------------
def init_params(key):
    keys = iter(jax.random.split(key, 64))

    def nrm(shape, std=0.02):
        return std * jax.random.normal(next(keys), shape, dtype=jnp.float32)

    params = {
        'pos_embed': nrm((1, 1, L, C)),
        'obj_embed': nrm((1, 1, LO, C)),
        'blocks': [],
        'head_ln_g': jnp.ones((1, C), jnp.float32),
        'head_ln_b': jnp.zeros((1, C), jnp.float32),
        'head_w': nrm((C, HEAD_OUT), std=0.05),    # init_mode != 'zero'
        'head_b': jnp.zeros((1, HEAD_OUT), jnp.float32),
    }
    for _ in range(DEPTH):
        params['blocks'].append({
            'ln1_g': jnp.ones((1, C), jnp.float32), 'ln1_b': jnp.zeros((1, C), jnp.float32),
            'wqkv': nrm((C, 3 * C)), 'bqkv': jnp.zeros((1, 3 * C), jnp.float32),
            'wproj': nrm((C, C)), 'bproj': jnp.zeros((1, C), jnp.float32),
            'ln2_g': jnp.ones((1, C), jnp.float32), 'ln2_b': jnp.zeros((1, C), jnp.float32),
            'w1': nrm((C, HID)), 'b1': jnp.zeros((1, HID), jnp.float32),
            'w2': nrm((HID, C)), 'b2': jnp.zeros((1, C), jnp.float32),
        })
    # buffers (pts_mode='prior', default bias)
    params['tgt_pts'] = jnp.asarray(get_grid(OBJ_H, OBJ_W))                      # [Lo, 2]
    params['mul'] = jnp.array([[MUL_DELTA_OBJ, MUL_DELTA_OBJ,
                                MUL_SCALE_OBJ, MUL_SCALE_OBJ,
                                MUL_SCALE_OBJ, MUL_SCALE_OBJ, 1.0, 1.0]], jnp.float32)
    params['bias'] = jnp.array([[0.0, 0.0, INIT_SCALE_OBJ, 0.0, 0.0,
                                 ASPECT_RATIO * INIT_SCALE_OBJ, 0.0, 0.0]], jnp.float32)
    params['occ_bias'] = jnp.array([[2.0 * i for i in range(NO)]], jnp.float32)  # [1, No]
    return params


def pack_params(params):
    """One-time, host/XLA-side packing + constant folding into 2 lane-friendly slabs."""
    sm_scale = 1.0 / float(DH) ** 0.5

    def padc(a):
        a = jnp.asarray(a, jnp.float32)
        if a.ndim == 1:
            a = a.reshape(1, -1)
        return jnp.pad(a, ((0, 0), (0, 128 - a.shape[1])))

    # invariant block-diagonal attention mask for the permuted (objects-first) layout
    seq_ids = np.concatenate([np.repeat(np.arange(BT), NO * LO),
                              np.repeat(np.arange(BT), L)])
    mask = np.where(seq_ids[:, None] == seq_ids[None, :], 0.0, -1e30).astype(np.float32)
    mask = np.pad(mask, ((0, 0), (0, 128 - BTS)))                                # [96, 128]

    matsA, w2t_chunks, bias_rows = [], [], []
    for bp in params['blocks']:
        g1 = bp['ln1_g'].reshape(C, 1)
        g2 = bp['ln2_g'].reshape(C, 1)
        # fold LN1 affine into wqkv/bqkv, then the softmax scale into the Q part
        wqkv_f = (g1 * bp['wqkv']).at[:, :C].multiply(sm_scale)
        bqkv_f = (bp['ln1_b'] @ bp['wqkv'] + bp['bqkv']).at[:, :C].multiply(sm_scale)
        # fold LN2 affine into w1/b1
        w1_f = g2 * bp['w1']
        b1_f = bp['ln2_b'] @ bp['w1'] + bp['b1']
        matsA.append(jnp.concatenate([wqkv_f, bp['wproj'], w1_f], axis=1))       # [32, 256]
        w2t_chunks.append(jnp.asarray(bp['w2']).T)                               # [32, 128]
        bias_rows += [padc(bqkv_f), padc(bp['bproj']), padc(b1_f), padc(bp['b2'])]

    # fold head LN affine into head weight / bias
    gh = params['head_ln_g'].reshape(C, 1)
    head_w_f = gh * params['head_w']                                             # [32, 9]
    head_b_f = params['head_ln_b'] @ params['head_w'] + params['head_b']         # [1, 9]

    slab = jnp.concatenate([jnp.asarray(mask)] + w2t_chunks + [padc(head_w_f)]
                           + bias_rows + [padc(head_b_f)], axis=0)               # [201, 128]
    slab = jnp.pad(slab, ((0, SLAB_ROWS - slab.shape[0]), (0, 0)))               # [208, 128]

    return {
        'matsA': jnp.stack(matsA),                                               # [D, 32, 256]
        'slabB': slab,                                                           # [208, 128]
        'pos_embed': params['pos_embed'],
        'obj_embed': params['obj_embed'],
        'tgt_pts': params['tgt_pts'],
        'mul': params['mul'],
        'bias': params['bias'],
        'occ_bias': params['occ_bias'],
    }


# ---------------- forward (glue + single fused Pallas kernel) ----------------
def forward(packed, x, x_obj, x_bg=None):
    # x: [B, T, L, C], x_obj: [B, No, Lo, C]; x_bg unused (has_bg=False)
    b_, t_, l_, c_ = x.shape
    xx = x + packed['pos_embed']
    xo = (x_obj + packed['obj_embed']).reshape(b_, 1, NO * LO, c_)
    xo = jnp.broadcast_to(xo, (b_, t_, NO * LO, c_))
    # permuted layout: all object tokens first (rows 0..NH-1), latent tokens after
    xt = jnp.concatenate([xo.reshape(BT * NO * LO, c_),
                          xx.reshape(BT * L, c_)], axis=0)              # [96, 32]

    head_out = fused_forward_call(xt, packed)                           # [32, 128]
    out = head_out[:, :HEAD_OUT]                                        # [32, 9]

    # --- decode (pts_mode='prior', occ_mode='bias'): trivial, XLA-fused in the wrapper ---
    pose_raw = out[:, :POSE_SIZE]
    occ_raw = out[:, POSE_SIZE + SCALE_SIZE:]
    p = jnp.tanh(pose_raw)
    rest = (p * p).reshape(BT, NO * LO * POSE_SIZE).mean(axis=-1).reshape(b_, t_)
    pm = p.reshape(BT, NO, LO, POSE_SIZE) * packed['mul'] + packed['bias']
    delta = pm[..., :2]
    if not USE_DELTA:
        delta = delta * 0.0
    transform = pm[..., 2:].reshape(BT, NO, LO, 3, 2).mean(axis=2)      # [BT, NO, 3, 2]
    pts = packed['tgt_pts'][None, None] + delta                         # [BT, NO, LO, 2]
    pts1 = jnp.concatenate([pts, jnp.ones_like(pts[..., :1])], axis=-1)
    pose = jnp.einsum('bnlk,bnkt->bnlt', pts1, transform).reshape(b_, t_, NO, LO, 2)
    occ_score = (occ_raw.reshape(BT, NO, LO).mean(axis=2)
                 + packed['occ_bias']).reshape(b_, t_, NO)
    # (pose, bg_pose, occ_score, rest, bg_rest, last_obj, last_bg)
    return pose, None, occ_score, rest, None, None, None


# ---------------- pure-JAX reference (for verification) ----------------
def reference_forward(params, x, x_obj):
    with jax.default_matmul_precision('highest'):
        b_, t_, l_, c_ = x.shape
        xx = x + params['pos_embed']
        xo = (x_obj + params['obj_embed']).reshape(b_, 1, NO * LO, c_)
        xo = jnp.broadcast_to(xo, (b_, t_, NO * LO, c_))
        xt = jnp.concatenate([xo, xx], axis=2).reshape(b_ * t_, S, c_)

        def ln(z, g, b):
            mu = z.mean(-1, keepdims=True)
            var = ((z - mu) ** 2).mean(-1, keepdims=True)
            return (z - mu) / jnp.sqrt(var + LN_EPS) * g + b

        for bp in params['blocks']:
            h = ln(xt, bp['ln1_g'], bp['ln1_b'])
            qkv = h @ bp['wqkv'] + bp['bqkv']
            q, k, v = jnp.split(qkv, 3, axis=-1)
            q = q.reshape(-1, S, NUM_HEADS, DH).transpose(0, 2, 1, 3)
            k = k.reshape(-1, S, NUM_HEADS, DH).transpose(0, 2, 1, 3)
            v = v.reshape(-1, S, NUM_HEADS, DH).transpose(0, 2, 1, 3)
            att = jax.nn.softmax(jnp.einsum('bhqd,bhkd->bhqk', q, k) / jnp.sqrt(float(DH)),
                                 axis=-1)
            o = jnp.einsum('bhqk,bhkd->bhqd', att, v).transpose(0, 2, 1, 3).reshape(-1, S, C)
            xt = xt + (o @ bp['wproj'] + bp['bproj'])
            h2 = ln(xt, bp['ln2_g'], bp['ln2_b'])
            m = jax.nn.gelu(h2 @ bp['w1'] + bp['b1'], approximate=True)
            xt = xt + (m @ bp['w2'] + bp['b2'])

        xh = xt[:, :NO * LO]
        out = ln(xh, params['head_ln_g'], params['head_ln_b']) @ params['head_w'] + params['head_b']
        pose_raw = out[:, :, :POSE_SIZE]
        occ_raw = out[:, :, POSE_SIZE + SCALE_SIZE:]
        p = jnp.tanh(pose_raw)
        rest = (p ** 2).reshape(p.shape[0], -1).mean(-1).reshape(b_, t_)
        pm = p.reshape(-1, NO, LO, 8) * params['mul'] + params['bias']
        delta = pm[..., :2]
        if not USE_DELTA:
            delta = delta * 0
        transform = pm[..., 2:].reshape(-1, NO, LO, 3, 2).mean(axis=2)
        pts = params['tgt_pts'][None, None] + delta
        pts = jnp.concatenate([pts, jnp.ones_like(pts[..., :1])], axis=-1)
        pose = jnp.einsum('bnlk,bnkt->bnlt', pts, transform).reshape(b_, t_, NO, LO, 2)
        occ = occ_raw.reshape(-1, NO, LO).mean(axis=2) + params['occ_bias']
        occ = occ.reshape(b_, t_, NO)
        return pose, occ, rest


# ---------------- main ----------------
if __name__ == "__main__":
    key = jax.random.PRNGKey(0)
    kp, k1, k2, k3 = jax.random.split(key, 4)
    params = init_params(kp)
    packed = pack_params(params)

    x = 0.5 * jax.random.normal(k1, (B, T, L, C), dtype=jnp.float32)
    x_obj = 0.5 * jax.random.normal(k2, (B, NO, LO, C), dtype=jnp.float32)
    x_bg = 0.5 * jax.random.normal(k3, (B, 1, L, C), dtype=jnp.float32)  # unused (has_bg=False)

    fwd = jax.jit(forward)
    pose, bg_pose, occ_score, rest, bg_rest, last_obj, last_bg = fwd(packed, x, x_obj, x_bg)
    jax.block_until_ready((pose, occ_score, rest))

    # sanity check against a pure-JAX reference (unfolded weights, original layout)
    ref_pose, ref_occ, ref_rest = reference_forward(params, x, x_obj)
    np.testing.assert_allclose(np.asarray(pose), np.asarray(ref_pose), rtol=2e-2, atol=2e-3)
    np.testing.assert_allclose(np.asarray(occ_score), np.asarray(ref_occ), rtol=2e-2, atol=2e-3)
    np.testing.assert_allclose(np.asarray(rest), np.asarray(ref_rest), rtol=2e-2, atol=2e-3)

    assert pose.shape == (B, T, NO, LO, 2)
    assert occ_score.shape == (B, T, NO)
    assert rest.shape == (B, T)
    print("KERNEL_OK")
</pallas_src>

<mosaic_0001>
module attributes {stable_mosaic.version = 11 : i64} {
  func.func @fused_kernel(%arg0: memref<96x32xf32, #tpu.memory_space<vmem>>, %arg1: memref<2x32x256xf32, #tpu.memory_space<vmem>>, %arg2: memref<208x128xf32, #tpu.memory_space<vmem>>, %arg3: memref<32x128xf32, #tpu.memory_space<vmem>>, %arg4: memref<96x96xf32, #tpu.memory_space<vmem>>) attributes {dimension_semantics = [], scalar_prefetch = 0 : i64, scratch_operands = 1 : i64, tpu.core_type = #tpu.core_type<tc>} {
    %c0 = arith.constant 0 : index
    %c0_0 = arith.constant 0 : index
    %0 = vector.load %arg0[%c0, %c0_0] : memref<96x32xf32, #tpu.memory_space<vmem>>, vector<96x32xf32>
    %c0_1 = arith.constant 0 : index
    %c0_2 = arith.constant 0 : index
    %c0_3 = arith.constant 0 : index
    %1 = vector.load %arg1[%c0_1, %c0_2, %c0_3] : memref<2x32x256xf32, #tpu.memory_space<vmem>>, vector<1x32x96xf32>
    %2 = vector.shape_cast %1 : vector<1x32x96xf32> to vector<32x96xf32>
    %c192 = arith.constant 192 : index
    %c0_4 = arith.constant 0 : index
    %3 = vector.load %arg2[%c192, %c0_4] : memref<208x128xf32, #tpu.memory_space<vmem>>, vector<1x96xf32>
    %cst = arith.constant dense<0.000000e+00> : vector<96xf32>
    %4 = vector.multi_reduction <add>, %0, %cst [1] : vector<96x32xf32> to vector<96xf32>
    %5 = vector.shape_cast %4 : vector<96xf32> to vector<96x1xf32>
    %cst_5 = arith.constant 3.200000e+01 : f32
    %6 = vector.broadcast %cst_5 : f32 to vector<96x1xf32>
    %7 = arith.divf %5, %6 : vector<96x1xf32>
    %8 = vector.broadcast %7 : vector<96x1xf32> to vector<96x32xf32>
    %9 = arith.subf %0, %8 : vector<96x32xf32>
    %10 = arith.mulf %9, %9 : vector<96x32xf32>
    %cst_6 = arith.constant dense<0.000000e+00> : vector<96xf32>
    %11 = vector.multi_reduction <add>, %10, %cst_6 [1] : vector<96x32xf32> to vector<96xf32>
    %12 = vector.shape_cast %11 : vector<96xf32> to vector<96x1xf32>
    %cst_7 = arith.constant 3.200000e+01 : f32
    %13 = vector.broadcast %cst_7 : f32 to vector<96x1xf32>
    %14 = arith.divf %12, %13 : vector<96x1xf32>
    %cst_8 = arith.constant 9.99999974E-6 : f32
    %15 = vector.broadcast %cst_8 : f32 to vector<96x1xf32>
    %16 = arith.addf %14, %15 : vector<96x1xf32>
    %17 = math.rsqrt %16 : vector<96x1xf32>
    %18 = vector.broadcast %17 : vector<96x1xf32> to vector<96x32xf32>
    %19 = arith.mulf %9, %18 : vector<96x32xf32>
    %cst_9 = arith.constant dense<0.000000e+00> : vector<96x96xf32>
    %20 = tpu.matmul %19, %2, %cst_9 {dimension_numbers = #tpu.dot_dimension_numbers<[1], [0], [0], [1], [0, 0, 1, 1], [], []>} : vector<96x32xf32>, vector<32x96xf32>, vector<96x96xf32> -> vector<96x96xf32>
    %21 = vector.broadcast %3 : vector<1x96xf32> to vector<96x96xf32>
    %22 = arith.addf %20, %21 : vector<96x96xf32>
    %c0_10 = arith.constant 0 : index
    %c0_11 = arith.constant 0 : index
    %23 = vector.load %arg4[%c0_10, %c0_11] : memref<96x96xf32, #tpu.memory_space<vmem>>, vector<96x96xf32>
    tpu.vector_store %arg4[%c0_10, %c0_11], %22 {strides = array<i32>} : memref<96x96xf32, #tpu.memory_space<vmem>>, vector<96x96xf32>,
    %c0_12 = arith.constant 0 : index
    %c0_13 = arith.constant 0 : index
    %24 = vector.load %arg4[%c0_12, %c0_13] : memref<96x96xf32, #tpu.memory_space<vmem>>, vector<96x16xf32>
    %c0_14 = arith.constant 0 : index
    %c32 = arith.constant 32 : index
    %25 = vector.load %arg4[%c0_14, %c32] : memref<96x96xf32, #tpu.memory_space<vmem>>, vector<96x16xf32>
    %c0_15 = arith.constant 0 : index
    %c64 = arith.constant 64 : index
    %26 = vector.load %arg4[%c0_15, %c64] : memref<96x96xf32, #tpu.memory_space<vmem>>, vector<96x16xf32>
    %cst_16 = arith.constant dense<0.000000e+00> : vector<96x96xf32>
    %27 = tpu.matmul %24, %25, %cst_16 {dimension_numbers = #tpu.dot_dimension_numbers<[1], [1], [0], [0], [0, 0, 1, 0], [], []>} : vector<96x16xf32>, vector<96x16xf32>, vector<96x96xf32> -> vector<96x96xf32>
    %c0_17 = arith.constant 0 : index
    %c0_18 = arith.constant 0 : index
    %28 = vector.load %arg2[%c0_17, %c0_18] : memref<208x128xf32, #tpu.memory_space<vmem>>, vector<96x96xf32>
    %29 = arith.addf %27, %28 : vector<96x96xf32>
    %cst_19 = arith.constant dense<0xFF800000> : vector<96xf32>
    %30 = vector.multi_reduction <maximumf>, %29, %cst_19 [1] : vector<96x96xf32> to vector<96xf32>
    %31 = vector.shape_cast %30 : vector<96xf32> to vector<96x1xf32>
    %32 = vector.broadcast %31 : vector<96x1xf32> to vector<96x96xf32>
    %33 = arith.subf %29, %32 : vector<96x96xf32>
    %34 = math.exp %33 : vector<96x96xf32>
    %cst_20 = arith.constant dense<0.000000e+00> : vector<96xf32>
    %35 = vector.multi_reduction <add>, %34, %cst_20 [1] : vector<96x96xf32> to vector<96xf32>
    %36 = vector.shape_cast %35 : vector<96xf32> to vector<96x1xf32>
    %37 = tpu.reciprocal %36 {approx = true} : vector<96x1xf32> -> vector<96x1xf32>
    %38 = vector.broadcast %37 : vector<96x1xf32> to vector<96x96xf32>
    %39 = arith.mulf %34, %38 : vector<96x96xf32>
    %cst_21 = arith.constant dense<0.000000e+00> : vector<96x16xf32>
    %40 = tpu.matmul %39, %26, %cst_21 {dimension_numbers = #tpu.dot_dimension_numbers<[1], [0], [0], [1], [0, 0, 1, 1], [], []>} : vector<96x96xf32>, vector<96x16xf32>, vector<96x16xf32> -> vector<96x16xf32>
    %c0_22 = arith.constant 0 : index
    %c0_23 = arith.constant 0 : index
    %c96 = arith.constant 96 : index
    %41 = vector.load %arg1[%c0_22, %c0_23, %c96] : memref<2x32x256xf32, #tpu.memory_space<vmem>>, vector<1x16x32xf32>
    %42 = vector.shape_cast %41 : vector<1x16x32xf32> to vector<16x32xf32>
    %cst_24 = arith.constant dense<0.000000e+00> : vector<96x32xf32>
    %43 = tpu.matmul %40, %42, %cst_24 {dimension_numbers = #tpu.dot_dimension_numbers<[1], [0], [0], [1], [0, 0, 1, 1], [], []>} : vector<96x16xf32>, vector<16x32xf32>, vector<96x32xf32> -> vector<96x32xf32>
    %44 = arith.addf %0, %43 : vector<96x32xf32>
    %c0_25 = arith.constant 0 : index
    %c16 = arith.constant 16 : index
    %45 = vector.load %arg4[%c0_25, %c16] : memref<96x96xf32, #tpu.memory_space<vmem>>, vector<96x16xf32>
    %c0_26 = arith.constant 0 : index
    %c48 = arith.constant 48 : index
    %46 = vector.load %arg4[%c0_26, %c48] : memref<96x96xf32, #tpu.memory_space<vmem>>, vector<96x16xf32>
    %c0_27 = arith.constant 0 : index
    %c80 = arith.constant 80 : index
    %47 = vector.load %arg4[%c0_27, %c80] : memref<96x96xf32, #tpu.memory_space<vmem>>, vector<96x16xf32>
    %cst_28 = arith.constant dense<0.000000e+00> : vector<96x96xf32>
    %48 = tpu.matmul %45, %46, %cst_28 {dimension_numbers = #tpu.dot_dimension_numbers<[1], [1], [0], [0], [0, 0, 1, 0], [], []>} : vector<96x16xf32>, vector<96x16xf32>, vector<96x96xf32> -> vector<96x96xf32>
    %c0_29 = arith.constant 0 : index
    %c0_30 = arith.constant 0 : index
    %49 = vector.load %arg2[%c0_29, %c0_30] : memref<208x128xf32, #tpu.memory_space<vmem>>, vector<96x96xf32>
    %50 = arith.addf %48, %49 : vector<96x96xf32>
    %cst_31 = arith.constant dense<0xFF800000> : vector<96xf32>
    %51 = vector.multi_reduction <maximumf>, %50, %cst_31 [1] : vector<96x96xf32> to vector<96xf32>
    %52 = vector.shape_cast %51 : vector<96xf32> to vector<96x1xf32>
    %53 = vector.broadcast %52 : vector<96x1xf32> to vector<96x96xf32>
    %54 = arith.subf %50, %53 : vector<96x96xf32>
    %55 = math.exp %54 : vector<96x96xf32>
    %cst_32 = arith.constant dense<0.000000e+00> : vector<96xf32>
    %56 = vector.multi_reduction <add>, %55, %cst_32 [1] : vector<96x96xf32> to vector<96xf32>
    %57 = vector.shape_cast %56 : vector<96xf32> to vector<96x1xf32>
    %58 = tpu.reciprocal %57 {approx = true} : vector<96x1xf32> -> vector<96x1xf32>
    %59 = vector.broadcast %58 : vector<96x1xf32> to vector<96x96xf32>
    %60 = arith.mulf %55, %59 : vector<96x96xf32>
    %cst_33 = arith.constant dense<0.000000e+00> : vector<96x16xf32>
    %61 = tpu.matmul %60, %47, %cst_33 {dimension_numbers = #tpu.dot_dimension_numbers<[1], [0], [0], [1], [0, 0, 1, 1], [], []>} : vector<96x96xf32>, vector<96x16xf32>, vector<96x16xf32> -> vector<96x16xf32>
    %c0_34 = arith.constant 0 : index
    %c16_35 = arith.constant 16 : index
    %c96_36 = arith.constant 96 : index
    %62 = vector.load %arg1[%c0_34, %c16_35, %c96_36] : memref<2x32x256xf32, #tpu.memory_space<vmem>>, vector<1x16x32xf32>
    %63 = vector.shape_cast %62 : vector<1x16x32xf32> to vector<16x32xf32>
    %cst_37 = arith.constant dense<0.000000e+00> : vector<96x32xf32>
    %64 = tpu.matmul %61, %63, %cst_37 {dimension_numbers = #tpu.dot_dimension_numbers<[1], [0], [0], [1], [0, 0, 1, 1], [], []>} : vector<96x16xf32>, vector<16x32xf32>, vector<96x32xf32> -> vector<96x32xf32>
    %65 = arith.addf %44, %64 : vector<96x32xf32>
    %c193 = arith.constant 193 : index
    %c0_38 = arith.constant 0 : index
    %66 = vector.load %arg2[%c193, %c0_38] : memref<208x128xf32, #tpu.memory_space<vmem>>, vector<1x32xf32>
    %67 = vector.broadcast %66 : vector<1x32xf32> to vector<96x32xf32>
    %68 = arith.addf %65, %67 : vector<96x32xf32>
    %c0_39 = arith.constant 0 : index
    %c0_40 = arith.constant 0 : index
    %c128 = arith.constant 128 : index
    %69 = vector.load %arg1[%c0_39, %c0_40, %c128] : memref<2x32x256xf32, #tpu.memory_space<vmem>>, vector<1x32x128xf32>
    %70 = vector.shape_cast %69 : vector<1x32x128xf32> to vector<32x128xf32>
    %c194 = arith.constant 194 : index
    %c0_41 = arith.constant 0 : index
    %71 = vector.load %arg2[%c194, %c0_41] : memref<208x128xf32, #tpu.memory_space<vmem>>, vector<1x128xf32>
    %cst_42 = arith.constant dense<0.000000e+00> : vector<96xf32>
    %72 = vector.multi_reduction <add>, %68, %cst_42 [1] : vector<96x32xf32> to vector<96xf32>
    %73 = vector.shape_cast %72 : vector<96xf32> to vector<96x1xf32>
    %cst_43 = arith.constant 3.200000e+01 : f32
    %74 = vector.broadcast %cst_43 : f32 to vector<96x1xf32>
    %75 = arith.divf %73, %74 : vector<96x1xf32>
    %76 = vector.broadcast %75 : vector<96x1xf32> to vector<96x32xf32>
    %77 = arith.subf %68, %76 : vector<96x32xf32>
    %78 = arith.mulf %77, %77 : vector<96x32xf32>
    %cst_44 = arith.constant dense<0.000000e+00> : vector<96xf32>
    %79 = vector.multi_reduction <add>, %78, %cst_44 [1] : vector<96x32xf32> to vector<96xf32>
    %80 = vector.shape_cast %79 : vector<96xf32> to vector<96x1xf32>
    %cst_45 = arith.constant 3.200000e+01 : f32
    %81 = vector.broadcast %cst_45 : f32 to vector<96x1xf32>
    %82 = arith.divf %80, %81 : vector<96x1xf32>
    %cst_46 = arith.constant 9.99999974E-6 : f32
    %83 = vector.broadcast %cst_46 : f32 to vector<96x1xf32>
    %84 = arith.addf %82, %83 : vector<96x1xf32>
    %85 = math.rsqrt %84 : vector<96x1xf32>
    %86 = vector.broadcast %85 : vector<96x1xf32> to vector<96x32xf32>
    %87 = arith.mulf %77, %86 : vector<96x32xf32>
    %cst_47 = arith.constant dense<0.000000e+00> : vector<96x128xf32>
    %88 = tpu.matmul %87, %70, %cst_47 {dimension_numbers = #tpu.dot_dimension_numbers<[1], [0], [0], [1], [0, 0, 1, 1], [], []>} : vector<96x32xf32>, vector<32x128xf32>, vector<96x128xf32> -> vector<96x128xf32>
    %89 = vector.broadcast %71 : vector<1x128xf32> to vector<96x128xf32>
    %90 = arith.addf %88, %89 : vector<96x128xf32>
    %91 = arith.mulf %90, %90 : vector<96x128xf32>
    %92 = arith.mulf %90, %91 : vector<96x128xf32>
    %cst_48 = arith.constant 4.471500e-02 : f32
    %93 = vector.broadcast %cst_48 : f32 to vector<96x128xf32>
    %94 = arith.mulf %93, %92 : vector<96x128xf32>
    %95 = arith.addf %90, %94 : vector<96x128xf32>
    %cst_49 = arith.constant 0.797884583 : f32
    %96 = vector.broadcast %cst_49 : f32 to vector<96x128xf32>
    %97 = arith.mulf %96, %95 : vector<96x128xf32>
    %98 = math.tanh %97 : vector<96x128xf32>
    %cst_50 = arith.constant 1.000000e+00 : f32
    %99 = vector.broadcast %cst_50 : f32 to vector<96x128xf32>
    %100 = arith.addf %99, %98 : vector<96x128xf32>
    %cst_51 = arith.constant 5.000000e-01 : f32
    %101 = vector.broadcast %cst_51 : f32 to vector<96x128xf32>
    %102 = arith.mulf %101, %100 : vector<96x128xf32>
    %103 = arith.mulf %90, %102 : vector<96x128xf32>
    %c96_52 = arith.constant 96 : index
    %c0_53 = arith.constant 0 : index
    %104 = vector.load %arg2[%c96_52, %c0_53] : memref<208x128xf32, #tpu.memory_space<vmem>>, vector<32x128xf32>
    %c195 = arith.constant 195 : index
    %c0_54 = arith.constant 0 : index
    %105 = vector.load %arg2[%c195, %c0_54] : memref<208x128xf32, #tpu.memory_space<vmem>>, vector<1x32xf32>
    %cst_55 = arith.constant dense<0.000000e+00> : vector<96x32xf32>
    %106 = tpu.matmul %103, %104, %cst_55 {dimension_numbers = #tpu.dot_dimension_numbers<[1], [1], [0], [0], [0, 0, 1, 0], [], []>} : vector<96x128xf32>, vector<32x128xf32>, vector<96x32xf32> -> vector<96x32xf32>
    %107 = arith.addf %68, %106 : vector<96x32xf32>
    %108 = vector.broadcast %105 : vector<1x32xf32> to vector<96x32xf32>
    %109 = arith.addf %107, %108 : vector<96x32xf32>
    %c1 = arith.constant 1 : index
    %c0_56 = arith.constant 0 : index
    %c0_57 = arith.constant 0 : index
    %110 = vector.load %arg1[%c1, %c0_56, %c0_57] : memref<2x32x256xf32, #tpu.memory_space<vmem>>, vector<1x32x96xf32>
    %111 = vector.shape_cast %110 : vector<1x32x96xf32> to vector<32x96xf32>
    %c196 = arith.constant 196 : index
    %c0_58 = arith.constant 0 : index
    %112 = vector.load %arg2[%c196, %c0_58] : memref<208x128xf32, #tpu.memory_space<vmem>>, vector<1x96xf32>
    %cst_59 = arith.constant dense<0.000000e+00> : vector<96xf32>
    %113 = vector.multi_reduction <add>, %109, %cst_59 [1] : vector<96x32xf32> to vector<96xf32>
    %114 = vector.shape_cast %113 : vector<96xf32> to vector<96x1xf32>
    %cst_60 = arith.constant 3.200000e+01 : f32
    %115 = vector.broadcast %cst_60 : f32 to vector<96x1xf32>
    %116 = arith.divf %114, %115 : vector<96x1xf32>
    %117 = vector.broadcast %116 : vector<96x1xf32> to vector<96x32xf32>
    %118 = arith.subf %109, %117 : vector<96x32xf32>
    %119 = arith.mulf %118, %118 : vector<96x32xf32>
    %cst_61 = arith.constant dense<0.000000e+00> : vector<96xf32>
    %120 = vector.multi_reduction <add>, %119, %cst_61 [1] : vector<96x32xf32> to vector<96xf32>
    %121 = vector.shape_cast %120 : vector<96xf32> to vector<96x1xf32>
    %cst_62 = arith.constant 3.200000e+01 : f32
    %122 = vector.broadcast %cst_62 : f32 to vector<96x1xf32>
    %123 = arith.divf %121, %122 : vector<96x1xf32>
    %cst_63 = arith.constant 9.99999974E-6 : f32
    %124 = vector.broadcast %cst_63 : f32 to vector<96x1xf32>
    %125 = arith.addf %123, %124 : vector<96x1xf32>
    %126 = math.rsqrt %125 : vector<96x1xf32>
    %127 = vector.broadcast %126 : vector<96x1xf32> to vector<96x32xf32>
    %128 = arith.mulf %118, %127 : vector<96x32xf32>
    %cst_64 = arith.constant dense<0.000000e+00> : vector<96x96xf32>
    %129 = tpu.matmul %128, %111, %cst_64 {dimension_numbers = #tpu.dot_dimension_numbers<[1], [0], [0], [1], [0, 0, 1, 1], [], []>} : vector<96x32xf32>, vector<32x96xf32>, vector<96x96xf32> -> vector<96x96xf32>
    %130 = vector.broadcast %112 : vector<1x96xf32> to vector<96x96xf32>
    %131 = arith.addf %129, %130 : vector<96x96xf32>
    %c0_65 = arith.constant 0 : index
    %c0_66 = arith.constant 0 : index
    %132 = vector.load %arg4[%c0_65, %c0_66] : memref<96x96xf32, #tpu.memory_space<vmem>>, vector<96x96xf32>
    tpu.vector_store %arg4[%c0_65, %c0_66], %131 {strides = array<i32>} : memref<96x96xf32, #tpu.memory_space<vmem>>, vector<96x96xf32>,
    %c0_67 = arith.constant 0 : index
    %c0_68 = arith.constant 0 : index
    %133 = vector.load %arg4[%c0_67, %c0_68] : memref<96x96xf32, #tpu.memory_space<vmem>>, vector<96x16xf32>
    %c0_69 = arith.constant 0 : index
    %c32_70 = arith.constant 32 : index
    %134 = vector.load %arg4[%c0_69, %c32_70] : memref<96x96xf32, #tpu.memory_space<vmem>>, vector<96x16xf32>
    %c0_71 = arith.constant 0 : index
    %c64_72 = arith.constant 64 : index
    %135 = vector.load %arg4[%c0_71, %c64_72] : memref<96x96xf32, #tpu.memory_space<vmem>>, vector<96x16xf32>
    %cst_73 = arith.constant dense<0.000000e+00> : vector<96x96xf32>
    %136 = tpu.matmul %133, %134, %cst_73 {dimension_numbers = #tpu.dot_dimension_numbers<[1], [1], [0], [0], [0, 0, 1, 0], [], []>} : vector<96x16xf32>, vector<96x16xf32>, vector<96x96xf32> -> vector<96x96xf32>
    %c0_74 = arith.constant 0 : index
    %c0_75 = arith.constant 0 : index
    %137 = vector.load %arg2[%c0_74, %c0_75] : memref<208x128xf32, #tpu.memory_space<vmem>>, vector<96x96xf32>
    %138 = arith.addf %136, %137 : vector<96x96xf32>
    %cst_76 = arith.constant dense<0xFF800000> : vector<96xf32>
    %139 = vector.multi_reduction <maximumf>, %138, %cst_76 [1] : vector<96x96xf32> to vector<96xf32>
    %140 = vector.shape_cast %139 : vector<96xf32> to vector<96x1xf32>
    %141 = vector.broadcast %140 : vector<96x1xf32> to vector<96x96xf32>
    %142 = arith.subf %138, %141 : vector<96x96xf32>
    %143 = math.exp %142 : vector<96x96xf32>
    %cst_77 = arith.constant dense<0.000000e+00> : vector<96xf32>
    %144 = vector.multi_reduction <add>, %143, %cst_77 [1] : vector<96x96xf32> to vector<96xf32>
    %145 = vector.shape_cast %144 : vector<96xf32> to vector<96x1xf32>
    %146 = tpu.reciprocal %145 {approx = true} : vector<96x1xf32> -> vector<96x1xf32>
    %147 = vector.broadcast %146 : vector<96x1xf32> to vector<96x96xf32>
    %148 = arith.mulf %143, %147 : vector<96x96xf32>
    %cst_78 = arith.constant dense<0.000000e+00> : vector<96x16xf32>
    %149 = tpu.matmul %148, %135, %cst_78 {dimension_numbers = #tpu.dot_dimension_numbers<[1], [0], [0], [1], [0, 0, 1, 1], [], []>} : vector<96x96xf32>, vector<96x16xf32>, vector<96x16xf32> -> vector<96x16xf32>
    %c1_79 = arith.constant 1 : index
    %c0_80 = arith.constant 0 : index
    %c96_81 = arith.constant 96 : index
    %150 = vector.load %arg1[%c1_79, %c0_80, %c96_81] : memref<2x32x256xf32, #tpu.memory_space<vmem>>, vector<1x16x32xf32>
    %151 = vector.shape_cast %150 : vector<1x16x32xf32> to vector<16x32xf32>
    %cst_82 = arith.constant dense<0.000000e+00> : vector<96x32xf32>
    %152 = tpu.matmul %149, %151, %cst_82 {dimension_numbers = #tpu.dot_dimension_numbers<[1], [0], [0], [1], [0, 0, 1, 1], [], []>} : vector<96x16xf32>, vector<16x32xf32>, vector<96x32xf32> -> vector<96x32xf32>
    %153 = arith.addf %109, %152 : vector<96x32xf32>
    %c0_83 = arith.constant 0 : index
    %c16_84 = arith.constant 16 : index
    %154 = vector.load %arg4[%c0_83, %c16_84] : memref<96x96xf32, #tpu.memory_space<vmem>>, vector<96x16xf32>
    %c0_85 = arith.constant 0 : index
    %c48_86 = arith.constant 48 : index
    %155 = vector.load %arg4[%c0_85, %c48_86] : memref<96x96xf32, #tpu.memory_space<vmem>>, vector<96x16xf32>
    %c0_87 = arith.constant 0 : index
    %c80_88 = arith.constant 80 : index
    %156 = vector.load %arg4[%c0_87, %c80_88] : memref<96x96xf32, #tpu.memory_space<vmem>>, vector<96x16xf32>
    %cst_89 = arith.constant dense<0.000000e+00> : vector<96x96xf32>
    %157 = tpu.matmul %154, %155, %cst_89 {dimension_numbers = #tpu.dot_dimension_numbers<[1], [1], [0], [0], [0, 0, 1, 0], [], []>} : vector<96x16xf32>, vector<96x16xf32>, vector<96x96xf32> -> vector<96x96xf32>
    %c0_90 = arith.constant 0 : index
    %c0_91 = arith.constant 0 : index
    %158 = vector.load %arg2[%c0_90, %c0_91] : memref<208x128xf32, #tpu.memory_space<vmem>>, vector<96x96xf32>
    %159 = arith.addf %157, %158 : vector<96x96xf32>
    %cst_92 = arith.constant dense<0xFF800000> : vector<96xf32>
    %160 = vector.multi_reduction <maximumf>, %159, %cst_92 [1] : vector<96x96xf32> to vector<96xf32>
    %161 = vector.shape_cast %160 : vector<96xf32> to vector<96x1xf32>
    %162 = vector.broadcast %161 : vector<96x1xf32> to vector<96x96xf32>
    %163 = arith.subf %159, %162 : vector<96x96xf32>
    %164 = math.exp %163 : vector<96x96xf32>
    %cst_93 = arith.constant dense<0.000000e+00> : vector<96xf32>
    %165 = vector.multi_reduction <add>, %164, %cst_93 [1] : vector<96x96xf32> to vector<96xf32>
    %166 = vector.shape_cast %165 : vector<96xf32> to vector<96x1xf32>
    %167 = tpu.reciprocal %166 {approx = true} : vector<96x1xf32> -> vector<96x1xf32>
    %168 = vector.broadcast %167 : vector<96x1xf32> to vector<96x96xf32>
    %169 = arith.mulf %164, %168 : vector<96x96xf32>
    %cst_94 = arith.constant dense<0.000000e+00> : vector<96x16xf32>
    %170 = tpu.matmul %169, %156, %cst_94 {dimension_numbers = #tpu.dot_dimension_numbers<[1], [0], [0], [1], [0, 0, 1, 1], [], []>} : vector<96x96xf32>, vector<96x16xf32>, vector<96x16xf32> -> vector<96x16xf32>
    %c1_95 = arith.constant 1 : index
    %c16_96 = arith.constant 16 : index
    %c96_97 = arith.constant 96 : index
    %171 = vector.load %arg1[%c1_95, %c16_96, %c96_97] : memref<2x32x256xf32, #tpu.memory_space<vmem>>, vector<1x16x32xf32>
    %172 = vector.shape_cast %171 : vector<1x16x32xf32> to vector<16x32xf32>
    %cst_98 = arith.constant dense<0.000000e+00> : vector<96x32xf32>
    %173 = tpu.matmul %170, %172, %cst_98 {dimension_numbers = #tpu.dot_dimension_numbers<[1], [0], [0], [1], [0, 0, 1, 1], [], []>} : vector<96x16xf32>, vector<16x32xf32>, vector<96x32xf32> -> vector<96x32xf32>
    %174 = arith.addf %153, %173 : vector<96x32xf32>
    %c197 = arith.constant 197 : index
    %c0_99 = arith.constant 0 : index
    %175 = vector.load %arg2[%c197, %c0_99] : memref<208x128xf32, #tpu.memory_space<vmem>>, vector<1x32xf32>
    %176 = vector.broadcast %175 : vector<1x32xf32> to vector<96x32xf32>
    %177 = arith.addf %174, %176 : vector<96x32xf32>
    %c1_100 = arith.constant 1 : index
    %c0_101 = arith.constant 0 : index
    %c128_102 = arith.constant 128 : index
    %178 = vector.load %arg1[%c1_100, %c0_101, %c128_102] : memref<2x32x256xf32, #tpu.memory_space<vmem>>, vector<1x32x128xf32>
    %179 = vector.shape_cast %178 : vector<1x32x128xf32> to vector<32x128xf32>
    %c198 = arith.constant 198 : index
    %c0_103 = arith.constant 0 : index
    %180 = vector.load %arg2[%c198, %c0_103] : memref<208x128xf32, #tpu.memory_space<vmem>>, vector<1x128xf32>
    %cst_104 = arith.constant dense<0.000000e+00> : vector<96xf32>
    %181 = vector.multi_reduction <add>, %177, %cst_104 [1] : vector<96x32xf32> to vector<96xf32>
    %182 = vector.shape_cast %181 : vector<96xf32> to vector<96x1xf32>
    %cst_105 = arith.constant 3.200000e+01 : f32
    %183 = vector.broadcast %cst_105 : f32 to vector<96x1xf32>
    %184 = arith.divf %182, %183 : vector<96x1xf32>
    %185 = vector.broadcast %184 : vector<96x1xf32> to vector<96x32xf32>
    %186 = arith.subf %177, %185 : vector<96x32xf32>
    %187 = arith.mulf %186, %186 : vector<96x32xf32>
    %cst_106 = arith.constant dense<0.000000e+00> : vector<96xf32>
    %188 = vector.multi_reduction <add>, %187, %cst_106 [1] : vector<96x32xf32> to vector<96xf32>
    %189 = vector.shape_cast %188 : vector<96xf32> to vector<96x1xf32>
    %cst_107 = arith.constant 3.200000e+01 : f32
    %190 = vector.broadcast %cst_107 : f32 to vector<96x1xf32>
    %191 = arith.divf %189, %190 : vector<96x1xf32>
    %cst_108 = arith.constant 9.99999974E-6 : f32
    %192 = vector.broadcast %cst_108 : f32 to vector<96x1xf32>
    %193 = arith.addf %191, %192 : vector<96x1xf32>
    %194 = math.rsqrt %193 : vector<96x1xf32>
    %195 = vector.broadcast %194 : vector<96x1xf32> to vector<96x32xf32>
    %196 = arith.mulf %186, %195 : vector<96x32xf32>
    %cst_109 = arith.constant dense<0.000000e+00> : vector<96x128xf32>
    %197 = tpu.matmul %196, %179, %cst_109 {dimension_numbers = #tpu.dot_dimension_numbers<[1], [0], [0], [1], [0, 0, 1, 1], [], []>} : vector<96x32xf32>, vector<32x128xf32>, vector<96x128xf32> -> vector<96x128xf32>
    %198 = vector.broadcast %180 : vector<1x128xf32> to vector<96x128xf32>
    %199 = arith.addf %197, %198 : vector<96x128xf32>
    %200 = arith.mulf %199, %199 : vector<96x128xf32>
    %201 = arith.mulf %199, %200 : vector<96x128xf32>
    %cst_110 = arith.constant 4.471500e-02 : f32
    %202 = vector.broadcast %cst_110 : f32 to vector<96x128xf32>
    %203 = arith.mulf %202, %201 : vector<96x128xf32>
    %204 = arith.addf %199, %203 : vector<96x128xf32>
    %cst_111 = arith.constant 0.797884583 : f32
    %205 = vector.broadcast %cst_111 : f32 to vector<96x128xf32>
    %206 = arith.mulf %205, %204 : vector<96x128xf32>
    %207 = math.tanh %206 : vector<96x128xf32>
    %cst_112 = arith.constant 1.000000e+00 : f32
    %208 = vector.broadcast %cst_112 : f32 to vector<96x128xf32>
    %209 = arith.addf %208, %207 : vector<96x128xf32>
    %cst_113 = arith.constant 5.000000e-01 : f32
    %210 = vector.broadcast %cst_113 : f32 to vector<96x128xf32>
    %211 = arith.mulf %210, %209 : vector<96x128xf32>
    %212 = arith.mulf %199, %211 : vector<96x128xf32>
    %c128_114 = arith.constant 128 : index
    %c0_115 = arith.constant 0 : index
    %213 = vector.load %arg2[%c128_114, %c0_115] : memref<208x128xf32, #tpu.memory_space<vmem>>, vector<32x128xf32>
    %c199 = arith.constant 199 : index
    %c0_116 = arith.constant 0 : index
    %214 = vector.load %arg2[%c199, %c0_116] : memref<208x128xf32, #tpu.memory_space<vmem>>, vector<1x32xf32>
    %cst_117 = arith.constant dense<0.000000e+00> : vector<96x32xf32>
    %215 = tpu.matmul %212, %213, %cst_117 {dimension_numbers = #tpu.dot_dimension_numbers<[1], [1], [0], [0], [0, 0, 1, 0], [], []>} : vector<96x128xf32>, vector<32x128xf32>, vector<96x32xf32> -> vector<96x32xf32>
    %216 = arith.addf %177, %215 : vector<96x32xf32>
    %217 = vector.broadcast %214 : vector<1x32xf32> to vector<96x32xf32>
    %218 = arith.addf %216, %217 : vector<96x32xf32>
    %219 = vector.extract_strided_slice %218 {offsets = [0, 0], sizes = [32, 32], strides = [1, 1]} : vector<96x32xf32> to vector<32x32xf32>
    %cst_118 = arith.constant dense<0.000000e+00> : vector<32xf32>
    %220 = vector.multi_reduction <add>, %219, %cst_118 [1] : vector<32x32xf32> to vector<32xf32>
    %221 = vector.shape_cast %220 : vector<32xf32> to vector<32x1xf32>
    %cst_119 = arith.constant 3.200000e+01 : f32
    %222 = vector.broadcast %cst_119 : f32 to vector<32x1xf32>
    %223 = arith.divf %221, %222 : vector<32x1xf32>
    %224 = vector.broadcast %223 : vector<32x1xf32> to vector<32x32xf32>
    %225 = arith.subf %219, %224 : vector<32x32xf32>
    %226 = arith.mulf %225, %225 : vector<32x32xf32>
    %cst_120 = arith.constant dense<0.000000e+00> : vector<32xf32>
    %227 = vector.multi_reduction <add>, %226, %cst_120 [1] : vector<32x32xf32> to vector<32xf32>
    %228 = vector.shape_cast %227 : vector<32xf32> to vector<32x1xf32>
    %cst_121 = arith.constant 3.200000e+01 : f32
    %229 = vector.broadcast %cst_121 : f32 to vector<32x1xf32>
    %230 = arith.divf %228, %229 : vector<32x1xf32>
    %cst_122 = arith.constant 9.99999974E-6 : f32
    %231 = vector.broadcast %cst_122 : f32 to vector<32x1xf32>
    %232 = arith.addf %230, %231 : vector<32x1xf32>
    %233 = math.rsqrt %232 : vector<32x1xf32>
    %234 = vector.broadcast %233 : vector<32x1xf32> to vector<32x32xf32>
    %235 = arith.mulf %225, %234 : vector<32x32xf32>
    %c160 = arith.constant 160 : index
    %c0_123 = arith.constant 0 : index
    %236 = vector.load %arg2[%c160, %c0_123] : memref<208x128xf32, #tpu.memory_space<vmem>>, vector<32x128xf32>
    %c200 = arith.constant 200 : index
    %c0_124 = arith.constant 0 : index
    %237 = vector.load %arg2[%c200, %c0_124] : memref<208x128xf32, #tpu.memory_space<vmem>>, vector<1x128xf32>
    %cst_125 = arith.constant dense<0.000000e+00> : vector<32x128xf32>
    %238 = tpu.matmul %235, %236, %cst_125 {dimension_numbers = #tpu.dot_dimension_numbers<[1], [0], [0], [1], [0, 0, 1, 1], [], []>} : vector<32x32xf32>, vector<32x128xf32>, vector<32x128xf32> -> vector<32x128xf32>
    %239 = vector.broadcast %237 : vector<1x128xf32> to vector<32x128xf32>
    %240 = arith.addf %238, %239 : vector<32x128xf32>
    %c0_126 = arith.constant 0 : index
    %c0_127 = arith.constant 0 : index
    %241 = vector.load %arg3[%c0_126, %c0_127] : memref<32x128xf32, #tpu.memory_space<vmem>>, vector<32x128xf32>
    tpu.vector_store %arg3[%c0_126, %c0_127], %240 {strides = array<i32>} : memref<32x128xf32, #tpu.memory_space<vmem>>, vector<32x128xf32>,
    return
  }
}

</mosaic_0001>

<llo_original>
// kernel: forward.1
$region0: #{forward.1}
  #allocation0 [shape = 'u32[]', space=smem, size = 0x4, offset = 0x4, fixed_abs, tag = 'smem constant byte address 0x4 - core index']
  #allocation1 [shape = 'u32[144,128]{1,0:T(1,128)}', space=vmem, size = 0x12000, scoped, tag = 'internal scratch']
  #allocation2 [shape = 'f32[96,96]{1,0:T(8,128)}', space=vmem, size = 0xc000, scoped, tag = 'scratch operand']
  %s0 = inlined_call_operand.vmem [shape: f32[96,32], index: 0, kind: input, shape index: {}]
  %s1 = inlined_call_operand.vmem [shape: f32[2,32,256], index: 1, kind: input, shape index: {}]
  %s2 = inlined_call_operand.vmem [shape: f32[208,128], index: 2, kind: input, shape index: {}]
  %s3 = inlined_call_operand.vmem [shape: f32[32,128], index: 3, kind: output, shape index: {}]
  %s4 = sld [smem:[#allocation0]]
  $region22: #{forward.1} parent=0
    _
  %s6 = ssub.s32 1, %s4
  %s7 = scalar_select 0, %s6, %s4
  // Predicated region
  $region2: #{forward.1} parent=0 // pred_check
    _
  $region3: #{forward.1} parent=0 // pred_check_branch
    %9 = sbr.rel (0) target = $region5
  $region4: #{forward.1} parent=0 // pred_region
    _
  $region5: #{forward.1} parent=0 // pred_fallthru
    _
  // Predicated region
  $region6: #{forward.1} parent=0 // pred_check
    _
  $region7: #{forward.1} parent=0 // pred_check_branch
    %11 = sbr.rel (0) target = $region9
  $region8: #{forward.1} parent=0 // pred_region
    _
  $region9: #{forward.1} parent=0 // pred_fallthru
    _
  // Predicated region
  $region10: #{forward.1} parent=0 // pred_check
    _
  $region11: #{forward.1} parent=0 // pred_check_branch
    %13 = sbr.rel (0) target = $region13
  $region12: #{forward.1} parent=0 // pred_region
    _
  $region13: #{forward.1} parent=0 // pred_fallthru
    _
  %v14 = vld [vmem:[%s0] sm:$0xff]
  %v15 = vld [vmem:[%s0 + $0x8] sm:$0xff]
  %v16 = vld [vmem:[%s0 + $0x10] sm:$0xff]
  %v17 = vld [vmem:[%s0 + $0x18] sm:$0xff]
  %v18 = vld [vmem:[%s0 + $0x20] sm:$0xff]
  %v19 = vld [vmem:[%s0 + $0x28] sm:$0xff]
  %v20 = vld [vmem:[%s0 + $0x30] sm:$0xff]
  %v21 = vld [vmem:[%s0 + $0x38] sm:$0xff]
  %v22 = vld [vmem:[%s0 + $0x40] sm:$0xff]
  %v23 = vld [vmem:[%s0 + $0x48] sm:$0xff]
  %v24 = vld [vmem:[%s0 + $0x50] sm:$0xff]
  %v25 = vld [vmem:[%s0 + $0x58] sm:$0xff]
  %v26 = vld [vmem:[%s1] sm:$0xff]
  %v27 = vld [vmem:[%s1 + $0x10] sm:$0xff]
  %v28 = vld [vmem:[%s1 + $0x20] sm:$0xff]
  %v29 = vld [vmem:[%s1 + $0x30] sm:$0xff]
  %v30 = vld [vmem:[%s2 + $0xc0] sm:$0x1]
  %vm31 = vcmask 261120
  %v32 = vsel %vm31, %v14, 0.0
  %33 = vadd.xlane.f32.xlu0 %v32
  %v34 = vpop.xlane.xlu0 %33
  %v35 = vsel %vm31, %v15, 0.0
  %36 = vadd.xlane.f32.xlu0 %v35
  %v37 = vpop.xlane.xlu0 %36
  %v38 = vsel %vm31, %v16, 0.0
  %39 = vadd.xlane.f32.xlu0 %v38
  %v40 = vpop.xlane.xlu0 %39
  %v41 = vsel %vm31, %v17, 0.0
  %42 = vadd.xlane.f32.xlu0 %v41
  %v43 = vpop.xlane.xlu0 %42
  %v44 = vsel %vm31, %v18, 0.0
  %45 = vadd.xlane.f32.xlu0 %v44
  %v46 = vpop.xlane.xlu0 %45
  %v47 = vsel %vm31, %v19, 0.0
  %48 = vadd.xlane.f32.xlu0 %v47
  %v49 = vpop.xlane.xlu0 %48
  %v50 = vsel %vm31, %v20, 0.0
  %51 = vadd.xlane.f32.xlu0 %v50
  %v52 = vpop.xlane.xlu0 %51
  %v53 = vsel %vm31, %v21, 0.0
  %54 = vadd.xlane.f32.xlu0 %v53
  %v55 = vpop.xlane.xlu0 %54
  %v56 = vsel %vm31, %v22, 0.0
  %57 = vadd.xlane.f32.xlu0 %v56
  %v58 = vpop.xlane.xlu0 %57
  %v59 = vsel %vm31, %v23, 0.0
  %60 = vadd.xlane.f32.xlu0 %v59
  %v61 = vpop.xlane.xlu0 %60
  %v62 = vsel %vm31, %v24, 0.0
  %63 = vadd.xlane.f32.xlu0 %v62
  %v64 = vpop.xlane.xlu0 %63
  %v65 = vsel %vm31, %v25, 0.0
  %66 = vadd.xlane.f32.xlu0 %v65
  %v67 = vpop.xlane.xlu0 %66
  %v68 = vrcp.pop 32.0
  %v69 = vmul.f32 %v34, %v68
  %v70 = vmul.f32 %v37, %v68
  %v71 = vmul.f32 %v40, %v68
  %v72 = vmul.f32 %v43, %v68
  %v73 = vmul.f32 %v46, %v68
  %v74 = vmul.f32 %v49, %v68
  %v75 = vmul.f32 %v52, %v68
  %v76 = vmul.f32 %v55, %v68
  %v77 = vmul.f32 %v58, %v68
  %v78 = vmul.f32 %v61, %v68
  %v79 = vmul.f32 %v64, %v68
  %v80 = vmul.f32 %v67, %v68
  %v81 = vsub.f32 %v14, %v69
  %v82 = vsub.f32 %v15, %v70
  %v83 = vsub.f32 %v16, %v71
  %v84 = vsub.f32 %v17, %v72
  %v85 = vsub.f32 %v18, %v73
  %v86 = vsub.f32 %v19, %v74
  %v87 = vsub.f32 %v20, %v75
  %v88 = vsub.f32 %v21, %v76
  %v89 = vsub.f32 %v22, %v77
  %v90 = vsub.f32 %v23, %v78
  %v91 = vsub.f32 %v24, %v79
  %v92 = vsub.f32 %v25, %v80
  %v93 = vmul.f32 %v81, %v81
  %v94 = vmul.f32 %v82, %v82
  %v95 = vmul.f32 %v83, %v83
  %v96 = vmul.f32 %v84, %v84
  %v97 = vmul.f32 %v85, %v85
  %v98 = vmul.f32 %v86, %v86
  %v99 = vmul.f32 %v87, %v87
  %v100 = vmul.f32 %v88, %v88
  %v101 = vmul.f32 %v89, %v89
  %v102 = vmul.f32 %v90, %v90
  %v103 = vmul.f32 %v91, %v91
  %v104 = vmul.f32 %v92, %v92
  %v105 = vsel %vm31, %v93, 0.0
  %106 = vadd.xlane.f32.xlu0 %v105
  %v107 = vpop.xlane.xlu0 %106
  %v108 = vsel %vm31, %v94, 0.0
  %109 = vadd.xlane.f32.xlu0 %v108
  %v110 = vpop.xlane.xlu0 %109
  %v111 = vsel %vm31, %v95, 0.0
  %112 = vadd.xlane.f32.xlu0 %v111
  %v113 = vpop.xlane.xlu0 %112
  %v114 = vsel %vm31, %v96, 0.0
  %115 = vadd.xlane.f32.xlu0 %v114
  %v116 = vpop.xlane.xlu0 %115
  %v117 = vsel %vm31, %v97, 0.0
  %118 = vadd.xlane.f32.xlu0 %v117
  %v119 = vpop.xlane.xlu0 %118
  %v120 = vsel %vm31, %v98, 0.0
  %121 = vadd.xlane.f32.xlu0 %v120
  %v122 = vpop.xlane.xlu0 %121
  %v123 = vsel %vm31, %v99, 0.0
  %124 = vadd.xlane.f32.xlu0 %v123
  %v125 = vpop.xlane.xlu0 %124
  %v126 = vsel %vm31, %v100, 0.0
  %127 = vadd.xlane.f32.xlu0 %v126
  %v128 = vpop.xlane.xlu0 %127
  %v129 = vsel %vm31, %v101, 0.0
  %130 = vadd.xlane.f32.xlu0 %v129
  %v131 = vpop.xlane.xlu0 %130
  %v132 = vsel %vm31, %v102, 0.0
  %133 = vadd.xlane.f32.xlu0 %v132
  %v134 = vpop.xlane.xlu0 %133
  %v135 = vsel %vm31, %v103, 0.0
  %136 = vadd.xlane.f32.xlu0 %v135
  %v137 = vpop.xlane.xlu0 %136
  %v138 = vsel %vm31, %v104, 0.0
  %139 = vadd.xlane.f32.xlu0 %v138
  %v140 = vpop.xlane.xlu0 %139
  %v141 = vmul.f32 %v107, %v68
  %v142 = vmul.f32 %v110, %v68
  %v143 = vmul.f32 %v113, %v68
  %v144 = vmul.f32 %v116, %v68
  %v145 = vmul.f32 %v119, %v68
  %v146 = vmul.f32 %v122, %v68
  %v147 = vmul.f32 %v125, %v68
  %v148 = vmul.f32 %v128, %v68
  %v149 = vmul.f32 %v131, %v68
  %v150 = vmul.f32 %v134, %v68
  %v151 = vmul.f32 %v137, %v68
  %v152 = vmul.f32 %v140, %v68
  %v153 = vadd.f32 %v141, 1e-05
  %v154 = vadd.f32 %v142, 1e-05
  %v155 = vadd.f32 %v143, 1e-05
  %v156 = vadd.f32 %v144, 1e-05
  %v157 = vadd.f32 %v145, 1e-05
  %v158 = vadd.f32 %v146, 1e-05
  %v159 = vadd.f32 %v147, 1e-05
  %v160 = vadd.f32 %v148, 1e-05
  %v161 = vadd.f32 %v149, 1e-05
  %v162 = vadd.f32 %v150, 1e-05
  %v163 = vadd.f32 %v151, 1e-05
  %v164 = vadd.f32 %v152, 1e-05
  %v165 = vrsqrt.pop %v153
  %v166 = vrsqrt.pop %v154
  %v167 = vrsqrt.pop %v155
  %v168 = vrsqrt.pop %v156
  %v169 = vrsqrt.pop %v157
  %v170 = vrsqrt.pop %v158
  %v171 = vrsqrt.pop %v159
  %v172 = vrsqrt.pop %v160
  %v173 = vrsqrt.pop %v161
  %v174 = vrsqrt.pop %v162
  %v175 = vrsqrt.pop %v163
  %v176 = vrsqrt.pop %v164
  %v177 = vmul.f32 %v81, %v165
  %v178 = vmul.f32 %v82, %v166
  %v179 = vmul.f32 %v83, %v167
  %v180 = vmul.f32 %v84, %v168
  %v181 = vmul.f32 %v85, %v169
  %v182 = vmul.f32 %v86, %v170
  %v183 = vmul.f32 %v87, %v171
  %v184 = vmul.f32 %v88, %v172
  %v185 = vmul.f32 %v89, %v173
  %v186 = vmul.f32 %v90, %v174
  %v187 = vmul.f32 %v91, %v175
  %v188 = vmul.f32 %v92, %v176
  %v189 = vlaneseq
  %v190 = vshrl.u32 %v189, 7
  %v191 = vsub.s32 0, %v190
  %v192 = vrot.slane %v30, %v191
  %v194 = vsel %vm31, %v177, 0
  %v197 = vsel %vm31, %v178, 0
  %v200 = vsel %vm31, %v179, 0
  %v203 = vsel %vm31, %v180, 0
  %v206 = vsel %vm31, %v181, 0
  %v209 = vsel %vm31, %v182, 0
  %v212 = vsel %vm31, %v183, 0
  %v215 = vsel %vm31, %v184, 0
  %v218 = vsel %vm31, %v185, 0
  %v221 = vsel %vm31, %v186, 0
  %v224 = vsel %vm31, %v187, 0
  %v227 = vsel %vm31, %v188, 0
  %229 = vmatprep.subr.mxu0 0.0
  %230 = vmatpush1.msra.mxu0 %v26
  %231 = vmatprep.subr.mxu0 0.0
  %232 = vmatpush1.msra.mxu0 %v27
  %233 = vmatprep.subr.mxu0 0.0
  %234 = vmatpush1.msra.mxu0 %v28
  %235 = vmatprep.subr.mxu0 0.0
  %236 = vmatpush1.msra.mxu0 %v29
  %237 = vmatprep.subr.mxu0 0.0
  %238 = vmatpush1.msra.mxu0 0.0
  %239 = vmatprep.subr.mxu0 0.0
  %240 = vmatpush1.msra.mxu0 0.0
  %241 = vmatprep.subr.mxu0 0.0
  %242 = vmatpush1.msra.mxu0 0.0
  %243 = vmatprep.subr.mxu0 0.0
  %244 = vmatpush1.msra.mxu0 0.0
  %245 = vmatprep.subr.mxu0 0.0
  %246 = vmatpush1.msra.mxu0 0.0
  %247 = vmatprep.subr.mxu0 0.0
  %248 = vmatpush1.msra.mxu0 0.0
  %249 = vmatprep.subr.mxu0 0.0
  %250 = vmatpush1.msra.mxu0 0.0
  %251 = vmatprep.subr.mxu0 0.0
  %252 = vmatpush1.msra.mxu0 0.0
  %253 = vmatprep.subr.mxu0 0.0
  %254 = vmatpush1.msra.mxu0 0.0
  %255 = vmatprep.subr.mxu0 0.0
  %256 = vmatpush1.msra.mxu0 0.0
  %257 = vmatprep.subr.mxu0 0.0
  %258 = vmatpush1.msra.mxu0 0.0
  %259 = vmatprep.subr.mxu0 0.0
  %260 = vmatpush1.msra.mxu0 0.0
  %261 = vmatprep.subr.mxu0 0.0
  %262 = vmatpush1.msra.mxu0 0.0
  %263 = vmatprep.subr.mxu0 0.0
  %264 = vmatpush1.msra.mxu0 0.0
  %265 = vmatprep.subr.mxu0 0.0
  %266 = vmatpush1.msra.mxu0 0.0
  %267 = vmatprep.subr.mxu0 0.0
  %268 = vmatpush1.msra.mxu0 0.0
  %269 = vmatprep.subr.mxu0 0.0
  %270 = vmatpush1.msra.mxu0 0.0
  %271 = vmatprep.subr.mxu0 0.0
  %272 = vmatpush1.msra.mxu0 0.0
  %273 = vmatprep.subr.mxu0 0.0
  %274 = vmatpush1.msra.mxu0 0.0
  %275 = vmatprep.subr.mxu0 0.0
  %276 = vmatpush1.msra.mxu0 0.0
  %277 = vmatprep.subr.mxu0 0.0
  %278 = vmatpush1.msra.mxu0 0.0
  %279 = vmatprep.subr.mxu0 0.0
  %280 = vmatpush1.msra.mxu0 0.0
  %281 = vmatprep.subr.mxu0 0.0
  %282 = vmatpush1.msra.mxu0 0.0
  %283 = vmatprep.subr.mxu0 0.0
  %284 = vmatpush1.msra.mxu0 0.0
  %285 = vmatprep.subr.mxu0 0.0
  %286 = vmatpush1.msra.mxu0 0.0
  %287 = vmatprep.subr.mxu0 0.0
  %288 = vmatpush1.msra.mxu0 0.0
  %289 = vmatprep.subr.mxu0 0.0
  %290 = vmatpush1.msra.mxu0 0.0
  %291 = vmatprep.subr.mxu0 0.0
  %292 = vmatpush1.msra.mxu0 0.0
  %293 = vmatprep.mubr.f32.mxu0 0.0
  %294 = vmatmul.mubr.f32.gmra.mrb[0].mxu0 %v194
  %v295 = vpop.f32.mrb[0].mxu0
  %v296 = vadd.f32 %v192, %v295
  %v297 = vpop.f32.mrb[0].mxu0
  %298 = vmatprep.mubr.f32.mxu0 0.0
  %299 = vmatmul.mubr.f32.gmra.mrb[0].mxu0 %v197
  %v300 = vpop.f32.mrb[0].mxu0
  %v301 = vadd.f32 %v192, %v300
  %v302 = vpop.f32.mrb[0].mxu0
  %303 = vmatprep.mubr.f32.mxu0 0.0
  %304 = vmatmul.mubr.f32.gmra.mrb[0].mxu0 %v200
  %v305 = vpop.f32.mrb[0].mxu0
  %v306 = vadd.f32 %v192, %v305
  %v307 = vpop.f32.mrb[0].mxu0
  %308 = vmatprep.mubr.f32.mxu0 0.0
  %309 = vmatmul.mubr.f32.gmra.mrb[0].mxu0 %v203
  %v310 = vpop.f32.mrb[0].mxu0
  %v311 = vadd.f32 %v192, %v310
  %v312 = vpop.f32.mrb[0].mxu0
  %313 = vmatprep.mubr.f32.mxu0 0.0
  %314 = vmatmul.mubr.f32.gmra.mrb[0].mxu0 %v206
  %v315 = vpop.f32.mrb[0].mxu0
  %v316 = vadd.f32 %v192, %v315
  %v317 = vpop.f32.mrb[0].mxu0
  %318 = vmatprep.mubr.f32.mxu0 0.0
  %319 = vmatmul.mubr.f32.gmra.mrb[0].mxu0 %v209
  %v320 = vpop.f32.mrb[0].mxu0
  %v321 = vadd.f32 %v192, %v320
  %v322 = vpop.f32.mrb[0].mxu0
  %323 = vmatprep.mubr.f32.mxu0 0.0
  %324 = vmatmul.mubr.f32.gmra.mrb[0].mxu0 %v212
  %v325 = vpop.f32.mrb[0].mxu0
  %v326 = vadd.f32 %v192, %v325
  %v327 = vpop.f32.mrb[0].mxu0
  %328 = vmatprep.mubr.f32.mxu0 0.0
  %329 = vmatmul.mubr.f32.gmra.mrb[0].mxu0 %v215
  %v330 = vpop.f32.mrb[0].mxu0
  %v331 = vadd.f32 %v192, %v330
  %v332 = vpop.f32.mrb[0].mxu0
  %333 = vmatprep.mubr.f32.mxu0 0.0
  %334 = vmatmul.mubr.f32.gmra.mrb[0].mxu0 %v218
  %v335 = vpop.f32.mrb[0].mxu0
  %v336 = vadd.f32 %v192, %v335
  %v337 = vpop.f32.mrb[0].mxu0
  %338 = vmatprep.mubr.f32.mxu0 0.0
  %339 = vmatmul.mubr.f32.gmra.mrb[0].mxu0 %v221
  %v340 = vpop.f32.mrb[0].mxu0
  %v341 = vadd.f32 %v192, %v340
  %v342 = vpop.f32.mrb[0].mxu0
  %343 = vmatprep.mubr.f32.mxu0 0.0
  %344 = vmatmul.mubr.f32.gmra.mrb[0].mxu0 %v224
  %v345 = vpop.f32.mrb[0].mxu0
  %v346 = vadd.f32 %v192, %v345
  %v347 = vpop.f32.mrb[0].mxu0
  %348 = vmatprep.mubr.f32.mxu0 0.0
  %349 = vmatmul.mubr.f32.gmra.mrb[0].mxu0 %v227
  %v350 = vpop.f32.mrb[0].mxu0
  %v351 = vadd.f32 %v192, %v350
  %v352 = vpop.f32.mrb[0].mxu0
  %353 = vdwg.mxu0
  %vm354 = vcmask 785408
  %355 = vst.msk [vmem:[#allocation2] sm:$0xff] %vm354, %v296
  %356 = vst.msk [vmem:[#allocation2 + $0x8] sm:$0xff] %vm354, %v301
  %357 = vst.msk [vmem:[#allocation2 + $0x10] sm:$0xff] %vm354, %v306
  %358 = vst.msk [vmem:[#allocation2 + $0x18] sm:$0xff] %vm354, %v311
  %359 = vst.msk [vmem:[#allocation2 + $0x20] sm:$0xff] %vm354, %v316
  %360 = vst.msk [vmem:[#allocation2 + $0x28] sm:$0xff] %vm354, %v321
  %361 = vst.msk [vmem:[#allocation2 + $0x30] sm:$0xff] %vm354, %v326
  %362 = vst.msk [vmem:[#allocation2 + $0x38] sm:$0xff] %vm354, %v331
  %363 = vst.msk [vmem:[#allocation2 + $0x40] sm:$0xff] %vm354, %v336
  %364 = vst.msk [vmem:[#allocation2 + $0x48] sm:$0xff] %vm354, %v341
  %365 = vst.msk [vmem:[#allocation2 + $0x50] sm:$0xff] %vm354, %v346
  %366 = vst.msk [vmem:[#allocation2 + $0x58] sm:$0xff] %vm354, %v351
  %v367 = vld [vmem:[#allocation2] sm:$0xff]
  %v368 = vld [vmem:[#allocation2 + $0x8] sm:$0xff]
  %v369 = vld [vmem:[#allocation2 + $0x10] sm:$0xff]
  %v370 = vld [vmem:[#allocation2 + $0x18] sm:$0xff]
  %v371 = vld [vmem:[#allocation2 + $0x20] sm:$0xff]
  %v372 = vld [vmem:[#allocation2 + $0x28] sm:$0xff]
  %v373 = vld [vmem:[#allocation2 + $0x30] sm:$0xff]
  %v374 = vld [vmem:[#allocation2 + $0x38] sm:$0xff]
  %v375 = vld [vmem:[#allocation2 + $0x40] sm:$0xff]
  %v376 = vld [vmem:[#allocation2 + $0x48] sm:$0xff]
  %v377 = vld [vmem:[#allocation2 + $0x50] sm:$0xff]
  %v378 = vld [vmem:[#allocation2 + $0x58] sm:$0xff]
  %v379 = vld [vmem:[%s2] sm:$0xff]
  %v380 = vld [vmem:[%s2 + $0x8] sm:$0xff]
  %v381 = vld [vmem:[%s2 + $0x10] sm:$0xff]
  %v382 = vld [vmem:[%s2 + $0x18] sm:$0xff]
  %v383 = vld [vmem:[%s2 + $0x20] sm:$0xff]
  %v384 = vld [vmem:[%s2 + $0x28] sm:$0xff]
  %v385 = vld [vmem:[%s2 + $0x30] sm:$0xff]
  %v386 = vld [vmem:[%s2 + $0x38] sm:$0xff]
  %v387 = vld [vmem:[%s2 + $0x40] sm:$0xff]
  %v388 = vld [vmem:[%s2 + $0x48] sm:$0xff]
  %v389 = vld [vmem:[%s2 + $0x50] sm:$0xff]
  %v390 = vld [vmem:[%s2 + $0x58] sm:$0xff]
  %403 = vrot.lane.b32.xlu0 %v367, 96
  %v404 = vpop.permute.xlu0 %403
  %405 = vrot.lane.b32.xlu0 %v368, 96
  %v406 = vpop.permute.xlu0 %405
  %407 = vrot.lane.b32.xlu0 %v369, 96
  %v408 = vpop.permute.xlu0 %407
  %409 = vrot.lane.b32.xlu0 %v370, 96
  %v410 = vpop.permute.xlu0 %409
  %411 = vrot.lane.b32.xlu0 %v371, 96
  %v412 = vpop.permute.xlu0 %411
  %413 = vrot.lane.b32.xlu0 %v372, 96
  %v414 = vpop.permute.xlu0 %413
  %415 = vrot.lane.b32.xlu0 %v373, 96
  %v416 = vpop.permute.xlu0 %415
  %417 = vrot.lane.b32.xlu0 %v374, 96
  %v418 = vpop.permute.xlu0 %417
  %419 = vrot.lane.b32.xlu0 %v375, 96
  %v420 = vpop.permute.xlu0 %419
  %421 = vrot.lane.b32.xlu0 %v376, 96
  %v422 = vpop.permute.xlu0 %421
  %423 = vrot.lane.b32.xlu0 %v377, 96
  %v424 = vpop.permute.xlu0 %423
  %425 = vrot.lane.b32.xlu0 %v378, 96
  %v426 = vpop.permute.xlu0 %425
  %vm427 = vcmask 130048
  %v428 = vsel %vm427, %v367, 0
  %v430 = vsel %vm427, %v368, 0
  %v432 = vsel %vm427, %v369, 0
  %v434 = vsel %vm427, %v370, 0
  %v436 = vsel %vm427, %v371, 0
  %v438 = vsel %vm427, %v372, 0
  %v440 = vsel %vm427, %v373, 0
  %v442 = vsel %vm427, %v374, 0
  %v444 = vsel %vm427, %v375, 0
  %v446 = vsel %vm427, %v376, 0
  %v448 = vsel %vm427, %v377, 0
  %v450 = vsel %vm427, %v378, 0
  %v452 = vsel %vm427, %v404, 0
  %v454 = vsel %vm427, %v406, 0
  %v456 = vsel %vm427, %v408, 0
  %v458 = vsel %vm427, %v410, 0
  %v460 = vsel %vm427, %v412, 0
  %v462 = vsel %vm427, %v414, 0
  %v464 = vsel %vm427, %v416, 0
  %v466 = vsel %vm427, %v418, 0
  %v468 = vsel %vm427, %v420, 0
  %v470 = vsel %vm427, %v422, 0
  %v472 = vsel %vm427, %v424, 0
  %v474 = vsel %vm427, %v426, 0
  %476 = vmatprep.subr.mxu0 0.0
  %477 = vmatpush1.xpose.msra.mxu0 %v452
  %478 = vmatprep.subr.mxu0 0.0
  %479 = vmatpush1.xpose.msra.mxu0 %v454
  %480 = vmatprep.subr.mxu0 0.0
  %481 = vmatpush1.xpose.msra.mxu0 %v456
  %482 = vmatprep.subr.mxu0 0.0
  %483 = vmatpush1.xpose.msra.mxu0 %v458
  %484 = vmatprep.subr.mxu0 0.0
  %485 = vmatpush1.xpose.msra.mxu0 %v460
  %486 = vmatprep.subr.mxu0 0.0
  %487 = vmatpush1.xpose.msra.mxu0 %v462
  %488 = vmatprep.subr.mxu0 0.0
  %489 = vmatpush1.xpose.msra.mxu0 %v464
  %490 = vmatprep.subr.mxu0 0.0
  %491 = vmatpush1.xpose.msra.mxu0 %v466
  %492 = vmatprep.subr.mxu0 0.0
  %493 = vmatpush1.xpose.msra.mxu0 %v468
  %494 = vmatprep.subr.mxu0 0.0
  %495 = vmatpush1.xpose.msra.mxu0 %v470
  %496 = vmatprep.subr.mxu0 0.0
  %497 = vmatpush1.xpose.msra.mxu0 %v472
  %498 = vmatprep.subr.mxu0 0.0
  %499 = vmatpush1.xpose.msra.mxu0 %v474
  %500 = vmatprep.subr.mxu0 0.0
  %501 = vmatpush1.xpose.msra.mxu0 0.0
  %502 = vmatprep.subr.mxu0 0.0
  %503 = vmatpush1.xpose.msra.mxu0 0.0
  %504 = vmatprep.subr.mxu0 0.0
  %505 = vmatpush1.xpose.msra.mxu0 0.0
  %506 = vmatprep.subr.mxu0 0.0
  %507 = vmatpush1.xpose.msra.mxu0 0.0
  %508 = vmatprep.subr.mxu0 0.0
  %509 = vmatpush1.xpose.msra.mxu0 0.0
  %510 = vmatprep.subr.mxu0 0.0
  %511 = vmatpush1.xpose.msra.mxu0 0.0
  %512 = vmatprep.subr.mxu0 0.0
  %513 = vmatpush1.xpose.msra.mxu0 0.0
  %514 = vmatprep.subr.mxu0 0.0
  %515 = vmatpush1.xpose.msra.mxu0 0.0
  %516 = vmatprep.subr.mxu0 0.0
  %517 = vmatpush1.xpose.msra.mxu0 0.0
  %518 = vmatprep.subr.mxu0 0.0
  %519 = vmatpush1.xpose.msra.mxu0 0.0
  %520 = vmatprep.subr.mxu0 0.0
  %521 = vmatpush1.xpose.msra.mxu0 0.0
  %522 = vmatprep.subr.mxu0 0.0
  %523 = vmatpush1.xpose.msra.mxu0 0.0
  %524 = vmatprep.subr.mxu0 0.0
  %525 = vmatpush1.xpose.msra.mxu0 0.0
  %526 = vmatprep.subr.mxu0 0.0
  %527 = vmatpush1.xpose.msra.mxu0 0.0
  %528 = vmatprep.subr.mxu0 0.0
  %529 = vmatpush1.xpose.msra.mxu0 0.0
  %530 = vmatprep.subr.mxu0 0.0
  %531 = vmatpush1.xpose.msra.mxu0 0.0
  %532 = vmatprep.subr.mxu0 0.0
  %533 = vmatpush1.xpose.msra.mxu0 0.0
  %534 = vmatprep.subr.mxu0 0.0
  %535 = vmatpush1.xpose.msra.mxu0 0.0
  %536 = vmatprep.subr.mxu0 0.0
  %537 = vmatpush1.xpose.msra.mxu0 0.0
  %538 = vmatprep.subr.mxu0 0.0
  %539 = vmatpush1.xpose.msra.mxu0 0.0
  %540 = vmatprep.mubr.f32.mxu0 0.0
  %541 = vmatmul.mubr.f32.gmra.mrb[0].mxu0 %v428
  %v542 = vpop.f32.mrb[0].mxu0
  %v543 = vadd.f32 %v379, %v542
  %v544 = vpop.f32.mrb[0].mxu0
  %545 = vmatprep.mubr.f32.mxu0 0.0
  %546 = vmatmul.mubr.f32.gmra.mrb[0].mxu0 %v430
  %v547 = vpop.f32.mrb[0].mxu0
  %v548 = vadd.f32 %v380, %v547
  %v549 = vpop.f32.mrb[0].mxu0
  %550 = vmatprep.mubr.f32.mxu0 0.0
  %551 = vmatmul.mubr.f32.gmra.mrb[0].mxu0 %v432
  %v552 = vpop.f32.mrb[0].mxu0
  %v553 = vadd.f32 %v381, %v552
  %v554 = vpop.f32.mrb[0].mxu0
  %555 = vmatprep.mubr.f32.mxu0 0.0
  %556 = vmatmul.mubr.f32.gmra.mrb[0].mxu0 %v434
  %v557 = vpop.f32.mrb[0].mxu0
  %v558 = vadd.f32 %v382, %v557
  %v559 = vpop.f32.mrb[0].mxu0
  %560 = vmatprep.mubr.f32.mxu0 0.0
  %561 = vmatmul.mubr.f32.gmra.mrb[0].mxu0 %v436
  %v562 = vpop.f32.mrb[0].mxu0
  %v563 = vadd.f32 %v383, %v562
  %v564 = vpop.f32.mrb[0].mxu0
  %565 = vmatprep.mubr.f32.mxu0 0.0
  %566 = vmatmul.mubr.f32.gmra.mrb[0].mxu0 %v438
  %v567 = vpop.f32.mrb[0].mxu0
  %v568 = vadd.f32 %v384, %v567
  %v569 = vpop.f32.mrb[0].mxu0
  %570 = vmatprep.mubr.f32.mxu0 0.0
  %571 = vmatmul.mubr.f32.gmra.mrb[0].mxu0 %v440
  %v572 = vpop.f32.mrb[0].mxu0
  %v573 = vadd.f32 %v385, %v572
  %v574 = vpop.f32.mrb[0].mxu0
  %575 = vmatprep.mubr.f32.mxu0 0.0
  %576 = vmatmul.mubr.f32.gmra.mrb[0].mxu0 %v442
  %v577 = vpop.f32.mrb[0].mxu0
  %v578 = vadd.f32 %v386, %v577
  %v579 = vpop.f32.mrb[0].mxu0
  %580 = vmatprep.mubr.f32.mxu0 0.0
  %581 = vmatmul.mubr.f32.gmra.mrb[0].mxu0 %v444
  %v582 = vpop.f32.mrb[0].mxu0
  %v583 = vadd.f32 %v387, %v582
  %v584 = vpop.f32.mrb[0].mxu0
  %585 = vmatprep.mubr.f32.mxu0 0.0
  %586 = vmatmul.mubr.f32.gmra.mrb[0].mxu0 %v446
  %v587 = vpop.f32.mrb[0].mxu0
  %v588 = vadd.f32 %v388, %v587
  %v589 = vpop.f32.mrb[0].mxu0
  %590 = vmatprep.mubr.f32.mxu0 0.0
  %591 = vmatmul.mubr.f32.gmra.mrb[0].mxu0 %v448
  %v592 = vpop.f32.mrb[0].mxu0
  %v593 = vadd.f32 %v389, %v592
  %v594 = vpop.f32.mrb[0].mxu0
  %595 = vmatprep.mubr.f32.mxu0 0.0
  %596 = vmatmul.mubr.f32.gmra.mrb[0].mxu0 %v450
  %v597 = vpop.f32.mrb[0].mxu0
  %v598 = vadd.f32 %v390, %v597
  %v599 = vpop.f32.mrb[0].mxu0
  %600 = vdwg.mxu0
  %v601 = vsel %vm354, %v543, -inf
  %602 = vmax.xlane.f32.xlu0 %v601
  %v603 = vpop.xlane.xlu0 %602
  %v604 = vsel %vm354, %v548, -inf
  %605 = vmax.xlane.f32.xlu0 %v604
  %v606 = vpop.xlane.xlu0 %605
  %v607 = vsel %vm354, %v553, -inf
  %608 = vmax.xlane.f32.xlu0 %v607
  %v609 = vpop.xlane.xlu0 %608
  %v610 = vsel %vm354, %v558, -inf
  %611 = vmax.xlane.f32.xlu0 %v610
  %v612 = vpop.xlane.xlu0 %611
  %v613 = vsel %vm354, %v563, -inf
  %614 = vmax.xlane.f32.xlu0 %v613
  %v615 = vpop.xlane.xlu0 %614
  %v616 = vsel %vm354, %v568, -inf
  %617 = vmax.xlane.f32.xlu0 %v616
  %v618 = vpop.xlane.xlu0 %617
  %v619 = vsel %vm354, %v573, -inf
  %620 = vmax.xlane.f32.xlu0 %v619
  %v621 = vpop.xlane.xlu0 %620
  %v622 = vsel %vm354, %v578, -inf
  %623 = vmax.xlane.f32.xlu0 %v622
  %v624 = vpop.xlane.xlu0 %623
  %v625 = vsel %vm354, %v583, -inf
  %626 = vmax.xlane.f32.xlu0 %v625
  %v627 = vpop.xlane.xlu0 %626
  %v628 = vsel %vm354, %v588, -inf
  %629 = vmax.xlane.f32.xlu0 %v628
  %v630 = vpop.xlane.xlu0 %629
  %v631 = vsel %vm354, %v593, -inf
  %632 = vmax.xlane.f32.xlu0 %v631
  %v633 = vpop.xlane.xlu0 %632
  %v634 = vsel %vm354, %v598, -inf
  %635 = vmax.xlane.f32.xlu0 %v634
  %v636 = vpop.xlane.xlu0 %635
  %v637 = vsub.f32 %v543, %v603
  %v638 = vsub.f32 %v548, %v606
  %v639 = vsub.f32 %v553, %v609
  %v640 = vsub.f32 %v558, %v612
  %v641 = vsub.f32 %v563, %v615
  %v642 = vsub.f32 %v568, %v618
  %v643 = vsub.f32 %v573, %v621
  %v644 = vsub.f32 %v578, %v624
  %v645 = vsub.f32 %v583, %v627
  %v646 = vsub.f32 %v588, %v630
  %v647 = vsub.f32 %v593, %v633
  %v648 = vsub.f32 %v598, %v636
  %v649 = vmul.f32 %v637, 1.442695
  %v650 = vpow.pop %v649
  %v651 = vmul.f32 %v638, 1.442695
  %v652 = vpow.pop %v651
  %v653 = vmul.f32 %v639, 1.442695
  %v654 = vpow.pop %v653
  %v655 = vmul.f32 %v640, 1.442695
  %v656 = vpow.pop %v655
  %v657 = vmul.f32 %v641, 1.442695
  %v658 = vpow.pop %v657
  %v659 = vmul.f32 %v642, 1.442695
  %v660 = vpow.pop %v659
  %v661 = vmul.f32 %v643, 1.442695
  %v662 = vpow.pop %v661
  %v663 = vmul.f32 %v644, 1.442695
  %v664 = vpow.pop %v663
  %v665 = vmul.f32 %v645, 1.442695
  %v666 = vpow.pop %v665
  %v667 = vmul.f32 %v646, 1.442695
  %v668 = vpow.pop %v667
  %v669 = vmul.f32 %v647, 1.442695
  %v670 = vpow.pop %v669
  %v671 = vmul.f32 %v648, 1.442695
  %v672 = vpow.pop %v671
  %v673 = vsel %vm354, %v650, 0.0
  %674 = vadd.xlane.f32.xlu0 %v673
  %v675 = vpop.xlane.xlu0 %674
  %v676 = vsel %vm354, %v652, 0.0
  %677 = vadd.xlane.f32.xlu0 %v676
  %v678 = vpop.xlane.xlu0 %677
  %v679 = vsel %vm354, %v654, 0.0
  %680 = vadd.xlane.f32.xlu0 %v679
  %v681 = vpop.xlane.xlu0 %680
  %v682 = vsel %vm354, %v656, 0.0
  %683 = vadd.xlane.f32.xlu0 %v682
  %v684 = vpop.xlane.xlu0 %683
  %v685 = vsel %vm354, %v658, 0.0
  %686 = vadd.xlane.f32.xlu0 %v685
  %v687 = vpop.xlane.xlu0 %686
  %v688 = vsel %vm354, %v660, 0.0
  %689 = vadd.xlane.f32.xlu0 %v688
  %v690 = vpop.xlane.xlu0 %689
  %v691 = vsel %vm354, %v662, 0.0
  %692 = vadd.xlane.f32.xlu0 %v691
  %v693 = vpop.xlane.xlu0 %692
  %v694 = vsel %vm354, %v664, 0.0
  %695 = vadd.xlane.f32.xlu0 %v694
  %v696 = vpop.xlane.xlu0 %695
  %v697 = vsel %vm354, %v666, 0.0
  %698 = vadd.xlane.f32.xlu0 %v697
  %v699 = vpop.xlane.xlu0 %698
  %v700 = vsel %vm354, %v668, 0.0
  %701 = vadd.xlane.f32.xlu0 %v700
  %v702 = vpop.xlane.xlu0 %701
  %v703 = vsel %vm354, %v670, 0.0
  %704 = vadd.xlane.f32.xlu0 %v703
  %v705 = vpop.xlane.xlu0 %704
  %v706 = vsel %vm354, %v672, 0.0
  %707 = vadd.xlane.f32.xlu0 %v706
  %v708 = vpop.xlane.xlu0 %707
  %v709 = vrcp.pop %v675
  %v710 = vrcp.pop %v678
  %v711 = vrcp.pop %v681
  %v712 = vrcp.pop %v684
  %v713 = vrcp.pop %v687
  %v714 = vrcp.pop %v690
  %v715 = vrcp.pop %v693
  %v716 = vrcp.pop %v696
  %v717 = vrcp.pop %v699
  %v718 = vrcp.pop %v702
  %v719 = vrcp.pop %v705
  %v720 = vrcp.pop %v708
  %v721 = vmul.f32 %v650, %v709
  %v722 = vmul.f32 %v652, %v710
  %v723 = vmul.f32 %v654, %v711
  %v724 = vmul.f32 %v656, %v712
  %v725 = vmul.f32 %v658, %v713
  %v726 = vmul.f32 %v660, %v714
  %v727 = vmul.f32 %v662, %v715
  %v728 = vmul.f32 %v664, %v716
  %v729 = vmul.f32 %v666, %v717
  %v730 = vmul.f32 %v668, %v718
  %v731 = vmul.f32 %v670, %v719
  %v732 = vmul.f32 %v672, %v720
  %733 = vrot.lane.b32.xlu0 %v367, 64
  %v734 = vpop.permute.xlu0 %733
  %735 = vrot.lane.b32.xlu0 %v368, 64
  %v736 = vpop.permute.xlu0 %735
  %737 = vrot.lane.b32.xlu0 %v369, 64
  %v738 = vpop.permute.xlu0 %737
  %739 = vrot.lane.b32.xlu0 %v370, 64
  %v740 = vpop.permute.xlu0 %739
  %741 = vrot.lane.b32.xlu0 %v371, 64
  %v742 = vpop.permute.xlu0 %741
  %743 = vrot.lane.b32.xlu0 %v372, 64
  %v744 = vpop.permute.xlu0 %743
  %745 = vrot.lane.b32.xlu0 %v373, 64
  %v746 = vpop.permute.xlu0 %745
  %747 = vrot.lane.b32.xlu0 %v374, 64
  %v748 = vpop.permute.xlu0 %747
  %749 = vrot.lane.b32.xlu0 %v375, 64
  %v750 = vpop.permute.xlu0 %749
  %751 = vrot.lane.b32.xlu0 %v376, 64
  %v752 = vpop.permute.xlu0 %751
  %753 = vrot.lane.b32.xlu0 %v377, 64
  %v754 = vpop.permute.xlu0 %753
  %755 = vrot.lane.b32.xlu0 %v378, 64
  %v756 = vpop.permute.xlu0 %755
  %v770 = vsel %vm354, %v721, 0
  %v773 = vsel %vm354, %v722, 0
  %v776 = vsel %vm354, %v723, 0
  %v779 = vsel %vm354, %v724, 0
  %v782 = vsel %vm354, %v725, 0
  %v785 = vsel %vm354, %v726, 0
  %v788 = vsel %vm354, %v727, 0
  %v791 = vsel %vm354, %v728, 0
  %v794 = vsel %vm354, %v729, 0
  %v797 = vsel %vm354, %v730, 0
  %v800 = vsel %vm354, %v731, 0
  %v803 = vsel %vm354, %v732, 0
  %805 = vmatprep.subr.mxu0 0.0
  %806 = vmatpush1.msra.mxu0 %v734
  %807 = vmatprep.subr.mxu0 0.0
  %808 = vmatpush1.msra.mxu0 %v736
  %809 = vmatprep.subr.mxu0 0.0
  %810 = vmatpush1.msra.mxu0 %v738
  %811 = vmatprep.subr.mxu0 0.0
  %812 = vmatpush1.msra.mxu0 %v740
  %813 = vmatprep.subr.mxu0 0.0
  %814 = vmatpush1.msra.mxu0 %v742
  %815 = vmatprep.subr.mxu0 0.0
  %816 = vmatpush1.msra.mxu0 %v744
  %817 = vmatprep.subr.mxu0 0.0
  %818 = vmatpush1.msra.mxu0 %v746
  %819 = vmatprep.subr.mxu0 0.0
  %820 = vmatpush1.msra.mxu0 %v748
  %821 = vmatprep.subr.mxu0 0.0
  %822 = vmatpush1.msra.mxu0 %v750
  %823 = vmatprep.subr.mxu0 0.0
  %824 = vmatpush1.msra.mxu0 %v752
  %825 = vmatprep.subr.mxu0 0.0
  %826 = vmatpush1.msra.mxu0 %v754
  %827 = vmatprep.subr.mxu0 0.0
  %828 = vmatpush1.msra.mxu0 %v756
  %829 = vmatprep.subr.mxu0 0.0
  %830 = vmatpush1.msra.mxu0 0.0
  %831 = vmatprep.subr.mxu0 0.0
  %832 = vmatpush1.msra.mxu0 0.0
  %833 = vmatprep.subr.mxu0 0.0
  %834 = vmatpush1.msra.mxu0 0.0
  %835 = vmatprep.subr.mxu0 0.0
  %836 = vmatpush1.msra.mxu0 0.0
  %837 = vmatprep.subr.mxu0 0.0
  %838 = vmatpush1.msra.mxu0 0.0
  %839 = vmatprep.subr.mxu0 0.0
  %840 = vmatpush1.msra.mxu0 0.0
  %841 = vmatprep.subr.mxu0 0.0
  %842 = vmatpush1.msra.mxu0 0.0
  %843 = vmatprep.subr.mxu0 0.0
  %844 = vmatpush1.msra.mxu0 0.0
  %845 = vmatprep.subr.mxu0 0.0
  %846 = vmatpush1.msra.mxu0 0.0
  %847 = vmatprep.subr.mxu0 0.0
  %848 = vmatpush1.msra.mxu0 0.0
  %849 = vmatprep.subr.mxu0 0.0
  %850 = vmatpush1.msra.mxu0 0.0
  %851 = vmatprep.subr.mxu0 0.0
  %852 = vmatpush1.msra.mxu0 0.0
  %853 = vmatprep.subr.mxu0 0.0
  %854 = vmatpush1.msra.mxu0 0.0
  %855 = vmatprep.subr.mxu0 0.0
  %856 = vmatpush1.msra.mxu0 0.0
  %857 = vmatprep.subr.mxu0 0.0
  %858 = vmatpush1.msra.mxu0 0.0
  %859 = vmatprep.subr.mxu0 0.0
  %860 = vmatpush1.msra.mxu0 0.0
  %861 = vmatprep.subr.mxu0 0.0
  %862 = vmatpush1.msra.mxu0 0.0
  %863 = vmatprep.subr.mxu0 0.0
  %864 = vmatpush1.msra.mxu0 0.0
  %865 = vmatprep.subr.mxu0 0.0
  %866 = vmatpush1.msra.mxu0 0.0
  %867 = vmatprep.subr.mxu0 0.0
  %868 = vmatpush1.msra.mxu0 0.0
  %869 = vmatprep.mubr.f32.mxu0 0.0
  %870 = vmatmul.mubr.f32.gmra.mrb[0].mxu0 %v770
  %v871 = vpop.f32.mrb[0].mxu0
  %v872 = vadd.f32 0.0, %v871
  %v873 = vpop.f32.mrb[0].mxu0
  %874 = vmatprep.mubr.f32.mxu0 0.0
  %875 = vmatmul.mubr.f32.gmra.mrb[0].mxu0 %v773
  %v876 = vpop.f32.mrb[0].mxu0
  %v877 = vadd.f32 0.0, %v876
  %v878 = vpop.f32.mrb[0].mxu0
  %879 = vmatprep.mubr.f32.mxu0 0.0
  %880 = vmatmul.mubr.f32.gmra.mrb[0].mxu0 %v776
  %v881 = vpop.f32.mrb[0].mxu0
  %v882 = vadd.f32 0.0, %v881
  %v883 = vpop.f32.mrb[0].mxu0
  %884 = vmatprep.mubr.f32.mxu0 0.0
  %885 = vmatmul.mubr.f32.gmra.mrb[0].mxu0 %v779
  %v886 = vpop.f32.mrb[0].mxu0
  %v887 = vadd.f32 0.0, %v886
  %v888 = vpop.f32.mrb[0].mxu0
  %889 = vmatprep.mubr.f32.mxu0 0.0
  %890 = vmatmul.mubr.f32.gmra.mrb[0].mxu0 %v782
  %v891 = vpop.f32.mrb[0].mxu0
  %v892 = vadd.f32 0.0, %v891
  %v893 = vpop.f32.mrb[0].mxu0
  %894 = vmatprep.mubr.f32.mxu0 0.0
  %895 = vmatmul.mubr.f32.gmra.mrb[0].mxu0 %v785
  %v896 = vpop.f32.mrb[0].mxu0
  %v897 = vadd.f32 0.0, %v896
  %v898 = vpop.f32.mrb[0].mxu0
  %899 = vmatprep.mubr.f32.mxu0 0.0
  %900 = vmatmul.mubr.f32.gmra.mrb[0].mxu0 %v788
  %v901 = vpop.f32.mrb[0].mxu0
  %v902 = vadd.f32 0.0, %v901
  %v903 = vpop.f32.mrb[0].mxu0
  %904 = vmatprep.mubr.f32.mxu0 0.0
  %905 = vmatmul.mubr.f32.gmra.mrb[0].mxu0 %v791
  %v906 = vpop.f32.mrb[0].mxu0
  %v907 = vadd.f32 0.0, %v906
  %v908 = vpop.f32.mrb[0].mxu0
  %909 = vmatprep.mubr.f32.mxu0 0.0
  %910 = vmatmul.mubr.f32.gmra.mrb[0].mxu0 %v794
  %v911 = vpop.f32.mrb[0].mxu0
  %v912 = vadd.f32 0.0, %v911
  %v913 = vpop.f32.mrb[0].mxu0
  %914 = vmatprep.mubr.f32.mxu0 0.0
  %915 = vmatmul.mubr.f32.gmra.mrb[0].mxu0 %v797
  %v916 = vpop.f32.mrb[0].mxu0
  %v917 = vadd.f32 0.0, %v916
  %v918 = vpop.f32.mrb[0].mxu0
  %919 = vmatprep.mubr.f32.mxu0 0.0
  %920 = vmatmul.mubr.f32.gmra.mrb[0].mxu0 %v800
  %v921 = vpop.f32.mrb[0].mxu0
  %v922 = vadd.f32 0.0, %v921
  %v923 = vpop.f32.mrb[0].mxu0
  %924 = vmatprep.mubr.f32.mxu0 0.0
  %925 = vmatmul.mubr.f32.gmra.mrb[0].mxu0 %v803
  %v926 = vpop.f32.mrb[0].mxu0
  %v927 = vadd.f32 0.0, %v926
  %v928 = vpop.f32.mrb[0].mxu0
  %929 = vdwg.mxu0
  %v930 = vld [vmem:[%s1] sm:$0xff]
  %v931 = vld [vmem:[%s1 + $0x10] sm:$0xff]
  %934 = vrot.lane.b32.xlu0 %v930, 32
  %v935 = vpop.permute.xlu0 %934
  %936 = vrot.lane.b32.xlu0 %v931, 32
  %v937 = vpop.permute.xlu0 %936
  %v941 = vsel %vm427, %v872, 0
  %v944 = vsel %vm427, %v877, 0
  %v947 = vsel %vm427, %v882, 0
  %v950 = vsel %vm427, %v887, 0
  %v953 = vsel %vm427, %v892, 0
  %v956 = vsel %vm427, %v897, 0
  %v959 = vsel %vm427, %v902, 0
  %v962 = vsel %vm427, %v907, 0
  %v965 = vsel %vm427, %v912, 0
  %v968 = vsel %vm427, %v917, 0
  %v971 = vsel %vm427, %v922, 0
  %v974 = vsel %vm427, %v927, 0
  %976 = vmatprep.subr.mxu0 0.0
  %977 = vmatpush1.msra.mxu0 %v935
  %978 = vmatprep.subr.mxu0 0.0
  %979 = vmatpush1.msra.mxu0 %v937
  %980 = vmatprep.subr.mxu0 0.0
  %981 = vmatpush1.msra.mxu0 0.0
  %982 = vmatprep.subr.mxu0 0.0
  %983 = vmatpush1.msra.mxu0 0.0
  %984 = vmatprep.subr.mxu0 0.0
  %985 = vmatpush1.msra.mxu0 0.0
  %986 = vmatprep.subr.mxu0 0.0
  %987 = vmatpush1.msra.mxu0 0.0
  %988 = vmatprep.subr.mxu0 0.0
  %989 = vmatpush1.msra.mxu0 0.0
  %990 = vmatprep.subr.mxu0 0.0
  %991 = vmatpush1.msra.mxu0 0.0
  %992 = vmatprep.subr.mxu0 0.0
  %993 = vmatpush1.msra.mxu0 0.0
  %994 = vmatprep.subr.mxu0 0.0
  %995 = vmatpush1.msra.mxu0 0.0
  %996 = vmatprep.subr.mxu0 0.0
  %997 = vmatpush1.msra.mxu0 0.0
  %998 = vmatprep.subr.mxu0 0.0
  %999 = vmatpush1.msra.mxu0 0.0
  %1000 = vmatprep.subr.mxu0 0.0
  %1001 = vmatpush1.msra.mxu0 0.0
  %1002 = vmatprep.subr.mxu0 0.0
  %1003 = vmatpush1.msra.mxu0 0.0
  %1004 = vmatprep.subr.mxu0 0.0
  %1005 = vmatpush1.msra.mxu0 0.0
  %1006 = vmatprep.subr.mxu0 0.0
  %1007 = vmatpush1.msra.mxu0 0.0
  %1008 = vmatprep.subr.mxu0 0.0
  %1009 = vmatpush1.msra.mxu0 0.0
  %1010 = vmatprep.subr.mxu0 0.0
  %1011 = vmatpush1.msra.mxu0 0.0
  %1012 = vmatprep.subr.mxu0 0.0
  %1013 = vmatpush1.msra.mxu0 0.0
  %1014 = vmatprep.subr.mxu0 0.0
  %1015 = vmatpush1.msra.mxu0 0.0
  %1016 = vmatprep.subr.mxu0 0.0
  %1017 = vmatpush1.msra.mxu0 0.0
  %1018 = vmatprep.subr.mxu0 0.0
  %1019 = vmatpush1.msra.mxu0 0.0
  %1020 = vmatprep.subr.mxu0 0.0
  %1021 = vmatpush1.msra.mxu0 0.0
  %1022 = vmatprep.subr.mxu0 0.0
  %1023 = vmatpush1.msra.mxu0 0.0
  %1024 = vmatprep.subr.mxu0 0.0
  %1025 = vmatpush1.msra.mxu0 0.0
  %1026 = vmatprep.subr.mxu0 0.0
  %1027 = vmatpush1.msra.mxu0 0.0
  %1028 = vmatprep.subr.mxu0 0.0
  %1029 = vmatpush1.msra.mxu0 0.0
  %1030 = vmatprep.subr.mxu0 0.0
  %1031 = vmatpush1.msra.mxu0 0.0
  %1032 = vmatprep.subr.mxu0 0.0
  %1033 = vmatpush1.msra.mxu0 0.0
  %1034 = vmatprep.subr.mxu0 0.0
  %1035 = vmatpush1.msra.mxu0 0.0
  %1036 = vmatprep.subr.mxu0 0.0
  %1037 = vmatpush1.msra.mxu0 0.0
  %1038 = vmatprep.subr.mxu0 0.0
  %1039 = vmatpush1.msra.mxu0 0.0
  %1040 = vmatprep.mubr.f32.mxu0 0.0
  %1041 = vmatmul.mubr.f32.gmra.mrb[0].mxu0 %v941
  %v1042 = vpop.f32.mrb[0].mxu0
  %v1043 = vadd.f32 0.0, %v1042
  %v1044 = vpop.f32.mrb[0].mxu0
  %1045 = vmatprep.mubr.f32.mxu0 0.0
  %1046 = vmatmul.mubr.f32.gmra.mrb[0].mxu0 %v944
  %v1047 = vpop.f32.mrb[0].mxu0
  %v1048 = vadd.f32 0.0, %v1047
  %v1049 = vpop.f32.mrb[0].mxu0
  %1050 = vmatprep.mubr.f32.mxu0 0.0
  %1051 = vmatmul.mubr.f32.gmra.mrb[0].mxu0 %v947
  %v1052 = vpop.f32.mrb[0].mxu0
  %v1053 = vadd.f32 0.0, %v1052
  %v1054 = vpop.f32.mrb[0].mxu0
  %1055 = vmatprep.mubr.f32.mxu0 0.0
  %1056 = vmatmul.mubr.f32.gmra.mrb[0].mxu0 %v950
  %v1057 = vpop.f32.mrb[0].mxu0
  %v1058 = vadd.f32 0.0, %v1057
  %v1059 = vpop.f32.mrb[0].mxu0
  %1060 = vmatprep.mubr.f32.mxu0 0.0
  %1061 = vmatmul.mubr.f32.gmra.mrb[0].mxu0 %v953
  %v1062 = vpop.f32.mrb[0].mxu0
  %v1063 = vadd.f32 0.0, %v1062
  %v1064 = vpop.f32.mrb[0].mxu0
  %1065 = vmatprep.mubr.f32.mxu0 0.0
  %1066 = vmatmul.mubr.f32.gmra.mrb[0].mxu0 %v956
  %v1067 = vpop.f32.mrb[0].mxu0
  %v1068 = vadd.f32 0.0, %v1067
  %v1069 = vpop.f32.mrb[0].mxu0
  %1070 = vmatprep.mubr.f32.mxu0 0.0
  %1071 = vmatmul.mubr.f32.gmra.mrb[0].mxu0 %v959
  %v1072 = vpop.f32.mrb[0].mxu0
  %v1073 = vadd.f32 0.0, %v1072
  %v1074 = vpop.f32.mrb[0].mxu0
  %1075 = vmatprep.mubr.f32.mxu0 0.0
  %1076 = vmatmul.mubr.f32.gmra.mrb[0].mxu0 %v962
  %v1077 = vpop.f32.mrb[0].mxu0
  %v1078 = vadd.f32 0.0, %v1077
  %v1079 = vpop.f32.mrb[0].mxu0
  %1080 = vmatprep.mubr.f32.mxu0 0.0
  %1081 = vmatmul.mubr.f32.gmra.mrb[0].mxu0 %v965
  %v1082 = vpop.f32.mrb[0].mxu0
  %v1083 = vadd.f32 0.0, %v1082
  %v1084 = vpop.f32.mrb[0].mxu0
  %1085 = vmatprep.mubr.f32.mxu0 0.0
  %1086 = vmatmul.mubr.f32.gmra.mrb[0].mxu0 %v968
  %v1087 = vpop.f32.mrb[0].mxu0
  %v1088 = vadd.f32 0.0, %v1087
  %v1089 = vpop.f32.mrb[0].mxu0
  %1090 = vmatprep.mubr.f32.mxu0 0.0
  %1091 = vmatmul.mubr.f32.gmra.mrb[0].mxu0 %v971
  %v1092 = vpop.f32.mrb[0].mxu0
  %v1093 = vadd.f32 0.0, %v1092
  %v1094 = vpop.f32.mrb[0].mxu0
  %1095 = vmatprep.mubr.f32.mxu0 0.0
  %1096 = vmatmul.mubr.f32.gmra.mrb[0].mxu0 %v974
  %v1097 = vpop.f32.mrb[0].mxu0
  %v1098 = vadd.f32 0.0, %v1097
  %v1099 = vpop.f32.mrb[0].mxu0
  %1100 = vdwg.mxu0
  %v1101 = vadd.f32 %v14, %v1043
  %v1102 = vadd.f32 %v15, %v1048
  %v1103 = vadd.f32 %v16, %v1053
  %v1104 = vadd.f32 %v17, %v1058
  %v1105 = vadd.f32 %v18, %v1063
  %v1106 = vadd.f32 %v19, %v1068
  %v1107 = vadd.f32 %v20, %v1073
  %v1108 = vadd.f32 %v21, %v1078
  %v1109 = vadd.f32 %v22, %v1083
  %v1110 = vadd.f32 %v23, %v1088
  %v1111 = vadd.f32 %v24, %v1093
  %v1112 = vadd.f32 %v25, %v1098
  %1113 = vrot.lane.b32.xlu0 %v367, 112
  %v1114 = vpop.permute.xlu0 %1113
  %1115 = vrot.lane.b32.xlu0 %v368, 112
  %v1116 = vpop.permute.xlu0 %1115
  %1117 = vrot.lane.b32.xlu0 %v369, 112
  %v1118 = vpop.permute.xlu0 %1117
  %1119 = vrot.lane.b32.xlu0 %v370, 112
  %v1120 = vpop.permute.xlu0 %1119
  %1121 = vrot.lane.b32.xlu0 %v371, 112
  %v1122 = vpop.permute.xlu0 %1121
  %1123 = vrot.lane.b32.xlu0 %v372, 112
  %v1124 = vpop.permute.xlu0 %1123
  %1125 = vrot.lane.b32.xlu0 %v373, 112
  %v1126 = vpop.permute.xlu0 %1125
  %1127 = vrot.lane.b32.xlu0 %v374, 112
  %v1128 = vpop.permute.xlu0 %1127
  %1129 = vrot.lane.b32.xlu0 %v375, 112
  %v1130 = vpop.permute.xlu0 %1129
  %1131 = vrot.lane.b32.xlu0 %v376, 112
  %v1132 = vpop.permute.xlu0 %1131
  %1133 = vrot.lane.b32.xlu0 %v377, 112
  %v1134 = vpop.permute.xlu0 %1133
  %1135 = vrot.lane.b32.xlu0 %v378, 112
  %v1136 = vpop.permute.xlu0 %1135
  %1137 = vrot.lane.b32.xlu0 %v367, 80
  %v1138 = vpop.permute.xlu0 %1137
  %1139 = vrot.lane.b32.xlu0 %v368, 80
  %v1140 = vpop.permute.xlu0 %1139
  %1141 = vrot.lane.b32.xlu0 %v369, 80
  %v1142 = vpop.permute.xlu0 %1141
  %1143 = vrot.lane.b32.xlu0 %v370, 80
  %v1144 = vpop.permute.xlu0 %1143
  %1145 = vrot.lane.b32.xlu0 %v371, 80
  %v1146 = vpop.permute.xlu0 %1145
  %1147 = vrot.lane.b32.xlu0 %v372, 80
  %v1148 = vpop.permute.xlu0 %1147
  %1149 = vrot.lane.b32.xlu0 %v373, 80
  %v1150 = vpop.permute.xlu0 %1149
  %1151 = vrot.lane.b32.xlu0 %v374, 80
  %v1152 = vpop.permute.xlu0 %1151
  %1153 = vrot.lane.b32.xlu0 %v375, 80
  %v1154 = vpop.permute.xlu0 %1153
  %1155 = vrot.lane.b32.xlu0 %v376, 80
  %v1156 = vpop.permute.xlu0 %1155
  %1157 = vrot.lane.b32.xlu0 %v377, 80
  %v1158 = vpop.permute.xlu0 %1157
  %1159 = vrot.lane.b32.xlu0 %v378, 80
  %v1160 = vpop.permute.xlu0 %1159
  %v1161 = vsel %vm427, %v1114, 0
  %v1163 = vsel %vm427, %v1116, 0
  %v1165 = vsel %vm427, %v1118, 0
  %v1167 = vsel %vm427, %v1120, 0
  %v1169 = vsel %vm427, %v1122, 0
  %v1171 = vsel %vm427, %v1124, 0
  %v1173 = vsel %vm427, %v1126, 0
  %v1175 = vsel %vm427, %v1128, 0
  %v1177 = vsel %vm427, %v1130, 0
  %v1179 = vsel %vm427, %v1132, 0
  %v1181 = vsel %vm427, %v1134, 0
  %v1183 = vsel %vm427, %v1136, 0
  %v1185 = vsel %vm427, %v1138, 0
  %v1187 = vsel %vm427, %v1140, 0
  %v1189 = vsel %vm427, %v1142, 0
  %v1191 = vsel %vm427, %v1144, 0
  %v1193 = vsel %vm427, %v1146, 0
  %v1195 = vsel %vm427, %v1148, 0
  %v1197 = vsel %vm427, %v1150, 0
  %v1199 = vsel %vm427, %v1152, 0
  %v1201 = vsel %vm427, %v1154, 0
  %v1203 = vsel %vm427, %v1156, 0
  %v1205 = vsel %vm427, %v1158, 0
  %v1207 = vsel %vm427, %v1160, 0
  %1209 = vmatprep.subr.mxu0 0.0
  %1210 = vmatpush1.xpose.msra.mxu0 %v1185
  %1211 = vmatprep.subr.mxu0 0.0
  %1212 = vmatpush1.xpose.msra.mxu0 %v1187
  %1213 = vmatprep.subr.mxu0 0.0
  %1214 = vmatpush1.xpose.msra.mxu0 %v1189
  %1215 = vmatprep.subr.mxu0 0.0
  %1216 = vmatpush1.xpose.msra.mxu0 %v1191
  %1217 = vmatprep.subr.mxu0 0.0
  %1218 = vmatpush1.xpose.msra.mxu0 %v1193
  %1219 = vmatprep.subr.mxu0 0.0
  %1220 = vmatpush1.xpose.msra.mxu0 %v1195
  %1221 = vmatprep.subr.mxu0 0.0
  %1222 = vmatpush1.xpose.msra.mxu0 %v1197
  %1223 = vmatprep.subr.mxu0 0.0
  %1224 = vmatpush1.xpose.msra.mxu0 %v1199
  %1225 = vmatprep.subr.mxu0 0.0
  %1226 = vmatpush1.xpose.msra.mxu0 %v1201
  %1227 = vmatprep.subr.mxu0 0.0
  %1228 = vmatpush1.xpose.msra.mxu0 %v1203
  %1229 = vmatprep.subr.mxu0 0.0
  %1230 = vmatpush1.xpose.msra.mxu0 %v1205
  %1231 = vmatprep.subr.mxu0 0.0
  %1232 = vmatpush1.xpose.msra.mxu0 %v1207
  %1233 = vmatprep.subr.mxu0 0.0
  %1234 = vmatpush1.xpose.msra.mxu0 0.0
  %1235 = vmatprep.subr.mxu0 0.0
  %1236 = vmatpush1.xpose.msra.mxu0 0.0
  %1237 = vmatprep.subr.mxu0 0.0
  %1238 = vmatpush1.xpose.msra.mxu0 0.0
  %1239 = vmatprep.subr.mxu0 0.0
  %1240 = vmatpush1.xpose.msra.mxu0 0.0
  %1241 = vmatprep.subr.mxu0 0.0
  %1242 = vmatpush1.xpose.msra.mxu0 0.0
  %1243 = vmatprep.subr.mxu0 0.0
  %1244 = vmatpush1.xpose.msra.mxu0 0.0
  %1245 = vmatprep.subr.mxu0 0.0
  %1246 = vmatpush1.xpose.msra.mxu0 0.0
  %1247 = vmatprep.subr.mxu0 0.0
  %1248 = vmatpush1.xpose.msra.mxu0 0.0
  %1249 = vmatprep.subr.mxu0 0.0
  %1250 = vmatpush1.xpose.msra.mxu0 0.0
  %1251 = vmatprep.subr.mxu0 0.0
  %1252 = vmatpush1.xpose.msra.mxu0 0.0
  %1253 = vmatprep.subr.mxu0 0.0
  %1254 = vmatpush1.xpose.msra.mxu0 0.0
  %1255 = vmatprep.subr.mxu0 0.0
  %1256 = vmatpush1.xpose.msra.mxu0 0.0
  %1257 = vmatprep.subr.mxu0 0.0
  %1258 = vmatpush1.xpose.msra.mxu0 0.0
  %1259 = vmatprep.subr.mxu0 0.0
  %1260 = vmatpush1.xpose.msra.mxu0 0.0
  %1261 = vmatprep.subr.mxu0 0.0
  %1262 = vmatpush1.xpose.msra.mxu0 0.0
  %1263 = vmatprep.subr.mxu0 0.0
  %1264 = vmatpush1.xpose.msra.mxu0 0.0
  %1265 = vmatprep.subr.mxu0 0.0
  %1266 = vmatpush1.xpose.msra.mxu0 0.0
  %1267 = vmatprep.subr.mxu0 0.0
  %1268 = vmatpush1.xpose.msra.mxu0 0.0
  %1269 = vmatprep.subr.mxu0 0.0
  %1270 = vmatpush1.xpose.msra.mxu0 0.0
  %1271 = vmatprep.subr.mxu0 0.0
  %1272 = vmatpush1.xpose.msra.mxu0 0.0
  %1273 = vmatprep.mubr.f32.mxu0 0.0
  %1274 = vmatmul.mubr.f32.gmra.mrb[0].mxu0 %v1161
  %v1275 = vpop.f32.mrb[0].mxu0
  %v1276 = vadd.f32 %v379, %v1275
  %v1277 = vpop.f32.mrb[0].mxu0
  %1278 = vmatprep.mubr.f32.mxu0 0.0
  %1279 = vmatmul.mubr.f32.gmra.mrb[0].mxu0 %v1163
  %v1280 = vpop.f32.mrb[0].mxu0
  %v1281 = vadd.f32 %v380, %v1280
  %v1282 = vpop.f32.mrb[0].mxu0
  %1283 = vmatprep.mubr.f32.mxu0 0.0
  %1284 = vmatmul.mubr.f32.gmra.mrb[0].mxu0 %v1165
  %v1285 = vpop.f32.mrb[0].mxu0
  %v1286 = vadd.f32 %v381, %v1285
  %v1287 = vpop.f32.mrb[0].mxu0
  %1288 = vmatprep.mubr.f32.mxu0 0.0
  %1289 = vmatmul.mubr.f32.gmra.mrb[0].mxu0 %v1167
  %v1290 = vpop.f32.mrb[0].mxu0
  %v1291 = vadd.f32 %v382, %v1290
  %v1292 = vpop.f32.mrb[0].mxu0
  %1293 = vmatprep.mubr.f32.mxu0 0.0
  %1294 = vmatmul.mubr.f32.gmra.mrb[0].mxu0 %v1169
  %v1295 = vpop.f32.mrb[0].mxu0
  %v1296 = vadd.f32 %v383, %v1295
  %v1297 = vpop.f32.mrb[0].mxu0
  %1298 = vmatprep.mubr.f32.mxu0 0.0
  %1299 = vmatmul.mubr.f32.gmra.mrb[0].mxu0 %v1171
  %v1300 = vpop.f32.mrb[0].mxu0
  %v1301 = vadd.f32 %v384, %v1300
  %v1302 = vpop.f32.mrb[0].mxu0
  %1303 = vmatprep.mubr.f32.mxu0 0.0
  %1304 = vmatmul.mubr.f32.gmra.mrb[0].mxu0 %v1173
  %v1305 = vpop.f32.mrb[0].mxu0
  %v1306 = vadd.f32 %v385, %v1305
  %v1307 = vpop.f32.mrb[0].mxu0
  %1308 = vmatprep.mubr.f32.mxu0 0.0
  %1309 = vmatmul.mubr.f32.gmra.mrb[0].mxu0 %v1175
  %v1310 = vpop.f32.mrb[0].mxu0
  %v1311 = vadd.f32 %v386, %v1310
  %v1312 = vpop.f32.mrb[0].mxu0
  %1313 = vmatprep.mubr.f32.mxu0 0.0
  %1314 = vmatmul.mubr.f32.gmra.mrb[0].mxu0 %v1177
  %v1315 = vpop.f32.mrb[0].mxu0
  %v1316 = vadd.f32 %v387, %v1315
  %v1317 = vpop.f32.mrb[0].mxu0
  %1318 = vmatprep.mubr.f32.mxu0 0.0
  %1319 = vmatmul.mubr.f32.gmra.mrb[0].mxu0 %v1179
  %v1320 = vpop.f32.mrb[0].mxu0
  %v1321 = vadd.f32 %v388, %v1320
  %v1322 = vpop.f32.mrb[0].mxu0
  %1323 = vmatprep.mubr.f32.mxu0 0.0
  %1324 = vmatmul.mubr.f32.gmra.mrb[0].mxu0 %v1181
  %v1325 = vpop.f32.mrb[0].mxu0
  %v1326 = vadd.f32 %v389, %v1325
  %v1327 = vpop.f32.mrb[0].mxu0
  %1328 = vmatprep.mubr.f32.mxu0 0.0
  %1329 = vmatmul.mubr.f32.gmra.mrb[0].mxu0 %v1183
  %v1330 = vpop.f32.mrb[0].mxu0
  %v1331 = vadd.f32 %v390, %v1330
  %v1332 = vpop.f32.mrb[0].mxu0
  %1333 = vdwg.mxu0
  %v1334 = vsel %vm354, %v1276, -inf
  %1335 = vmax.xlane.f32.xlu0 %v1334
  %v1336 = vpop.xlane.xlu0 %1335
  %v1337 = vsel %vm354, %v1281, -inf
  %1338 = vmax.xlane.f32.xlu0 %v1337
  %v1339 = vpop.xlane.xlu0 %1338
  %v1340 = vsel %vm354, %v1286, -inf
  %1341 = vmax.xlane.f32.xlu0 %v1340
  %v1342 = vpop.xlane.xlu0 %1341
  %v1343 = vsel %vm354, %v1291, -inf
  %1344 = vmax.xlane.f32.xlu0 %v1343
  %v1345 = vpop.xlane.xlu0 %1344
  %v1346 = vsel %vm354, %v1296, -inf
  %1347 = vmax.xlane.f32.xlu0 %v1346
  %v1348 = vpop.xlane.xlu0 %1347
  %v1349 = vsel %vm354, %v1301, -inf
  %1350 = vmax.xlane.f32.xlu0 %v1349
  %v1351 = vpop.xlane.xlu0 %1350
  %v1352 = vsel %vm354, %v1306, -inf
  %1353 = vmax.xlane.f32.xlu0 %v1352
  %v1354 = vpop.xlane.xlu0 %1353
  %v1355 = vsel %vm354, %v1311, -inf
  %1356 = vmax.xlane.f32.xlu0 %v1355
  %v1357 = vpop.xlane.xlu0 %1356
  %v1358 = vsel %vm354, %v1316, -inf
  %1359 = vmax.xlane.f32.xlu0 %v1358
  %v1360 = vpop.xlane.xlu0 %1359
  %v1361 = vsel %vm354, %v1321, -inf
  %1362 = vmax.xlane.f32.xlu0 %v1361
  %v1363 = vpop.xlane.xlu0 %1362
  %v1364 = vsel %vm354, %v1326, -inf
  %1365 = vmax.xlane.f32.xlu0 %v1364
  %v1366 = vpop.xlane.xlu0 %1365
  %v1367 = vsel %vm354, %v1331, -inf
  %1368 = vmax.xlane.f32.xlu0 %v1367
  %v1369 = vpop.xlane.xlu0 %1368
  %v1370 = vsub.f32 %v1276, %v1336
  %v1371 = vsub.f32 %v1281, %v1339
  %v1372 = vsub.f32 %v1286, %v1342
  %v1373 = vsub.f32 %v1291, %v1345
  %v1374 = vsub.f32 %v1296, %v1348
  %v1375 = vsub.f32 %v1301, %v1351
  %v1376 = vsub.f32 %v1306, %v1354
  %v1377 = vsub.f32 %v1311, %v1357
  %v1378 = vsub.f32 %v1316, %v1360
  %v1379 = vsub.f32 %v1321, %v1363
  %v1380 = vsub.f32 %v1326, %v1366
  %v1381 = vsub.f32 %v1331, %v1369
  %v1382 = vmul.f32 %v1370, 1.442695
  %v1383 = vpow.pop %v1382
  %v1384 = vmul.f32 %v1371, 1.442695
  %v1385 = vpow.pop %v1384
  %v1386 = vmul.f32 %v1372, 1.442695
  %v1387 = vpow.pop %v1386
  %v1388 = vmul.f32 %v1373, 1.442695
  %v1389 = vpow.pop %v1388
  %v1390 = vmul.f32 %v1374, 1.442695
  %v1391 = vpow.pop %v1390
  %v1392 = vmul.f32 %v1375, 1.442695
  %v1393 = vpow.pop %v1392
  %v1394 = vmul.f32 %v1376, 1.442695
  %v1395 = vpow.pop %v1394
  %v1396 = vmul.f32 %v1377, 1.442695
  %v1397 = vpow.pop %v1396
  %v1398 = vmul.f32 %v1378, 1.442695
  %v1399 = vpow.pop %v1398
  %v1400 = vmul.f32 %v1379, 1.442695
  %v1401 = vpow.pop %v1400
  %v1402 = vmul.f32 %v1380, 1.442695
  %v1403 = vpow.pop %v1402
  %v1404 = vmul.f32 %v1381, 1.442695
  %v1405 = vpow.pop %v1404
  %v1406 = vsel %vm354, %v1383, 0.0
  %1407 = vadd.xlane.f32.xlu0 %v1406
  %v1408 = vpop.xlane.xlu0 %1407
  %v1409 = vsel %vm354, %v1385, 0.0
  %1410 = vadd.xlane.f32.xlu0 %v1409
  %v1411 = vpop.xlane.xlu0 %1410
  %v1412 = vsel %vm354, %v1387, 0.0
  %1413 = vadd.xlane.f32.xlu0 %v1412
  %v1414 = vpop.xlane.xlu0 %1413
  %v1415 = vsel %vm354, %v1389, 0.0
  %1416 = vadd.xlane.f32.xlu0 %v1415
  %v1417 = vpop.xlane.xlu0 %1416
  %v1418 = vsel %vm354, %v1391, 0.0
  %1419 = vadd.xlane.f32.xlu0 %v1418
  %v1420 = vpop.xlane.xlu0 %1419
  %v1421 = vsel %vm354, %v1393, 0.0
  %1422 = vadd.xlane.f32.xlu0 %v1421
  %v1423 = vpop.xlane.xlu0 %1422
  %v1424 = vsel %vm354, %v1395, 0.0
  %1425 = vadd.xlane.f32.xlu0 %v1424
  %v1426 = vpop.xlane.xlu0 %1425
  %v1427 = vsel %vm354, %v1397, 0.0
  %1428 = vadd.xlane.f32.xlu0 %v1427
  %v1429 = vpop.xlane.xlu0 %1428
  %v1430 = vsel %vm354, %v1399, 0.0
  %1431 = vadd.xlane.f32.xlu0 %v1430
  %v1432 = vpop.xlane.xlu0 %1431
  %v1433 = vsel %vm354, %v1401, 0.0
  %1434 = vadd.xlane.f32.xlu0 %v1433
  %v1435 = vpop.xlane.xlu0 %1434
  %v1436 = vsel %vm354, %v1403, 0.0
  %1437 = vadd.xlane.f32.xlu0 %v1436
  %v1438 = vpop.xlane.xlu0 %1437
  %v1439 = vsel %vm354, %v1405, 0.0
  %1440 = vadd.xlane.f32.xlu0 %v1439
  %v1441 = vpop.xlane.xlu0 %1440
  %v1442 = vrcp.pop %v1408
  %v1443 = vrcp.pop %v1411
  %v1444 = vrcp.pop %v1414
  %v1445 = vrcp.pop %v1417
  %v1446 = vrcp.pop %v1420
  %v1447 = vrcp.pop %v1423
  %v1448 = vrcp.pop %v1426
  %v1449 = vrcp.pop %v1429
  %v1450 = vrcp.pop %v1432
  %v1451 = vrcp.pop %v1435
  %v1452 = vrcp.pop %v1438
  %v1453 = vrcp.pop %v1441
  %v1454 = vmul.f32 %v1383, %v1442
  %v1455 = vmul.f32 %v1385, %v1443
  %v1456 = vmul.f32 %v1387, %v1444
  %v1457 = vmul.f32 %v1389, %v1445
  %v1458 = vmul.f32 %v1391, %v1446
  %v1459 = vmul.f32 %v1393, %v1447
  %v1460 = vmul.f32 %v1395, %v1448
  %v1461 = vmul.f32 %v1397, %v1449
  %v1462 = vmul.f32 %v1399, %v1450
  %v1463 = vmul.f32 %v1401, %v1451
  %v1464 = vmul.f32 %v1403, %v1452
  %v1465 = vmul.f32 %v1405, %v1453
  %1466 = vrot.lane.b32.xlu0 %v367, 48
  %v1467 = vpop.permute.xlu0 %1466
  %1468 = vrot.lane.b32.xlu0 %v368, 48
  %v1469 = vpop.permute.xlu0 %1468
  %1470 = vrot.lane.b32.xlu0 %v369, 48
  %v1471 = vpop.permute.xlu0 %1470
  %1472 = vrot.lane.b32.xlu0 %v370, 48
  %v1473 = vpop.permute.xlu0 %1472
  %1474 = vrot.lane.b32.xlu0 %v371, 48
  %v1475 = vpop.permute.xlu0 %1474
  %1476 = vrot.lane.b32.xlu0 %v372, 48
  %v1477 = vpop.permute.xlu0 %1476
  %1478 = vrot.lane.b32.xlu0 %v373, 48
  %v1479 = vpop.permute.xlu0 %1478
  %1480 = vrot.lane.b32.xlu0 %v374, 48
  %v1481 = vpop.permute.xlu0 %1480
  %1482 = vrot.lane.b32.xlu0 %v375, 48
  %v1483 = vpop.permute.xlu0 %1482
  %1484 = vrot.lane.b32.xlu0 %v376, 48
  %v1485 = vpop.permute.xlu0 %1484
  %1486 = vrot.lane.b32.xlu0 %v377, 48
  %v1487 = vpop.permute.xlu0 %1486
  %1488 = vrot.lane.b32.xlu0 %v378, 48
  %v1489 = vpop.permute.xlu0 %1488
  %v1503 = vsel %vm354, %v1454, 0
  %v1506 = vsel %vm354, %v1455, 0
  %v1509 = vsel %vm354, %v1456, 0
  %v1512 = vsel %vm354, %v1457, 0
  %v1515 = vsel %vm354, %v1458, 0
  %v1518 = vsel %vm354, %v1459, 0
  %v1521 = vsel %vm354, %v1460, 0
  %v1524 = vsel %vm354, %v1461, 0
  %v1527 = vsel %vm354, %v1462, 0
  %v1530 = vsel %vm354, %v1463, 0
  %v1533 = vsel %vm354, %v1464, 0
  %v1536 = vsel %vm354, %v1465, 0
  %1538 = vmatprep.subr.mxu0 0.0
  %1539 = vmatpush1.msra.mxu0 %v1467
  %1540 = vmatprep.subr.mxu0 0.0
  %1541 = vmatpush1.msra.mxu0 %v1469
  %1542 = vmatprep.subr.mxu0 0.0
  %1543 = vmatpush1.msra.mxu0 %v1471
  %1544 = vmatprep.subr.mxu0 0.0
  %1545 = vmatpush1.msra.mxu0 %v1473
  %1546 = vmatprep.subr.mxu0 0.0
  %1547 = vmatpush1.msra.mxu0 %v1475
  %1548 = vmatprep.subr.mxu0 0.0
  %1549 = vmatpush1.msra.mxu0 %v1477
  %1550 = vmatprep.subr.mxu0 0.0
  %1551 = vmatpush1.msra.mxu0 %v1479
  %1552 = vmatprep.subr.mxu0 0.0
  %1553 = vmatpush1.msra.mxu0 %v1481
  %1554 = vmatprep.subr.mxu0 0.0
  %1555 = vmatpush1.msra.mxu0 %v1483
  %1556 = vmatprep.subr.mxu0 0.0
  %1557 = vmatpush1.msra.mxu0 %v1485
  %1558 = vmatprep.subr.mxu0 0.0
  %1559 = vmatpush1.msra.mxu0 %v1487
  %1560 = vmatprep.subr.mxu0 0.0
  %1561 = vmatpush1.msra.mxu0 %v1489
  %1562 = vmatprep.subr.mxu0 0.0
  %1563 = vmatpush1.msra.mxu0 0.0
  %1564 = vmatprep.subr.mxu0 0.0
  %1565 = vmatpush1.msra.mxu0 0.0
  %1566 = vmatprep.subr.mxu0 0.0
  %1567 = vmatpush1.msra.mxu0 0.0
  %1568 = vmatprep.subr.mxu0 0.0
  %1569 = vmatpush1.msra.mxu0 0.0
  %1570 = vmatprep.subr.mxu0 0.0
  %1571 = vmatpush1.msra.mxu0 0.0
  %1572 = vmatprep.subr.mxu0 0.0
  %1573 = vmatpush1.msra.mxu0 0.0
  %1574 = vmatprep.subr.mxu0 0.0
  %1575 = vmatpush1.msra.mxu0 0.0
  %1576 = vmatprep.subr.mxu0 0.0
  %1577 = vmatpush1.msra.mxu0 0.0
  %1578 = vmatprep.subr.mxu0 0.0
  %1579 = vmatpush1.msra.mxu0 0.0
  %1580 = vmatprep.subr.mxu0 0.0
  %1581 = vmatpush1.msra.mxu0 0.0
  %1582 = vmatprep.subr.mxu0 0.0
  %1583 = vmatpush1.msra.mxu0 0.0
  %1584 = vmatprep.subr.mxu0 0.0
  %1585 = vmatpush1.msra.mxu0 0.0
  %1586 = vmatprep.subr.mxu0 0.0
  %1587 = vmatpush1.msra.mxu0 0.0
  %1588 = vmatprep.subr.mxu0 0.0
  %1589 = vmatpush1.msra.mxu0 0.0
  %1590 = vmatprep.subr.mxu0 0.0
  %1591 = vmatpush1.msra.mxu0 0.0
  %1592 = vmatprep.subr.mxu0 0.0
  %1593 = vmatpush1.msra.mxu0 0.0
  %1594 = vmatprep.subr.mxu0 0.0
  %1595 = vmatpush1.msra.mxu0 0.0
  %1596 = vmatprep.subr.mxu0 0.0
  %1597 = vmatpush1.msra.mxu0 0.0
  %1598 = vmatprep.subr.mxu0 0.0
  %1599 = vmatpush1.msra.mxu0 0.0
  %1600 = vmatprep.subr.mxu0 0.0
  %1601 = vmatpush1.msra.mxu0 0.0
  %1602 = vmatprep.mubr.f32.mxu0 0.0
  %1603 = vmatmul.mubr.f32.gmra.mrb[0].mxu0 %v1503
  %v1604 = vpop.f32.mrb[0].mxu0
  %v1605 = vadd.f32 0.0, %v1604
  %v1606 = vpop.f32.mrb[0].mxu0
  %1607 = vmatprep.mubr.f32.mxu0 0.0
  %1608 = vmatmul.mubr.f32.gmra.mrb[0].mxu0 %v1506
  %v1609 = vpop.f32.mrb[0].mxu0
  %v1610 = vadd.f32 0.0, %v1609
  %v1611 = vpop.f32.mrb[0].mxu0
  %1612 = vmatprep.mubr.f32.mxu0 0.0
  %1613 = vmatmul.mubr.f32.gmra.mrb[0].mxu0 %v1509
  %v1614 = vpop.f32.mrb[0].mxu0
  %v1615 = vadd.f32 0.0, %v1614
  %v1616 = vpop.f32.mrb[0].mxu0
  %1617 = vmatprep.mubr.f32.mxu0 0.0
  %1618 = vmatmul.mubr.f32.gmra.mrb[0].mxu0 %v1512
  %v1619 = vpop.f32.mrb[0].mxu0
  %v1620 = vadd.f32 0.0, %v1619
  %v1621 = vpop.f32.mrb[0].mxu0
  %1622 = vmatprep.mubr.f32.mxu0 0.0
  %1623 = vmatmul.mubr.f32.gmra.mrb[0].mxu0 %v1515
  %v1624 = vpop.f32.mrb[0].mxu0
  %v1625 = vadd.f32 0.0, %v1624
  %v1626 = vpop.f32.mrb[0].mxu0
  %1627 = vmatprep.mubr.f32.mxu0 0.0
  %1628 = vmatmul.mubr.f32.gmra.mrb[0].mxu0 %v1518
  %v1629 = vpop.f32.mrb[0].mxu0
  %v1630 = vadd.f32 0.0, %v1629
  %v1631 = vpop.f32.mrb[0].mxu0
  %1632 = vmatprep.mubr.f32.mxu0 0.0
  %1633 = vmatmul.mubr.f32.gmra.mrb[0].mxu0 %v1521
  %v1634 = vpop.f32.mrb[0].mxu0
  %v1635 = vadd.f32 0.0, %v1634
  %v1636 = vpop.f32.mrb[0].mxu0
  %1637 = vmatprep.mubr.f32.mxu0 0.0
  %1638 = vmatmul.mubr.f32.gmra.mrb[0].mxu0 %v1524
  %v1639 = vpop.f32.mrb[0].mxu0
  %v1640 = vadd.f32 0.0, %v1639
  %v1641 = vpop.f32.mrb[0].mxu0
  %1642 = vmatprep.mubr.f32.mxu0 0.0
  %1643 = vmatmul.mubr.f32.gmra.mrb[0].mxu0 %v1527
  %v1644 = vpop.f32.mrb[0].mxu0
  %v1645 = vadd.f32 0.0, %v1644
  %v1646 = vpop.f32.mrb[0].mxu0
  %1647 = vmatprep.mubr.f32.mxu0 0.0
  %1648 = vmatmul.mubr.f32.gmra.mrb[0].mxu0 %v1530
  %v1649 = vpop.f32.mrb[0].mxu0
  %v1650 = vadd.f32 0.0, %v1649
  %v1651 = vpop.f32.mrb[0].mxu0
  %1652 = vmatprep.mubr.f32.mxu0 0.0
  %1653 = vmatmul.mubr.f32.gmra.mrb[0].mxu0 %v1533
  %v1654 = vpop.f32.mrb[0].mxu0
  %v1655 = vadd.f32 0.0, %v1654
  %v1656 = vpop.f32.mrb[0].mxu0
  %1657 = vmatprep.mubr.f32.mxu0 0.0
  %1658 = vmatmul.mubr.f32.gmra.mrb[0].mxu0 %v1536
  %v1659 = vpop.f32.mrb[0].mxu0
  %v1660 = vadd.f32 0.0, %v1659
  %v1661 = vpop.f32.mrb[0].mxu0
  %1662 = vdwg.mxu0
  %v1663 = vld [vmem:[%s1 + $0x20] sm:$0xff]
  %v1664 = vld [vmem:[%s1 + $0x30] sm:$0xff]
  %1667 = vrot.lane.b32.xlu0 %v1663, 32
  %v1668 = vpop.permute.xlu0 %1667
  %1669 = vrot.lane.b32.xlu0 %v1664, 32
  %v1670 = vpop.permute.xlu0 %1669
  %v1674 = vsel %vm427, %v1605, 0
  %v1677 = vsel %vm427, %v1610, 0
  %v1680 = vsel %vm427, %v1615, 0
  %v1683 = vsel %vm427, %v1620, 0
  %v1686 = vsel %vm427, %v1625, 0
  %v1689 = vsel %vm427, %v1630, 0
  %v1692 = vsel %vm427, %v1635, 0
  %v1695 = vsel %vm427, %v1640, 0
  %v1698 = vsel %vm427, %v1645, 0
  %v1701 = vsel %vm427, %v1650, 0
  %v1704 = vsel %vm427, %v1655, 0
  %v1707 = vsel %vm427, %v1660, 0
  %1709 = vmatprep.subr.mxu0 0.0
  %1710 = vmatpush1.msra.mxu0 %v1668
  %1711 = vmatprep.subr.mxu0 0.0
  %1712 = vmatpush1.msra.mxu0 %v1670
  %1713 = vmatprep.subr.mxu0 0.0
  %1714 = vmatpush1.msra.mxu0 0.0
  %1715 = vmatprep.subr.mxu0 0.0
  %1716 = vmatpush1.msra.mxu0 0.0
  %1717 = vmatprep.subr.mxu0 0.0
  %1718 = vmatpush1.msra.mxu0 0.0
  %1719 = vmatprep.subr.mxu0 0.0
  %1720 = vmatpush1.msra.mxu0 0.0
  %1721 = vmatprep.subr.mxu0 0.0
  %1722 = vmatpush1.msra.mxu0 0.0
  %1723 = vmatprep.subr.mxu0 0.0
  %1724 = vmatpush1.msra.mxu0 0.0
  %1725 = vmatprep.subr.mxu0 0.0
  %1726 = vmatpush1.msra.mxu0 0.0
  %1727 = vmatprep.subr.mxu0 0.0
  %1728 = vmatpush1.msra.mxu0 0.0
  %1729 = vmatprep.subr.mxu0 0.0
  %1730 = vmatpush1.msra.mxu0 0.0
  %1731 = vmatprep.subr.mxu0 0.0
  %1732 = vmatpush1.msra.mxu0 0.0
  %1733 = vmatprep.subr.mxu0 0.0
  %1734 = vmatpush1.msra.mxu0 0.0
  %1735 = vmatprep.subr.mxu0 0.0
  %1736 = vmatpush1.msra.mxu0 0.0
  %1737 = vmatprep.subr.mxu0 0.0
  %1738 = vmatpush1.msra.mxu0 0.0
  %1739 = vmatprep.subr.mxu0 0.0
  %1740 = vmatpush1.msra.mxu0 0.0
  %1741 = vmatprep.subr.mxu0 0.0
  %1742 = vmatpush1.msra.mxu0 0.0
  %1743 = vmatprep.subr.mxu0 0.0
  %1744 = vmatpush1.msra.mxu0 0.0
  %1745 = vmatprep.subr.mxu0 0.0
  %1746 = vmatpush1.msra.mxu0 0.0
  %1747 = vmatprep.subr.mxu0 0.0
  %1748 = vmatpush1.msra.mxu0 0.0
  %1749 = vmatprep.subr.mxu0 0.0
  %1750 = vmatpush1.msra.mxu0 0.0
  %1751 = vmatprep.subr.mxu0 0.0
  %1752 = vmatpush1.msra.mxu0 0.0
  %1753 = vmatprep.subr.mxu0 0.0
  %1754 = vmatpush1.msra.mxu0 0.0
  %1755 = vmatprep.subr.mxu0 0.0
  %1756 = vmatpush1.msra.mxu0 0.0
  %1757 = vmatprep.subr.mxu0 0.0
  %1758 = vmatpush1.msra.mxu0 0.0
  %1759 = vmatprep.subr.mxu0 0.0
  %1760 = vmatpush1.msra.mxu0 0.0
  %1761 = vmatprep.subr.mxu0 0.0
  %1762 = vmatpush1.msra.mxu0 0.0
  %1763 = vmatprep.subr.mxu0 0.0
  %1764 = vmatpush1.msra.mxu0 0.0
  %1765 = vmatprep.subr.mxu0 0.0
  %1766 = vmatpush1.msra.mxu0 0.0
  %1767 = vmatprep.subr.mxu0 0.0
  %1768 = vmatpush1.msra.mxu0 0.0
  %1769 = vmatprep.subr.mxu0 0.0
  %1770 = vmatpush1.msra.mxu0 0.0
  %1771 = vmatprep.subr.mxu0 0.0
  %1772 = vmatpush1.msra.mxu0 0.0
  %1773 = vmatprep.mubr.f32.mxu0 0.0
  %1774 = vmatmul.mubr.f32.gmra.mrb[0].mxu0 %v1674
  %v1775 = vpop.f32.mrb[0].mxu0
  %v1776 = vadd.f32 0.0, %v1775
  %v1777 = vpop.f32.mrb[0].mxu0
  %1778 = vmatprep.mubr.f32.mxu0 0.0
  %1779 = vmatmul.mubr.f32.gmra.mrb[0].mxu0 %v1677
  %v1780 = vpop.f32.mrb[0].mxu0
  %v1781 = vadd.f32 0.0, %v1780
  %v1782 = vpop.f32.mrb[0].mxu0
  %1783 = vmatprep.mubr.f32.mxu0 0.0
  %1784 = vmatmul.mubr.f32.gmra.mrb[0].mxu0 %v1680
  %v1785 = vpop.f32.mrb[0].mxu0
  %v1786 = vadd.f32 0.0, %v1785
  %v1787 = vpop.f32.mrb[0].mxu0
  %1788 = vmatprep.mubr.f32.mxu0 0.0
  %1789 = vmatmul.mubr.f32.gmra.mrb[0].mxu0 %v1683
  %v1790 = vpop.f32.mrb[0].mxu0
  %v1791 = vadd.f32 0.0, %v1790
  %v1792 = vpop.f32.mrb[0].mxu0
  %1793 = vmatprep.mubr.f32.mxu0 0.0
  %1794 = vmatmul.mubr.f32.gmra.mrb[0].mxu0 %v1686
  %v1795 = vpop.f32.mrb[0].mxu0
  %v1796 = vadd.f32 0.0, %v1795
  %v1797 = vpop.f32.mrb[0].mxu0
  %1798 = vmatprep.mubr.f32.mxu0 0.0
  %1799 = vmatmul.mubr.f32.gmra.mrb[0].mxu0 %v1689
  %v1800 = vpop.f32.mrb[0].mxu0
  %v1801 = vadd.f32 0.0, %v1800
  %v1802 = vpop.f32.mrb[0].mxu0
  %1803 = vmatprep.mubr.f32.mxu0 0.0
  %1804 = vmatmul.mubr.f32.gmra.mrb[0].mxu0 %v1692
  %v1805 = vpop.f32.mrb[0].mxu0
  %v1806 = vadd.f32 0.0, %v1805
  %v1807 = vpop.f32.mrb[0].mxu0
  %1808 = vmatprep.mubr.f32.mxu0 0.0
  %1809 = vmatmul.mubr.f32.gmra.mrb[0].mxu0 %v1695
  %v1810 = vpop.f32.mrb[0].mxu0
  %v1811 = vadd.f32 0.0, %v1810
  %v1812 = vpop.f32.mrb[0].mxu0
  %1813 = vmatprep.mubr.f32.mxu0 0.0
  %1814 = vmatmul.mubr.f32.gmra.mrb[0].mxu0 %v1698
  %v1815 = vpop.f32.mrb[0].mxu0
  %v1816 = vadd.f32 0.0, %v1815
  %v1817 = vpop.f32.mrb[0].mxu0
  %1818 = vmatprep.mubr.f32.mxu0 0.0
  %1819 = vmatmul.mubr.f32.gmra.mrb[0].mxu0 %v1701
  %v1820 = vpop.f32.mrb[0].mxu0
  %v1821 = vadd.f32 0.0, %v1820
  %v1822 = vpop.f32.mrb[0].mxu0
  %1823 = vmatprep.mubr.f32.mxu0 0.0
  %1824 = vmatmul.mubr.f32.gmra.mrb[0].mxu0 %v1704
  %v1825 = vpop.f32.mrb[0].mxu0
  %v1826 = vadd.f32 0.0, %v1825
  %v1827 = vpop.f32.mrb[0].mxu0
  %1828 = vmatprep.mubr.f32.mxu0 0.0
  %1829 = vmatmul.mubr.f32.gmra.mrb[0].mxu0 %v1707
  %v1830 = vpop.f32.mrb[0].mxu0
  %v1831 = vadd.f32 0.0, %v1830
  %v1832 = vpop.f32.mrb[0].mxu0
  %1833 = vdwg.mxu0
  %v1834 = vadd.f32 %v1101, %v1776
  %v1835 = vadd.f32 %v1102, %v1781
  %v1836 = vadd.f32 %v1103, %v1786
  %v1837 = vadd.f32 %v1104, %v1791
  %v1838 = vadd.f32 %v1105, %v1796
  %v1839 = vadd.f32 %v1106, %v1801
  %v1840 = vadd.f32 %v1107, %v1806
  %v1841 = vadd.f32 %v1108, %v1811
  %v1842 = vadd.f32 %v1109, %v1816
  %v1843 = vadd.f32 %v1110, %v1821
  %v1844 = vadd.f32 %v1111, %v1826
  %v1845 = vadd.f32 %v1112, %v1831
  %v1846 = vld [vmem:[%s2 + $0xc1] sm:$0x1]
  %v1847 = vlaneseq
  %v1848 = vshrl.u32 %v1847, 7
  %v1849 = vsub.s32 0, %v1848
  %v1850 = vrot.slane %v1846, %v1849
  %v1851 = vadd.f32 %v1834, %v1850
  %v1852 = vadd.f32 %v1835, %v1850
  %v1853 = vadd.f32 %v1836, %v1850
  %v1854 = vadd.f32 %v1837, %v1850
  %v1855 = vadd.f32 %v1838, %v1850
  %v1856 = vadd.f32 %v1839, %v1850
  %v1857 = vadd.f32 %v1840, %v1850
  %v1858 = vadd.f32 %v1841, %v1850
  %v1859 = vadd.f32 %v1842, %v1850
  %v1860 = vadd.f32 %v1843, %v1850
  %v1861 = vadd.f32 %v1844, %v1850
  %v1862 = vadd.f32 %v1845, %v1850
  %v1863 = vld [vmem:[%s1 + $0x8] sm:$0xff]
  %v1864 = vld [vmem:[%s1 + $0x18] sm:$0xff]
  %v1865 = vld [vmem:[%s1 + $0x28] sm:$0xff]
  %v1866 = vld [vmem:[%s1 + $0x38] sm:$0xff]
  %v1867 = vld [vmem:[%s2 + $0xc2] sm:$0x1]
  %v1868 = vsel %vm31, %v1851, 0.0
  %1869 = vadd.xlane.f32.xlu0 %v1868
  %v1870 = vpop.xlane.xlu0 %1869
  %v1871 = vsel %vm31, %v1852, 0.0
  %1872 = vadd.xlane.f32.xlu0 %v1871
  %v1873 = vpop.xlane.xlu0 %1872
  %v1874 = vsel %vm31, %v1853, 0.0
  %1875 = vadd.xlane.f32.xlu0 %v1874
  %v1876 = vpop.xlane.xlu0 %1875
  %v1877 = vsel %vm31, %v1854, 0.0
  %1878 = vadd.xlane.f32.xlu0 %v1877
  %v1879 = vpop.xlane.xlu0 %1878
  %v1880 = vsel %vm31, %v1855, 0.0
  %1881 = vadd.xlane.f32.xlu0 %v1880
  %v1882 = vpop.xlane.xlu0 %1881
  %v1883 = vsel %vm31, %v1856, 0.0
  %1884 = vadd.xlane.f32.xlu0 %v1883
  %v1885 = vpop.xlane.xlu0 %1884
  %v1886 = vsel %vm31, %v1857, 0.0
  %1887 = vadd.xlane.f32.xlu0 %v1886
  %v1888 = vpop.xlane.xlu0 %1887
  %v1889 = vsel %vm31, %v1858, 0.0
  %1890 = vadd.xlane.f32.xlu0 %v1889
  %v1891 = vpop.xlane.xlu0 %1890
  %v1892 = vsel %vm31, %v1859, 0.0
  %1893 = vadd.xlane.f32.xlu0 %v1892
  %v1894 = vpop.xlane.xlu0 %1893
  %v1895 = vsel %vm31, %v1860, 0.0
  %1896 = vadd.xlane.f32.xlu0 %v1895
  %v1897 = vpop.xlane.xlu0 %1896
  %v1898 = vsel %vm31, %v1861, 0.0
  %1899 = vadd.xlane.f32.xlu0 %v1898
  %v1900 = vpop.xlane.xlu0 %1899
  %v1901 = vsel %vm31, %v1862, 0.0
  %1902 = vadd.xlane.f32.xlu0 %v1901
  %v1903 = vpop.xlane.xlu0 %1902
  %v1904 = vmul.f32 %v1870, %v68
  %v1905 = vmul.f32 %v1873, %v68
  %v1906 = vmul.f32 %v1876, %v68
  %v1907 = vmul.f32 %v1879, %v68
  %v1908 = vmul.f32 %v1882, %v68
  %v1909 = vmul.f32 %v1885, %v68
  %v1910 = vmul.f32 %v1888, %v68
  %v1911 = vmul.f32 %v1891, %v68
  %v1912 = vmul.f32 %v1894, %v68
  %v1913 = vmul.f32 %v1897, %v68
  %v1914 = vmul.f32 %v1900, %v68
  %v1915 = vmul.f32 %v1903, %v68
  %v1916 = vsub.f32 %v1851, %v1904
  %v1917 = vsub.f32 %v1852, %v1905
  %v1918 = vsub.f32 %v1853, %v1906
  %v1919 = vsub.f32 %v1854, %v1907
  %v1920 = vsub.f32 %v1855, %v1908
  %v1921 = vsub.f32 %v1856, %v1909
  %v1922 = vsub.f32 %v1857, %v1910
  %v1923 = vsub.f32 %v1858, %v1911
  %v1924 = vsub.f32 %v1859, %v1912
  %v1925 = vsub.f32 %v1860, %v1913
  %v1926 = vsub.f32 %v1861, %v1914
  %v1927 = vsub.f32 %v1862, %v1915
  %v1928 = vmul.f32 %v1916, %v1916
  %v1929 = vmul.f32 %v1917, %v1917
  %v1930 = vmul.f32 %v1918, %v1918
  %v1931 = vmul.f32 %v1919, %v1919
  %v1932 = vmul.f32 %v1920, %v1920
  %v1933 = vmul.f32 %v1921, %v1921
  %v1934 = vmul.f32 %v1922, %v1922
  %v1935 = vmul.f32 %v1923, %v1923
  %v1936 = vmul.f32 %v1924, %v1924
  %v1937 = vmul.f32 %v1925, %v1925
  %v1938 = vmul.f32 %v1926, %v1926
  %v1939 = vmul.f32 %v1927, %v1927
  %v1940 = vsel %vm31, %v1928, 0.0
  %1941 = vadd.xlane.f32.xlu0 %v1940
  %v1942 = vpop.xlane.xlu0 %1941
  %v1943 = vsel %vm31, %v1929, 0.0
  %1944 = vadd.xlane.f32.xlu0 %v1943
  %v1945 = vpop.xlane.xlu0 %1944
  %v1946 = vsel %vm31, %v1930, 0.0
  %1947 = vadd.xlane.f32.xlu0 %v1946
  %v1948 = vpop.xlane.xlu0 %1947
  %v1949 = vsel %vm31, %v1931, 0.0
  %1950 = vadd.xlane.f32.xlu0 %v1949
  %v1951 = vpop.xlane.xlu0 %1950
  %v1952 = vsel %vm31, %v1932, 0.0
  %1953 = vadd.xlane.f32.xlu0 %v1952
  %v1954 = vpop.xlane.xlu0 %1953
  %v1955 = vsel %vm31, %v1933, 0.0
  %1956 = vadd.xlane.f32.xlu0 %v1955
  %v1957 = vpop.xlane.xlu0 %1956
  %v1958 = vsel %vm31, %v1934, 0.0
  %1959 = vadd.xlane.f32.xlu0 %v1958
  %v1960 = vpop.xlane.xlu0 %1959
  %v1961 = vsel %vm31, %v1935, 0.0
  %1962 = vadd.xlane.f32.xlu0 %v1961
  %v1963 = vpop.xlane.xlu0 %1962
  %v1964 = vsel %vm31, %v1936, 0.0
  %1965 = vadd.xlane.f32.xlu0 %v1964
  %v1966 = vpop.xlane.xlu0 %1965
  %v1967 = vsel %vm31, %v1937, 0.0
  %1968 = vadd.xlane.f32.xlu0 %v1967
  %v1969 = vpop.xlane.xlu0 %1968
  %v1970 = vsel %vm31, %v1938, 0.0
  %1971 = vadd.xlane.f32.xlu0 %v1970
  %v1972 = vpop.xlane.xlu0 %1971
  %v1973 = vsel %vm31, %v1939, 0.0
  %1974 = vadd.xlane.f32.xlu0 %v1973
  %v1975 = vpop.xlane.xlu0 %1974
  %v1976 = vmul.f32 %v1942, %v68
  %v1977 = vmul.f32 %v1945, %v68
  %v1978 = vmul.f32 %v1948, %v68
  %v1979 = vmul.f32 %v1951, %v68
  %v1980 = vmul.f32 %v1954, %v68
  %v1981 = vmul.f32 %v1957, %v68
  %v1982 = vmul.f32 %v1960, %v68
  %v1983 = vmul.f32 %v1963, %v68
  %v1984 = vmul.f32 %v1966, %v68
  %v1985 = vmul.f32 %v1969, %v68
  %v1986 = vmul.f32 %v1972, %v68
  %v1987 = vmul.f32 %v1975, %v68
  %v1988 = vadd.f32 %v1976, 1e-05
  %v1989 = vadd.f32 %v1977, 1e-05
  %v1990 = vadd.f32 %v1978, 1e-05
  %v1991 = vadd.f32 %v1979, 1e-05
  %v1992 = vadd.f32 %v1980, 1e-05
  %v1993 = vadd.f32 %v1981, 1e-05
  %v1994 = vadd.f32 %v1982, 1e-05
  %v1995 = vadd.f32 %v1983, 1e-05
  %v1996 = vadd.f32 %v1984, 1e-05
  %v1997 = vadd.f32 %v1985, 1e-05
  %v1998 = vadd.f32 %v1986, 1e-05
  %v1999 = vadd.f32 %v1987, 1e-05
  %v2000 = vrsqrt.pop %v1988
  %v2001 = vrsqrt.pop %v1989
  %v2002 = vrsqrt.pop %v1990
  %v2003 = vrsqrt.pop %v1991
  %v2004 = vrsqrt.pop %v1992
  %v2005 = vrsqrt.pop %v1993
  %v2006 = vrsqrt.pop %v1994
  %v2007 = vrsqrt.pop %v1995
  %v2008 = vrsqrt.pop %v1996
  %v2009 = vrsqrt.pop %v1997
  %v2010 = vrsqrt.pop %v1998
  %v2011 = vrsqrt.pop %v1999
  %v2012 = vmul.f32 %v1916, %v2000
  %v2013 = vmul.f32 %v1917, %v2001
  %v2014 = vmul.f32 %v1918, %v2002
  %v2015 = vmul.f32 %v1919, %v2003
  %v2016 = vmul.f32 %v1920, %v2004
  %v2017 = vmul.f32 %v1921, %v2005
  %v2018 = vmul.f32 %v1922, %v2006
  %v2019 = vmul.f32 %v1923, %v2007
  %v2020 = vmul.f32 %v1924, %v2008
  %v2021 = vmul.f32 %v1925, %v2009
  %v2022 = vmul.f32 %v1926, %v2010
  %v2023 = vmul.f32 %v1927, %v2011
  %v2024 = vlaneseq
  %v2025 = vshrl.u32 %v2024, 7
  %v2026 = vsub.s32 0, %v2025
  %v2027 = vrot.slane %v1867, %v2026
  %v2029 = vsel %vm31, %v2012, 0
  %v2032 = vsel %vm31, %v2013, 0
  %v2035 = vsel %vm31, %v2014, 0
  %v2038 = vsel %vm31, %v2015, 0
  %v2041 = vsel %vm31, %v2016, 0
  %v2044 = vsel %vm31, %v2017, 0
  %v2047 = vsel %vm31, %v2018, 0
  %v2050 = vsel %vm31, %v2019, 0
  %v2053 = vsel %vm31, %v2020, 0
  %v2056 = vsel %vm31, %v2021, 0
  %v2059 = vsel %vm31, %v2022, 0
  %v2062 = vsel %vm31, %v2023, 0
  %2064 = vmatprep.subr.mxu0 0.0
  %2065 = vmatpush1.msra.mxu0 %v1863
  %2066 = vmatprep.subr.mxu0 0.0
  %2067 = vmatpush1.msra.mxu0 %v1864
  %2068 = vmatprep.subr.mxu0 0.0
  %2069 = vmatpush1.msra.mxu0 %v1865
  %2070 = vmatprep.subr.mxu0 0.0
  %2071 = vmatpush1.msra.mxu0 %v1866
  %2072 = vmatprep.subr.mxu0 0.0
  %2073 = vmatpush1.msra.mxu0 0.0
  %2074 = vmatprep.subr.mxu0 0.0
  %2075 = vmatpush1.msra.mxu0 0.0
  %2076 = vmatprep.subr.mxu0 0.0
  %2077 = vmatpush1.msra.mxu0 0.0
  %2078 = vmatprep.subr.mxu0 0.0
  %2079 = vmatpush1.msra.mxu0 0.0
  %2080 = vmatprep.subr.mxu0 0.0
  %2081 = vmatpush1.msra.mxu0 0.0
  %2082 = vmatprep.subr.mxu0 0.0
  %2083 = vmatpush1.msra.mxu0 0.0
  %2084 = vmatprep.subr.mxu0 0.0
  %2085 = vmatpush1.msra.mxu0 0.0
  %2086 = vmatprep.subr.mxu0 0.0
  %2087 = vmatpush1.msra.mxu0 0.0
  %2088 = vmatprep.subr.mxu0 0.0
  %2089 = vmatpush1.msra.mxu0 0.0
  %2090 = vmatprep.subr.mxu0 0.0
  %2091 = vmatpush1.msra.mxu0 0.0
  %2092 = vmatprep.subr.mxu0 0.0
  %2093 = vmatpush1.msra.mxu0 0.0
  %2094 = vmatprep.subr.mxu0 0.0
  %2095 = vmatpush1.msra.mxu0 0.0
  %2096 = vmatprep.subr.mxu0 0.0
  %2097 = vmatpush1.msra.mxu0 0.0
  %2098 = vmatprep.subr.mxu0 0.0
  %2099 = vmatpush1.msra.mxu0 0.0
  %2100 = vmatprep.subr.mxu0 0.0
  %2101 = vmatpush1.msra.mxu0 0.0
  %2102 = vmatprep.subr.mxu0 0.0
  %2103 = vmatpush1.msra.mxu0 0.0
  %2104 = vmatprep.subr.mxu0 0.0
  %2105 = vmatpush1.msra.mxu0 0.0
  %2106 = vmatprep.subr.mxu0 0.0
  %2107 = vmatpush1.msra.mxu0 0.0
  %2108 = vmatprep.subr.mxu0 0.0
  %2109 = vmatpush1.msra.mxu0 0.0
  %2110 = vmatprep.subr.mxu0 0.0
  %2111 = vmatpush1.msra.mxu0 0.0
  %2112 = vmatprep.subr.mxu0 0.0
  %2113 = vmatpush1.msra.mxu0 0.0
  %2114 = vmatprep.subr.mxu0 0.0
  %2115 = vmatpush1.msra.mxu0 0.0
  %2116 = vmatprep.subr.mxu0 0.0
  %2117 = vmatpush1.msra.mxu0 0.0
  %2118 = vmatprep.subr.mxu0 0.0
  %2119 = vmatpush1.msra.mxu0 0.0
  %2120 = vmatprep.subr.mxu0 0.0
  %2121 = vmatpush1.msra.mxu0 0.0
  %2122 = vmatprep.subr.mxu0 0.0
  %2123 = vmatpush1.msra.mxu0 0.0
  %2124 = vmatprep.subr.mxu0 0.0
  %2125 = vmatpush1.msra.mxu0 0.0
  %2126 = vmatprep.subr.mxu0 0.0
  %2127 = vmatpush1.msra.mxu0 0.0
  %2128 = vmatprep.mubr.f32.mxu0 0.0
  %2129 = vmatmul.mubr.f32.gmra.mrb[0].mxu0 %v2029
  %v2130 = vpop.f32.mrb[0].mxu0
  %v2131 = vadd.f32 %v2027, %v2130
  %v2132 = vpop.f32.mrb[0].mxu0
  %2133 = vmatprep.mubr.f32.mxu0 0.0
  %2134 = vmatmul.mubr.f32.gmra.mrb[0].mxu0 %v2032
  %v2135 = vpop.f32.mrb[0].mxu0
  %v2136 = vadd.f32 %v2027, %v2135
  %v2137 = vpop.f32.mrb[0].mxu0
  %2138 = vmatprep.mubr.f32.mxu0 0.0
  %2139 = vmatmul.mubr.f32.gmra.mrb[0].mxu0 %v2035
  %v2140 = vpop.f32.mrb[0].mxu0
  %v2141 = vadd.f32 %v2027, %v2140
  %v2142 = vpop.f32.mrb[0].mxu0
  %2143 = vmatprep.mubr.f32.mxu0 0.0
  %2144 = vmatmul.mubr.f32.gmra.mrb[0].mxu0 %v2038
  %v2145 = vpop.f32.mrb[0].mxu0
  %v2146 = vadd.f32 %v2027, %v2145
  %v2147 = vpop.f32.mrb[0].mxu0
  %2148 = vmatprep.mubr.f32.mxu0 0.0
  %2149 = vmatmul.mubr.f32.gmra.mrb[0].mxu0 %v2041
  %v2150 = vpop.f32.mrb[0].mxu0
  %v2151 = vadd.f32 %v2027, %v2150
  %v2152 = vpop.f32.mrb[0].mxu0
  %2153 = vmatprep.mubr.f32.mxu0 0.0
  %2154 = vmatmul.mubr.f32.gmra.mrb[0].mxu0 %v2044
  %v2155 = vpop.f32.mrb[0].mxu0
  %v2156 = vadd.f32 %v2027, %v2155
  %v2157 = vpop.f32.mrb[0].mxu0
  %2158 = vmatprep.mubr.f32.mxu0 0.0
  %2159 = vmatmul.mubr.f32.gmra.mrb[0].mxu0 %v2047
  %v2160 = vpop.f32.mrb[0].mxu0
  %v2161 = vadd.f32 %v2027, %v2160
  %v2162 = vpop.f32.mrb[0].mxu0
  %2163 = vmatprep.mubr.f32.mxu0 0.0
  %2164 = vmatmul.mubr.f32.gmra.mrb[0].mxu0 %v2050
  %v2165 = vpop.f32.mrb[0].mxu0
  %v2166 = vadd.f32 %v2027, %v2165
  %v2167 = vpop.f32.mrb[0].mxu0
  %2168 = vmatprep.mubr.f32.mxu0 0.0
  %2169 = vmatmul.mubr.f32.gmra.mrb[0].mxu0 %v2053
  %v2170 = vpop.f32.mrb[0].mxu0
  %v2171 = vadd.f32 %v2027, %v2170
  %v2172 = vpop.f32.mrb[0].mxu0
  %2173 = vmatprep.mubr.f32.mxu0 0.0
  %2174 = vmatmul.mubr.f32.gmra.mrb[0].mxu0 %v2056
  %v2175 = vpop.f32.mrb[0].mxu0
  %v2176 = vadd.f32 %v2027, %v2175
  %v2177 = vpop.f32.mrb[0].mxu0
  %2178 = vmatprep.mubr.f32.mxu0 0.0
  %2179 = vmatmul.mubr.f32.gmra.mrb[0].mxu0 %v2059
  %v2180 = vpop.f32.mrb[0].mxu0
  %v2181 = vadd.f32 %v2027, %v2180
  %v2182 = vpop.f32.mrb[0].mxu0
  %2183 = vmatprep.mubr.f32.mxu0 0.0
  %2184 = vmatmul.mubr.f32.gmra.mrb[0].mxu0 %v2062
  %v2185 = vpop.f32.mrb[0].mxu0
  %v2186 = vadd.f32 %v2027, %v2185
  %v2187 = vpop.f32.mrb[0].mxu0
  %2188 = vdwg.mxu0
  %v2189 = vmul.f32 %v2131, %v2131
  %v2190 = vmul.f32 %v2136, %v2136
  %v2191 = vmul.f32 %v2141, %v2141
  %v2192 = vmul.f32 %v2146, %v2146
  %v2193 = vmul.f32 %v2151, %v2151
  %v2194 = vmul.f32 %v2156, %v2156
  %v2195 = vmul.f32 %v2161, %v2161
  %v2196 = vmul.f32 %v2166, %v2166
  %v2197 = vmul.f32 %v2171, %v2171
  %v2198 = vmul.f32 %v2176, %v2176
  %v2199 = vmul.f32 %v2181, %v2181
  %v2200 = vmul.f32 %v2186, %v2186
  %v2201 = vmul.f32 %v2131, %v2189
  %v2202 = vmul.f32 %v2136, %v2190
  %v2203 = vmul.f32 %v2141, %v2191
  %v2204 = vmul.f32 %v2146, %v2192
  %v2205 = vmul.f32 %v2151, %v2193
  %v2206 = vmul.f32 %v2156, %v2194
  %v2207 = vmul.f32 %v2161, %v2195
  %v2208 = vmul.f32 %v2166, %v2196
  %v2209 = vmul.f32 %v2171, %v2197
  %v2210 = vmul.f32 %v2176, %v2198
  %v2211 = vmul.f32 %v2181, %v2199
  %v2212 = vmul.f32 %v2186, %v2200
  %v2213 = vmul.f32 %v2201, 0.044715
  %v2214 = vmul.f32 %v2202, 0.044715
  %v2215 = vmul.f32 %v2203, 0.044715
  %v2216 = vmul.f32 %v2204, 0.044715
  %v2217 = vmul.f32 %v2205, 0.044715
  %v2218 = vmul.f32 %v2206, 0.044715
  %v2219 = vmul.f32 %v2207, 0.044715
  %v2220 = vmul.f32 %v2208, 0.044715
  %v2221 = vmul.f32 %v2209, 0.044715
  %v2222 = vmul.f32 %v2210, 0.044715
  %v2223 = vmul.f32 %v2211, 0.044715
  %v2224 = vmul.f32 %v2212, 0.044715
  %v2225 = vadd.f32 %v2131, %v2213
  %v2226 = vadd.f32 %v2136, %v2214
  %v2227 = vadd.f32 %v2141, %v2215
  %v2228 = vadd.f32 %v2146, %v2216
  %v2229 = vadd.f32 %v2151, %v2217
  %v2230 = vadd.f32 %v2156, %v2218
  %v2231 = vadd.f32 %v2161, %v2219
  %v2232 = vadd.f32 %v2166, %v2220
  %v2233 = vadd.f32 %v2171, %v2221
  %v2234 = vadd.f32 %v2176, %v2222
  %v2235 = vadd.f32 %v2181, %v2223
  %v2236 = vadd.f32 %v2186, %v2224
  %v2237 = vmul.f32 %v2225, 0.7978846
  %v2238 = vmul.f32 %v2226, 0.7978846
  %v2239 = vmul.f32 %v2227, 0.7978846
  %v2240 = vmul.f32 %v2228, 0.7978846
  %v2241 = vmul.f32 %v2229, 0.7978846
  %v2242 = vmul.f32 %v2230, 0.7978846
  %v2243 = vmul.f32 %v2231, 0.7978846
  %v2244 = vmul.f32 %v2232, 0.7978846
  %v2245 = vmul.f32 %v2233, 0.7978846
  %v2246 = vmul.f32 %v2234, 0.7978846
  %v2247 = vmul.f32 %v2235, 0.7978846
  %v2248 = vmul.f32 %v2236, 0.7978846
  %v2249 = vtanh.pop %v2237
  %v2250 = vtanh.pop %v2238
  %v2251 = vtanh.pop %v2239
  %v2252 = vtanh.pop %v2240
  %v2253 = vtanh.pop %v2241
  %v2254 = vtanh.pop %v2242
  %v2255 = vtanh.pop %v2243
  %v2256 = vtanh.pop %v2244
  %v2257 = vtanh.pop %v2245
  %v2258 = vtanh.pop %v2246
  %v2259 = vtanh.pop %v2247
  %v2260 = vtanh.pop %v2248
  %v2261 = vadd.f32 %v2249, 1.0
  %v2262 = vadd.f32 %v2250, 1.0
  %v2263 = vadd.f32 %v2251, 1.0
  %v2264 = vadd.f32 %v2252, 1.0
  %v2265 = vadd.f32 %v2253, 1.0
  %v2266 = vadd.f32 %v2254, 1.0
  %v2267 = vadd.f32 %v2255, 1.0
  %v2268 = vadd.f32 %v2256, 1.0
  %v2269 = vadd.f32 %v2257, 1.0
  %v2270 = vadd.f32 %v2258, 1.0
  %v2271 = vadd.f32 %v2259, 1.0
  %v2272 = vadd.f32 %v2260, 1.0
  %v2273 = vmul.f32 %v2261, 0.5
  %v2274 = vmul.f32 %v2262, 0.5
  %v2275 = vmul.f32 %v2263, 0.5
  %v2276 = vmul.f32 %v2264, 0.5
  %v2277 = vmul.f32 %v2265, 0.5
  %v2278 = vmul.f32 %v2266, 0.5
  %v2279 = vmul.f32 %v2267, 0.5
  %v2280 = vmul.f32 %v2268, 0.5
  %v2281 = vmul.f32 %v2269, 0.5
  %v2282 = vmul.f32 %v2270, 0.5
  %v2283 = vmul.f32 %v2271, 0.5
  %v2284 = vmul.f32 %v2272, 0.5
  %v2285 = vmul.f32 %v2131, %v2273
  %v2286 = vmul.f32 %v2136, %v2274
  %v2287 = vmul.f32 %v2141, %v2275
  %v2288 = vmul.f32 %v2146, %v2276
  %v2289 = vmul.f32 %v2151, %v2277
  %v2290 = vmul.f32 %v2156, %v2278
  %v2291 = vmul.f32 %v2161, %v2279
  %v2292 = vmul.f32 %v2166, %v2280
  %v2293 = vmul.f32 %v2171, %v2281
  %v2294 = vmul.f32 %v2176, %v2282
  %v2295 = vmul.f32 %v2181, %v2283
  %v2296 = vmul.f32 %v2186, %v2284
  %v2297 = vld [vmem:[%s2 + $0x60] sm:$0xff]
  %v2298 = vld [vmem:[%s2 + $0x68] sm:$0xff]
  %v2299 = vld [vmem:[%s2 + $0x70] sm:$0xff]
  %v2300 = vld [vmem:[%s2 + $0x78] sm:$0xff]
  %v2301 = vld [vmem:[%s2 + $0xc3] sm:$0x1]
  %2302 = vmatprep.subr.mxu0 0.0
  %2303 = vmatpush1.xpose.msra.mxu0 %v2297
  %2304 = vmatprep.subr.mxu0 0.0
  %2305 = vmatpush1.xpose.msra.mxu0 %v2298
  %2306 = vmatprep.subr.mxu0 0.0
  %2307 = vmatpush1.xpose.msra.mxu0 %v2299
  %2308 = vmatprep.subr.mxu0 0.0
  %2309 = vmatpush1.xpose.msra.mxu0 %v2300
  %2310 = vmatprep.subr.mxu0 0.0
  %2311 = vmatpush1.xpose.msra.mxu0 0.0
  %2312 = vmatprep.subr.mxu0 0.0
  %2313 = vmatpush1.xpose.msra.mxu0 0.0
  %2314 = vmatprep.subr.mxu0 0.0
  %2315 = vmatpush1.xpose.msra.mxu0 0.0
  %2316 = vmatprep.subr.mxu0 0.0
  %2317 = vmatpush1.xpose.msra.mxu0 0.0
  %2318 = vmatprep.subr.mxu0 0.0
  %2319 = vmatpush1.xpose.msra.mxu0 0.0
  %2320 = vmatprep.subr.mxu0 0.0
  %2321 = vmatpush1.xpose.msra.mxu0 0.0
  %2322 = vmatprep.subr.mxu0 0.0
  %2323 = vmatpush1.xpose.msra.mxu0 0.0
  %2324 = vmatprep.subr.mxu0 0.0
  %2325 = vmatpush1.xpose.msra.mxu0 0.0
  %2326 = vmatprep.subr.mxu0 0.0
  %2327 = vmatpush1.xpose.msra.mxu0 0.0
  %2328 = vmatprep.subr.mxu0 0.0
  %2329 = vmatpush1.xpose.msra.mxu0 0.0
  %2330 = vmatprep.subr.mxu0 0.0
  %2331 = vmatpush1.xpose.msra.mxu0 0.0
  %2332 = vmatprep.subr.mxu0 0.0
  %2333 = vmatpush1.xpose.msra.mxu0 0.0
  %2334 = vmatprep.subr.mxu0 0.0
  %2335 = vmatpush1.xpose.msra.mxu0 0.0
  %2336 = vmatprep.subr.mxu0 0.0
  %2337 = vmatpush1.xpose.msra.mxu0 0.0
  %2338 = vmatprep.subr.mxu0 0.0
  %2339 = vmatpush1.xpose.msra.mxu0 0.0
  %2340 = vmatprep.subr.mxu0 0.0
  %2341 = vmatpush1.xpose.msra.mxu0 0.0
  %2342 = vmatprep.subr.mxu0 0.0
  %2343 = vmatpush1.xpose.msra.mxu0 0.0
  %2344 = vmatprep.subr.mxu0 0.0
  %2345 = vmatpush1.xpose.msra.mxu0 0.0
  %2346 = vmatprep.subr.mxu0 0.0
  %2347 = vmatpush1.xpose.msra.mxu0 0.0
  %2348 = vmatprep.subr.mxu0 0.0
  %2349 = vmatpush1.xpose.msra.mxu0 0.0
  %2350 = vmatprep.subr.mxu0 0.0
  %2351 = vmatpush1.xpose.msra.mxu0 0.0
  %2352 = vmatprep.subr.mxu0 0.0
  %2353 = vmatpush1.xpose.msra.mxu0 0.0
  %2354 = vmatprep.subr.mxu0 0.0
  %2355 = vmatpush1.xpose.msra.mxu0 0.0
  %2356 = vmatprep.subr.mxu0 0.0
  %2357 = vmatpush1.xpose.msra.mxu0 0.0
  %2358 = vmatprep.subr.mxu0 0.0
  %2359 = vmatpush1.xpose.msra.mxu0 0.0
  %2360 = vmatprep.subr.mxu0 0.0
  %2361 = vmatpush1.xpose.msra.mxu0 0.0
  %2362 = vmatprep.subr.mxu0 0.0
  %2363 = vmatpush1.xpose.msra.mxu0 0.0
  %2364 = vmatprep.subr.mxu0 0.0
  %2365 = vmatpush1.xpose.msra.mxu0 0.0
  %2366 = vmatprep.mubr.f32.mxu0 0.0
  %2367 = vmatmul.mubr.f32.gmra.mrb[0].mxu0 %v2285
  %v2368 = vpop.f32.mrb[0].mxu0
  %v2369 = vadd.f32 0.0, %v2368
  %v2370 = vpop.f32.mrb[0].mxu0
  %2371 = vmatprep.mubr.f32.mxu0 0.0
  %2372 = vmatmul.mubr.f32.gmra.mrb[0].mxu0 %v2286
  %v2373 = vpop.f32.mrb[0].mxu0
  %v2374 = vadd.f32 0.0, %v2373
  %v2375 = vpop.f32.mrb[0].mxu0
  %2376 = vmatprep.mubr.f32.mxu0 0.0
  %2377 = vmatmul.mubr.f32.gmra.mrb[0].mxu0 %v2287
  %v2378 = vpop.f32.mrb[0].mxu0
  %v2379 = vadd.f32 0.0, %v2378
  %v2380 = vpop.f32.mrb[0].mxu0
  %2381 = vmatprep.mubr.f32.mxu0 0.0
  %2382 = vmatmul.mubr.f32.gmra.mrb[0].mxu0 %v2288
  %v2383 = vpop.f32.mrb[0].mxu0
  %v2384 = vadd.f32 0.0, %v2383
  %v2385 = vpop.f32.mrb[0].mxu0
  %2386 = vmatprep.mubr.f32.mxu0 0.0
  %2387 = vmatmul.mubr.f32.gmra.mrb[0].mxu0 %v2289
  %v2388 = vpop.f32.mrb[0].mxu0
  %v2389 = vadd.f32 0.0, %v2388
  %v2390 = vpop.f32.mrb[0].mxu0
  %2391 = vmatprep.mubr.f32.mxu0 0.0
  %2392 = vmatmul.mubr.f32.gmra.mrb[0].mxu0 %v2290
  %v2393 = vpop.f32.mrb[0].mxu0
  %v2394 = vadd.f32 0.0, %v2393
  %v2395 = vpop.f32.mrb[0].mxu0
  %2396 = vmatprep.mubr.f32.mxu0 0.0
  %2397 = vmatmul.mubr.f32.gmra.mrb[0].mxu0 %v2291
  %v2398 = vpop.f32.mrb[0].mxu0
  %v2399 = vadd.f32 0.0, %v2398
  %v2400 = vpop.f32.mrb[0].mxu0
  %2401 = vmatprep.mubr.f32.mxu0 0.0
  %2402 = vmatmul.mubr.f32.gmra.mrb[0].mxu0 %v2292
  %v2403 = vpop.f32.mrb[0].mxu0
  %v2404 = vadd.f32 0.0, %v2403
  %v2405 = vpop.f32.mrb[0].mxu0
  %2406 = vmatprep.mubr.f32.mxu0 0.0
  %2407 = vmatmul.mubr.f32.gmra.mrb[0].mxu0 %v2293
  %v2408 = vpop.f32.mrb[0].mxu0
  %v2409 = vadd.f32 0.0, %v2408
  %v2410 = vpop.f32.mrb[0].mxu0
  %2411 = vmatprep.mubr.f32.mxu0 0.0
  %2412 = vmatmul.mubr.f32.gmra.mrb[0].mxu0 %v2294
  %v2413 = vpop.f32.mrb[0].mxu0
  %v2414 = vadd.f32 0.0, %v2413
  %v2415 = vpop.f32.mrb[0].mxu0
  %2416 = vmatprep.mubr.f32.mxu0 0.0
  %2417 = vmatmul.mubr.f32.gmra.mrb[0].mxu0 %v2295
  %v2418 = vpop.f32.mrb[0].mxu0
  %v2419 = vadd.f32 0.0, %v2418
  %v2420 = vpop.f32.mrb[0].mxu0
  %2421 = vmatprep.mubr.f32.mxu0 0.0
  %2422 = vmatmul.mubr.f32.gmra.mrb[0].mxu0 %v2296
  %v2423 = vpop.f32.mrb[0].mxu0
  %v2424 = vadd.f32 0.0, %v2423
  %v2425 = vpop.f32.mrb[0].mxu0
  %2426 = vdwg.mxu0
  %v2427 = vadd.f32 %v1851, %v2369
  %v2428 = vadd.f32 %v1852, %v2374
  %v2429 = vadd.f32 %v1853, %v2379
  %v2430 = vadd.f32 %v1854, %v2384
  %v2431 = vadd.f32 %v1855, %v2389
  %v2432 = vadd.f32 %v1856, %v2394
  %v2433 = vadd.f32 %v1857, %v2399
  %v2434 = vadd.f32 %v1858, %v2404
  %v2435 = vadd.f32 %v1859, %v2409
  %v2436 = vadd.f32 %v1860, %v2414
  %v2437 = vadd.f32 %v1861, %v2419
  %v2438 = vadd.f32 %v1862, %v2424
  %v2439 = vlaneseq
  %v2440 = vshrl.u32 %v2439, 7
  %v2441 = vsub.s32 0, %v2440
  %v2442 = vrot.slane %v2301, %v2441
  %v2443 = vadd.f32 %v2427, %v2442
  %v2444 = vadd.f32 %v2428, %v2442
  %v2445 = vadd.f32 %v2429, %v2442
  %v2446 = vadd.f32 %v2430, %v2442
  %v2447 = vadd.f32 %v2431, %v2442
  %v2448 = vadd.f32 %v2432, %v2442
  %v2449 = vadd.f32 %v2433, %v2442
  %v2450 = vadd.f32 %v2434, %v2442
  %v2451 = vadd.f32 %v2435, %v2442
  %v2452 = vadd.f32 %v2436, %v2442
  %v2453 = vadd.f32 %v2437, %v2442
  %v2454 = vadd.f32 %v2438, %v2442
  %s2455 = scalar_lea.vmem %s1, 64
  %v2456 = vld [vmem:[%s2455] sm:$0xff]
  %v2457 = vld [vmem:[%s2455 + $0x10] sm:$0xff]
  %v2458 = vld [vmem:[%s2455 + $0x20] sm:$0xff]
  %v2459 = vld [vmem:[%s2455 + $0x30] sm:$0xff]
  %v2460 = vld [vmem:[%s2 + $0xc4] sm:$0x1]
  %v2461 = vsel %vm31, %v2443, 0.0
  %2462 = vadd.xlane.f32.xlu0 %v2461
  %v2463 = vpop.xlane.xlu0 %2462
  %v2464 = vsel %vm31, %v2444, 0.0
  %2465 = vadd.xlane.f32.xlu0 %v2464
  %v2466 = vpop.xlane.xlu0 %2465
  %v2467 = vsel %vm31, %v2445, 0.0
  %2468 = vadd.xlane.f32.xlu0 %v2467
  %v2469 = vpop.xlane.xlu0 %2468
  %v2470 = vsel %vm31, %v2446, 0.0
  %2471 = vadd.xlane.f32.xlu0 %v2470
  %v2472 = vpop.xlane.xlu0 %2471
  %v2473 = vsel %vm31, %v2447, 0.0
  %2474 = vadd.xlane.f32.xlu0 %v2473
  %v2475 = vpop.xlane.xlu0 %2474
  %v2476 = vsel %vm31, %v2448, 0.0
  %2477 = vadd.xlane.f32.xlu0 %v2476
  %v2478 = vpop.xlane.xlu0 %2477
  %v2479 = vsel %vm31, %v2449, 0.0
  %2480 = vadd.xlane.f32.xlu0 %v2479
  %v2481 = vpop.xlane.xlu0 %2480
  %v2482 = vsel %vm31, %v2450, 0.0
  %2483 = vadd.xlane.f32.xlu0 %v2482
  %v2484 = vpop.xlane.xlu0 %2483
  %v2485 = vsel %vm31, %v2451, 0.0
  %2486 = vadd.xlane.f32.xlu0 %v2485
  %v2487 = vpop.xlane.xlu0 %2486
  %v2488 = vsel %vm31, %v2452, 0.0
  %2489 = vadd.xlane.f32.xlu0 %v2488
  %v2490 = vpop.xlane.xlu0 %2489
  %v2491 = vsel %vm31, %v2453, 0.0
  %2492 = vadd.xlane.f32.xlu0 %v2491
  %v2493 = vpop.xlane.xlu0 %2492
  %v2494 = vsel %vm31, %v2454, 0.0
  %2495 = vadd.xlane.f32.xlu0 %v2494
  %v2496 = vpop.xlane.xlu0 %2495
  %v2497 = vmul.f32 %v2463, %v68
  %v2498 = vmul.f32 %v2466, %v68
  %v2499 = vmul.f32 %v2469, %v68
  %v2500 = vmul.f32 %v2472, %v68
  %v2501 = vmul.f32 %v2475, %v68
  %v2502 = vmul.f32 %v2478, %v68
  %v2503 = vmul.f32 %v2481, %v68
  %v2504 = vmul.f32 %v2484, %v68
  %v2505 = vmul.f32 %v2487, %v68
  %v2506 = vmul.f32 %v2490, %v68
  %v2507 = vmul.f32 %v2493, %v68
  %v2508 = vmul.f32 %v2496, %v68
  %v2509 = vsub.f32 %v2443, %v2497
  %v2510 = vsub.f32 %v2444, %v2498
  %v2511 = vsub.f32 %v2445, %v2499
  %v2512 = vsub.f32 %v2446, %v2500
  %v2513 = vsub.f32 %v2447, %v2501
  %v2514 = vsub.f32 %v2448, %v2502
  %v2515 = vsub.f32 %v2449, %v2503
  %v2516 = vsub.f32 %v2450, %v2504
  %v2517 = vsub.f32 %v2451, %v2505
  %v2518 = vsub.f32 %v2452, %v2506
  %v2519 = vsub.f32 %v2453, %v2507
  %v2520 = vsub.f32 %v2454, %v2508
  %v2521 = vmul.f32 %v2509, %v2509
  %v2522 = vmul.f32 %v2510, %v2510
  %v2523 = vmul.f32 %v2511, %v2511
  %v2524 = vmul.f32 %v2512, %v2512
  %v2525 = vmul.f32 %v2513, %v2513
  %v2526 = vmul.f32 %v2514, %v2514
  %v2527 = vmul.f32 %v2515, %v2515
  %v2528 = vmul.f32 %v2516, %v2516
  %v2529 = vmul.f32 %v2517, %v2517
  %v2530 = vmul.f32 %v2518, %v2518
  %v2531 = vmul.f32 %v2519, %v2519
  %v2532 = vmul.f32 %v2520, %v2520
  %v2533 = vsel %vm31, %v2521, 0.0
  %2534 = vadd.xlane.f32.xlu0 %v2533
  %v2535 = vpop.xlane.xlu0 %2534
  %v2536 = vsel %vm31, %v2522, 0.0
  %2537 = vadd.xlane.f32.xlu0 %v2536
  %v2538 = vpop.xlane.xlu0 %2537
  %v2539 = vsel %vm31, %v2523, 0.0
  %2540 = vadd.xlane.f32.xlu0 %v2539
  %v2541 = vpop.xlane.xlu0 %2540
  %v2542 = vsel %vm31, %v2524, 0.0
  %2543 = vadd.xlane.f32.xlu0 %v2542
  %v2544 = vpop.xlane.xlu0 %2543
  %v2545 = vsel %vm31, %v2525, 0.0
  %2546 = vadd.xlane.f32.xlu0 %v2545
  %v2547 = vpop.xlane.xlu0 %2546
  %v2548 = vsel %vm31, %v2526, 0.0
  %2549 = vadd.xlane.f32.xlu0 %v2548
  %v2550 = vpop.xlane.xlu0 %2549
  %v2551 = vsel %vm31, %v2527, 0.0
  %2552 = vadd.xlane.f32.xlu0 %v2551
  %v2553 = vpop.xlane.xlu0 %2552
  %v2554 = vsel %vm31, %v2528, 0.0
  %2555 = vadd.xlane.f32.xlu0 %v2554
  %v2556 = vpop.xlane.xlu0 %2555
  %v2557 = vsel %vm31, %v2529, 0.0
  %2558 = vadd.xlane.f32.xlu0 %v2557
  %v2559 = vpop.xlane.xlu0 %2558
  %v2560 = vsel %vm31, %v2530, 0.0
  %2561 = vadd.xlane.f32.xlu0 %v2560
  %v2562 = vpop.xlane.xlu0 %2561
  %v2563 = vsel %vm31, %v2531, 0.0
  %2564 = vadd.xlane.f32.xlu0 %v2563
  %v2565 = vpop.xlane.xlu0 %2564
  %v2566 = vsel %vm31, %v2532, 0.0
  %2567 = vadd.xlane.f32.xlu0 %v2566
  %v2568 = vpop.xlane.xlu0 %2567
  %v2569 = vmul.f32 %v2535, %v68
  %v2570 = vmul.f32 %v2538, %v68
  %v2571 = vmul.f32 %v2541, %v68
  %v2572 = vmul.f32 %v2544, %v68
  %v2573 = vmul.f32 %v2547, %v68
  %v2574 = vmul.f32 %v2550, %v68
  %v2575 = vmul.f32 %v2553, %v68
  %v2576 = vmul.f32 %v2556, %v68
  %v2577 = vmul.f32 %v2559, %v68
  %v2578 = vmul.f32 %v2562, %v68
  %v2579 = vmul.f32 %v2565, %v68
  %v2580 = vmul.f32 %v2568, %v68
  %v2581 = vadd.f32 %v2569, 1e-05
  %v2582 = vadd.f32 %v2570, 1e-05
  %v2583 = vadd.f32 %v2571, 1e-05
  %v2584 = vadd.f32 %v2572, 1e-05
  %v2585 = vadd.f32 %v2573, 1e-05
  %v2586 = vadd.f32 %v2574, 1e-05
  %v2587 = vadd.f32 %v2575, 1e-05
  %v2588 = vadd.f32 %v2576, 1e-05
  %v2589 = vadd.f32 %v2577, 1e-05
  %v2590 = vadd.f32 %v2578, 1e-05
  %v2591 = vadd.f32 %v2579, 1e-05
  %v2592 = vadd.f32 %v2580, 1e-05
  %v2593 = vrsqrt.pop %v2581
  %v2594 = vrsqrt.pop %v2582
  %v2595 = vrsqrt.pop %v2583
  %v2596 = vrsqrt.pop %v2584
  %v2597 = vrsqrt.pop %v2585
  %v2598 = vrsqrt.pop %v2586
  %v2599 = vrsqrt.pop %v2587
  %v2600 = vrsqrt.pop %v2588
  %v2601 = vrsqrt.pop %v2589
  %v2602 = vrsqrt.pop %v2590
  %v2603 = vrsqrt.pop %v2591
  %v2604 = vrsqrt.pop %v2592
  %v2605 = vmul.f32 %v2509, %v2593
  %v2606 = vmul.f32 %v2510, %v2594
  %v2607 = vmul.f32 %v2511, %v2595
  %v2608 = vmul.f32 %v2512, %v2596
  %v2609 = vmul.f32 %v2513, %v2597
  %v2610 = vmul.f32 %v2514, %v2598
  %v2611 = vmul.f32 %v2515, %v2599
  %v2612 = vmul.f32 %v2516, %v2600
  %v2613 = vmul.f32 %v2517, %v2601
  %v2614 = vmul.f32 %v2518, %v2602
  %v2615 = vmul.f32 %v2519, %v2603
  %v2616 = vmul.f32 %v2520, %v2604
  %v2617 = vlaneseq
  %v2618 = vshrl.u32 %v2617, 7
  %v2619 = vsub.s32 0, %v2618
  %v2620 = vrot.slane %v2460, %v2619
  %v2622 = vsel %vm31, %v2605, 0
  %v2625 = vsel %vm31, %v2606, 0
  %v2628 = vsel %vm31, %v2607, 0
  %v2631 = vsel %vm31, %v2608, 0
  %v2634 = vsel %vm31, %v2609, 0
  %v2637 = vsel %vm31, %v2610, 0
  %v2640 = vsel %vm31, %v2611, 0
  %v2643 = vsel %vm31, %v2612, 0
  %v2646 = vsel %vm31, %v2613, 0
  %v2649 = vsel %vm31, %v2614, 0
  %v2652 = vsel %vm31, %v2615, 0
  %v2655 = vsel %vm31, %v2616, 0
  %2657 = vmatprep.subr.mxu0 0.0
  %2658 = vmatpush1.msra.mxu0 %v2456
  %2659 = vmatprep.subr.mxu0 0.0
  %2660 = vmatpush1.msra.mxu0 %v2457
  %2661 = vmatprep.subr.mxu0 0.0
  %2662 = vmatpush1.msra.mxu0 %v2458
  %2663 = vmatprep.subr.mxu0 0.0
  %2664 = vmatpush1.msra.mxu0 %v2459
  %2665 = vmatprep.subr.mxu0 0.0
  %2666 = vmatpush1.msra.mxu0 0.0
  %2667 = vmatprep.subr.mxu0 0.0
  %2668 = vmatpush1.msra.mxu0 0.0
  %2669 = vmatprep.subr.mxu0 0.0
  %2670 = vmatpush1.msra.mxu0 0.0
  %2671 = vmatprep.subr.mxu0 0.0
  %2672 = vmatpush1.msra.mxu0 0.0
  %2673 = vmatprep.subr.mxu0 0.0
  %2674 = vmatpush1.msra.mxu0 0.0
  %2675 = vmatprep.subr.mxu0 0.0
  %2676 = vmatpush1.msra.mxu0 0.0
  %2677 = vmatprep.subr.mxu0 0.0
  %2678 = vmatpush1.msra.mxu0 0.0
  %2679 = vmatprep.subr.mxu0 0.0
  %2680 = vmatpush1.msra.mxu0 0.0
  %2681 = vmatprep.subr.mxu0 0.0
  %2682 = vmatpush1.msra.mxu0 0.0
  %2683 = vmatprep.subr.mxu0 0.0
  %2684 = vmatpush1.msra.mxu0 0.0
  %2685 = vmatprep.subr.mxu0 0.0
  %2686 = vmatpush1.msra.mxu0 0.0
  %2687 = vmatprep.subr.mxu0 0.0
  %2688 = vmatpush1.msra.mxu0 0.0
  %2689 = vmatprep.subr.mxu0 0.0
  %2690 = vmatpush1.msra.mxu0 0.0
  %2691 = vmatprep.subr.mxu0 0.0
  %2692 = vmatpush1.msra.mxu0 0.0
  %2693 = vmatprep.subr.mxu0 0.0
  %2694 = vmatpush1.msra.mxu0 0.0
  %2695 = vmatprep.subr.mxu0 0.0
  %2696 = vmatpush1.msra.mxu0 0.0
  %2697 = vmatprep.subr.mxu0 0.0
  %2698 = vmatpush1.msra.mxu0 0.0
  %2699 = vmatprep.subr.mxu0 0.0
  %2700 = vmatpush1.msra.mxu0 0.0
  %2701 = vmatprep.subr.mxu0 0.0
  %2702 = vmatpush1.msra.mxu0 0.0
  %2703 = vmatprep.subr.mxu0 0.0
  %2704 = vmatpush1.msra.mxu0 0.0
  %2705 = vmatprep.subr.mxu0 0.0
  %2706 = vmatpush1.msra.mxu0 0.0
  %2707 = vmatprep.subr.mxu0 0.0
  %2708 = vmatpush1.msra.mxu0 0.0
  %2709 = vmatprep.subr.mxu0 0.0
  %2710 = vmatpush1.msra.mxu0 0.0
  %2711 = vmatprep.subr.mxu0 0.0
  %2712 = vmatpush1.msra.mxu0 0.0
  %2713 = vmatprep.subr.mxu0 0.0
  %2714 = vmatpush1.msra.mxu0 0.0
  %2715 = vmatprep.subr.mxu0 0.0
  %2716 = vmatpush1.msra.mxu0 0.0
  %2717 = vmatprep.subr.mxu0 0.0
  %2718 = vmatpush1.msra.mxu0 0.0
  %2719 = vmatprep.subr.mxu0 0.0
  %2720 = vmatpush1.msra.mxu0 0.0
  %2721 = vmatprep.mubr.f32.mxu0 0.0
  %2722 = vmatmul.mubr.f32.gmra.mrb[0].mxu0 %v2622
  %v2723 = vpop.f32.mrb[0].mxu0
  %v2724 = vadd.f32 %v2620, %v2723
  %v2725 = vpop.f32.mrb[0].mxu0
  %2726 = vmatprep.mubr.f32.mxu0 0.0
  %2727 = vmatmul.mubr.f32.gmra.mrb[0].mxu0 %v2625
  %v2728 = vpop.f32.mrb[0].mxu0
  %v2729 = vadd.f32 %v2620, %v2728
  %v2730 = vpop.f32.mrb[0].mxu0
  %2731 = vmatprep.mubr.f32.mxu0 0.0
  %2732 = vmatmul.mubr.f32.gmra.mrb[0].mxu0 %v2628
  %v2733 = vpop.f32.mrb[0].mxu0
  %v2734 = vadd.f32 %v2620, %v2733
  %v2735 = vpop.f32.mrb[0].mxu0
  %2736 = vmatprep.mubr.f32.mxu0 0.0
  %2737 = vmatmul.mubr.f32.gmra.mrb[0].mxu0 %v2631
  %v2738 = vpop.f32.mrb[0].mxu0
  %v2739 = vadd.f32 %v2620, %v2738
  %v2740 = vpop.f32.mrb[0].mxu0
  %2741 = vmatprep.mubr.f32.mxu0 0.0
  %2742 = vmatmul.mubr.f32.gmra.mrb[0].mxu0 %v2634
  %v2743 = vpop.f32.mrb[0].mxu0
  %v2744 = vadd.f32 %v2620, %v2743
  %v2745 = vpop.f32.mrb[0].mxu0
  %2746 = vmatprep.mubr.f32.mxu0 0.0
  %2747 = vmatmul.mubr.f32.gmra.mrb[0].mxu0 %v2637
  %v2748 = vpop.f32.mrb[0].mxu0
  %v2749 = vadd.f32 %v2620, %v2748
  %v2750 = vpop.f32.mrb[0].mxu0
  %2751 = vmatprep.mubr.f32.mxu0 0.0
  %2752 = vmatmul.mubr.f32.gmra.mrb[0].mxu0 %v2640
  %v2753 = vpop.f32.mrb[0].mxu0
  %v2754 = vadd.f32 %v2620, %v2753
  %v2755 = vpop.f32.mrb[0].mxu0
  %2756 = vmatprep.mubr.f32.mxu0 0.0
  %2757 = vmatmul.mubr.f32.gmra.mrb[0].mxu0 %v2643
  %v2758 = vpop.f32.mrb[0].mxu0
  %v2759 = vadd.f32 %v2620, %v2758
  %v2760 = vpop.f32.mrb[0].mxu0
  %2761 = vmatprep.mubr.f32.mxu0 0.0
  %2762 = vmatmul.mubr.f32.gmra.mrb[0].mxu0 %v2646
  %v2763 = vpop.f32.mrb[0].mxu0
  %v2764 = vadd.f32 %v2620, %v2763
  %v2765 = vpop.f32.mrb[0].mxu0
  %2766 = vmatprep.mubr.f32.mxu0 0.0
  %2767 = vmatmul.mubr.f32.gmra.mrb[0].mxu0 %v2649
  %v2768 = vpop.f32.mrb[0].mxu0
  %v2769 = vadd.f32 %v2620, %v2768
  %v2770 = vpop.f32.mrb[0].mxu0
  %2771 = vmatprep.mubr.f32.mxu0 0.0
  %2772 = vmatmul.mubr.f32.gmra.mrb[0].mxu0 %v2652
  %v2773 = vpop.f32.mrb[0].mxu0
  %v2774 = vadd.f32 %v2620, %v2773
  %v2775 = vpop.f32.mrb[0].mxu0
  %2776 = vmatprep.mubr.f32.mxu0 0.0
  %2777 = vmatmul.mubr.f32.gmra.mrb[0].mxu0 %v2655
  %v2778 = vpop.f32.mrb[0].mxu0
  %v2779 = vadd.f32 %v2620, %v2778
  %v2780 = vpop.f32.mrb[0].mxu0
  %2781 = vdwg.mxu0
  %2782 = vst.msk [vmem:[#allocation2] sm:$0xff] %vm354, %v2724
  %2783 = vst.msk [vmem:[#allocation2 + $0x8] sm:$0xff] %vm354, %v2729
  %2784 = vst.msk [vmem:[#allocation2 + $0x10] sm:$0xff] %vm354, %v2734
  %2785 = vst.msk [vmem:[#allocation2 + $0x18] sm:$0xff] %vm354, %v2739
  %2786 = vst.msk [vmem:[#allocation2 + $0x20] sm:$0xff] %vm354, %v2744
  %2787 = vst.msk [vmem:[#allocation2 + $0x28] sm:$0xff] %vm354, %v2749
  %2788 = vst.msk [vmem:[#allocation2 + $0x30] sm:$0xff] %vm354, %v2754
  %2789 = vst.msk [vmem:[#allocation2 + $0x38] sm:$0xff] %vm354, %v2759
  %2790 = vst.msk [vmem:[#allocation2 + $0x40] sm:$0xff] %vm354, %v2764
  %2791 = vst.msk [vmem:[#allocation2 + $0x48] sm:$0xff] %vm354, %v2769
  %2792 = vst.msk [vmem:[#allocation2 + $0x50] sm:$0xff] %vm354, %v2774
  %2793 = vst.msk [vmem:[#allocation2 + $0x58] sm:$0xff] %vm354, %v2779
  %v2794 = vld [vmem:[#allocation2] sm:$0xff]
  %v2795 = vld [vmem:[#allocation2 + $0x8] sm:$0xff]
  %v2796 = vld [vmem:[#allocation2 + $0x10] sm:$0xff]
  %v2797 = vld [vmem:[#allocation2 + $0x18] sm:$0xff]
  %v2798 = vld [vmem:[#allocation2 + $0x20] sm:$0xff]
  %v2799 = vld [vmem:[#allocation2 + $0x28] sm:$0xff]
  %v2800 = vld [vmem:[#allocation2 + $0x30] sm:$0xff]
  %v2801 = vld [vmem:[#allocation2 + $0x38] sm:$0xff]
  %v2802 = vld [vmem:[#allocation2 + $0x40] sm:$0xff]
  %v2803 = vld [vmem:[#allocation2 + $0x48] sm:$0xff]
  %v2804 = vld [vmem:[#allocation2 + $0x50] sm:$0xff]
  %v2805 = vld [vmem:[#allocation2 + $0x58] sm:$0xff]
  %v2806 = vld [vmem:[%s2] sm:$0xff]
  %v2807 = vld [vmem:[%s2 + $0x8] sm:$0xff]
  %v2808 = vld [vmem:[%s2 + $0x10] sm:$0xff]
  %v2809 = vld [vmem:[%s2 + $0x18] sm:$0xff]
  %v2810 = vld [vmem:[%s2 + $0x20] sm:$0xff]
  %v2811 = vld [vmem:[%s2 + $0x28] sm:$0xff]
  %v2812 = vld [vmem:[%s2 + $0x30] sm:$0xff]
  %v2813 = vld [vmem:[%s2 + $0x38] sm:$0xff]
  %v2814 = vld [vmem:[%s2 + $0x40] sm:$0xff]
  %v2815 = vld [vmem:[%s2 + $0x48] sm:$0xff]
  %v2816 = vld [vmem:[%s2 + $0x50] sm:$0xff]
  %v2817 = vld [vmem:[%s2 + $0x58] sm:$0xff]
  %2830 = vrot.lane.b32.xlu0 %v2794, 96
  %v2831 = vpop.permute.xlu0 %2830
  %2832 = vrot.lane.b32.xlu0 %v2795, 96
  %v2833 = vpop.permute.xlu0 %2832
  %2834 = vrot.lane.b32.xlu0 %v2796, 96
  %v2835 = vpop.permute.xlu0 %2834
  %2836 = vrot.lane.b32.xlu0 %v2797, 96
  %v2837 = vpop.permute.xlu0 %2836
  %2838 = vrot.lane.b32.xlu0 %v2798, 96
  %v2839 = vpop.permute.xlu0 %2838
  %2840 = vrot.lane.b32.xlu0 %v2799, 96
  %v2841 = vpop.permute.xlu0 %2840
  %2842 = vrot.lane.b32.xlu0 %v2800, 96
  %v2843 = vpop.permute.xlu0 %2842
  %2844 = vrot.lane.b32.xlu0 %v2801, 96
  %v2845 = vpop.permute.xlu0 %2844
  %2846 = vrot.lane.b32.xlu0 %v2802, 96
  %v2847 = vpop.permute.xlu0 %2846
  %2848 = vrot.lane.b32.xlu0 %v2803, 96
  %v2849 = vpop.permute.xlu0 %2848
  %2850 = vrot.lane.b32.xlu0 %v2804, 96
  %v2851 = vpop.permute.xlu0 %2850
  %2852 = vrot.lane.b32.xlu0 %v2805, 96
  %v2853 = vpop.permute.xlu0 %2852
  %v2854 = vsel %vm427, %v2794, 0
  %v2856 = vsel %vm427, %v2795, 0
  %v2858 = vsel %vm427, %v2796, 0
  %v2860 = vsel %vm427, %v2797, 0
  %v2862 = vsel %vm427, %v2798, 0
  %v2864 = vsel %vm427, %v2799, 0
  %v2866 = vsel %vm427, %v2800, 0
  %v2868 = vsel %vm427, %v2801, 0
  %v2870 = vsel %vm427, %v2802, 0
  %v2872 = vsel %vm427, %v2803, 0
  %v2874 = vsel %vm427, %v2804, 0
  %v2876 = vsel %vm427, %v2805, 0
  %v2878 = vsel %vm427, %v2831, 0
  %v2880 = vsel %vm427, %v2833, 0
  %v2882 = vsel %vm427, %v2835, 0
  %v2884 = vsel %vm427, %v2837, 0
  %v2886 = vsel %vm427, %v2839, 0
  %v2888 = vsel %vm427, %v2841, 0
  %v2890 = vsel %vm427, %v2843, 0
  %v2892 = vsel %vm427, %v2845, 0
  %v2894 = vsel %vm427, %v2847, 0
  %v2896 = vsel %vm427, %v2849, 0
  %v2898 = vsel %vm427, %v2851, 0
  %v2900 = vsel %vm427, %v2853, 0
  %2902 = vmatprep.subr.mxu0 0.0
  %2903 = vmatpush1.xpose.msra.mxu0 %v2878
  %2904 = vmatprep.subr.mxu0 0.0
  %2905 = vmatpush1.xpose.msra.mxu0 %v2880
  %2906 = vmatprep.subr.mxu0 0.0
  %2907 = vmatpush1.xpose.msra.mxu0 %v2882
  %2908 = vmatprep.subr.mxu0 0.0
  %2909 = vmatpush1.xpose.msra.mxu0 %v2884
  %2910 = vmatprep.subr.mxu0 0.0
  %2911 = vmatpush1.xpose.msra.mxu0 %v2886
  %2912 = vmatprep.subr.mxu0 0.0
  %2913 = vmatpush1.xpose.msra.mxu0 %v2888
  %2914 = vmatprep.subr.mxu0 0.0
  %2915 = vmatpush1.xpose.msra.mxu0 %v2890
  %2916 = vmatprep.subr.mxu0 0.0
  %2917 = vmatpush1.xpose.msra.mxu0 %v2892
  %2918 = vmatprep.subr.mxu0 0.0
  %2919 = vmatpush1.xpose.msra.mxu0 %v2894
  %2920 = vmatprep.subr.mxu0 0.0
  %2921 = vmatpush1.xpose.msra.mxu0 %v2896
  %2922 = vmatprep.subr.mxu0 0.0
  %2923 = vmatpush1.xpose.msra.mxu0 %v2898
  %2924 = vmatprep.subr.mxu0 0.0
  %2925 = vmatpush1.xpose.msra.mxu0 %v2900
  %2926 = vmatprep.subr.mxu0 0.0
  %2927 = vmatpush1.xpose.msra.mxu0 0.0
  %2928 = vmatprep.subr.mxu0 0.0
  %2929 = vmatpush1.xpose.msra.mxu0 0.0
  %2930 = vmatprep.subr.mxu0 0.0
  %2931 = vmatpush1.xpose.msra.mxu0 0.0
  %2932 = vmatprep.subr.mxu0 0.0
  %2933 = vmatpush1.xpose.msra.mxu0 0.0
  %2934 = vmatprep.subr.mxu0 0.0
  %2935 = vmatpush1.xpose.msra.mxu0 0.0
  %2936 = vmatprep.subr.mxu0 0.0
  %2937 = vmatpush1.xpose.msra.mxu0 0.0
  %2938 = vmatprep.subr.mxu0 0.0
  %2939 = vmatpush1.xpose.msra.mxu0 0.0
  %2940 = vmatprep.subr.mxu0 0.0
  %2941 = vmatpush1.xpose.msra.mxu0 0.0
  %2942 = vmatprep.subr.mxu0 0.0
  %2943 = vmatpush1.xpose.msra.mxu0 0.0
  %2944 = vmatprep.subr.mxu0 0.0
  %2945 = vmatpush1.xpose.msra.mxu0 0.0
  %2946 = vmatprep.subr.mxu0 0.0
  %2947 = vmatpush1.xpose.msra.mxu0 0.0
  %2948 = vmatprep.subr.mxu0 0.0
  %2949 = vmatpush1.xpose.msra.mxu0 0.0
  %2950 = vmatprep.subr.mxu0 0.0
  %2951 = vmatpush1.xpose.msra.mxu0 0.0
  %2952 = vmatprep.subr.mxu0 0.0
  %2953 = vmatpush1.xpose.msra.mxu0 0.0
  %2954 = vmatprep.subr.mxu0 0.0
  %2955 = vmatpush1.xpose.msra.mxu0 0.0
  %2956 = vmatprep.subr.mxu0 0.0
  %2957 = vmatpush1.xpose.msra.mxu0 0.0
  %2958 = vmatprep.subr.mxu0 0.0
  %2959 = vmatpush1.xpose.msra.mxu0 0.0
  %2960 = vmatprep.subr.mxu0 0.0
  %2961 = vmatpush1.xpose.msra.mxu0 0.0
  %2962 = vmatprep.subr.mxu0 0.0
  %2963 = vmatpush1.xpose.msra.mxu0 0.0
  %2964 = vmatprep.subr.mxu0 0.0
  %2965 = vmatpush1.xpose.msra.mxu0 0.0
  %2966 = vmatprep.mubr.f32.mxu0 0.0
  %2967 = vmatmul.mubr.f32.gmra.mrb[0].mxu0 %v2854
  %v2968 = vpop.f32.mrb[0].mxu0
  %v2969 = vadd.f32 %v2806, %v2968
  %v2970 = vpop.f32.mrb[0].mxu0
  %2971 = vmatprep.mubr.f32.mxu0 0.0
  %2972 = vmatmul.mubr.f32.gmra.mrb[0].mxu0 %v2856
  %v2973 = vpop.f32.mrb[0].mxu0
  %v2974 = vadd.f32 %v2807, %v2973
  %v2975 = vpop.f32.mrb[0].mxu0
  %2976 = vmatprep.mubr.f32.mxu0 0.0
  %2977 = vmatmul.mubr.f32.gmra.mrb[0].mxu0 %v2858
  %v2978 = vpop.f32.mrb[0].mxu0
  %v2979 = vadd.f32 %v2808, %v2978
  %v2980 = vpop.f32.mrb[0].mxu0
  %2981 = vmatprep.mubr.f32.mxu0 0.0
  %2982 = vmatmul.mubr.f32.gmra.mrb[0].mxu0 %v2860
  %v2983 = vpop.f32.mrb[0].mxu0
  %v2984 = vadd.f32 %v2809, %v2983
  %v2985 = vpop.f32.mrb[0].mxu0
  %2986 = vmatprep.mubr.f32.mxu0 0.0
  %2987 = vmatmul.mubr.f32.gmra.mrb[0].mxu0 %v2862
  %v2988 = vpop.f32.mrb[0].mxu0
  %v2989 = vadd.f32 %v2810, %v2988
  %v2990 = vpop.f32.mrb[0].mxu0
  %2991 = vmatprep.mubr.f32.mxu0 0.0
  %2992 = vmatmul.mubr.f32.gmra.mrb[0].mxu0 %v2864
  %v2993 = vpop.f32.mrb[0].mxu0
  %v2994 = vadd.f32 %v2811, %v2993
  %v2995 = vpop.f32.mrb[0].mxu0
  %2996 = vmatprep.mubr.f32.mxu0 0.0
  %2997 = vmatmul.mubr.f32.gmra.mrb[0].mxu0 %v2866
  %v2998 = vpop.f32.mrb[0].mxu0
  %v2999 = vadd.f32 %v2812, %v2998
  %v3000 = vpop.f32.mrb[0].mxu0
  %3001 = vmatprep.mubr.f32.mxu0 0.0
  %3002 = vmatmul.mubr.f32.gmra.mrb[0].mxu0 %v2868
  %v3003 = vpop.f32.mrb[0].mxu0
  %v3004 = vadd.f32 %v2813, %v3003
  %v3005 = vpop.f32.mrb[0].mxu0
  %3006 = vmatprep.mubr.f32.mxu0 0.0
  %3007 = vmatmul.mubr.f32.gmra.mrb[0].mxu0 %v2870
  %v3008 = vpop.f32.mrb[0].mxu0
  %v3009 = vadd.f32 %v2814, %v3008
  %v3010 = vpop.f32.mrb[0].mxu0
  %3011 = vmatprep.mubr.f32.mxu0 0.0
  %3012 = vmatmul.mubr.f32.gmra.mrb[0].mxu0 %v2872
  %v3013 = vpop.f32.mrb[0].mxu0
  %v3014 = vadd.f32 %v2815, %v3013
  %v3015 = vpop.f32.mrb[0].mxu0
  %3016 = vmatprep.mubr.f32.mxu0 0.0
  %3017 = vmatmul.mubr.f32.gmra.mrb[0].mxu0 %v2874
  %v3018 = vpop.f32.mrb[0].mxu0
  %v3019 = vadd.f32 %v2816, %v3018
  %v3020 = vpop.f32.mrb[0].mxu0
  %3021 = vmatprep.mubr.f32.mxu0 0.0
  %3022 = vmatmul.mubr.f32.gmra.mrb[0].mxu0 %v2876
  %v3023 = vpop.f32.mrb[0].mxu0
  %v3024 = vadd.f32 %v2817, %v3023
  %v3025 = vpop.f32.mrb[0].mxu0
  %3026 = vdwg.mxu0
  %v3027 = vsel %vm354, %v2969, -inf
  %3028 = vmax.xlane.f32.xlu0 %v3027
  %v3029 = vpop.xlane.xlu0 %3028
  %v3030 = vsel %vm354, %v2974, -inf
  %3031 = vmax.xlane.f32.xlu0 %v3030
  %v3032 = vpop.xlane.xlu0 %3031
  %v3033 = vsel %vm354, %v2979, -inf
  %3034 = vmax.xlane.f32.xlu0 %v3033
  %v3035 = vpop.xlane.xlu0 %3034
  %v3036 = vsel %vm354, %v2984, -inf
  %3037 = vmax.xlane.f32.xlu0 %v3036
  %v3038 = vpop.xlane.xlu0 %3037
  %v3039 = vsel %vm354, %v2989, -inf
  %3040 = vmax.xlane.f32.xlu0 %v3039
  %v3041 = vpop.xlane.xlu0 %3040
  %v3042 = vsel %vm354, %v2994, -inf
  %3043 = vmax.xlane.f32.xlu0 %v3042
  %v3044 = vpop.xlane.xlu0 %3043
  %v3045 = vsel %vm354, %v2999, -inf
  %3046 = vmax.xlane.f32.xlu0 %v3045
  %v3047 = vpop.xlane.xlu0 %3046
  %v3048 = vsel %vm354, %v3004, -inf
  %3049 = vmax.xlane.f32.xlu0 %v3048
  %v3050 = vpop.xlane.xlu0 %3049
  %v3051 = vsel %vm354, %v3009, -inf
  %3052 = vmax.xlane.f32.xlu0 %v3051
  %v3053 = vpop.xlane.xlu0 %3052
  %v3054 = vsel %vm354, %v3014, -inf
  %3055 = vmax.xlane.f32.xlu0 %v3054
  %v3056 = vpop.xlane.xlu0 %3055
  %v3057 = vsel %vm354, %v3019, -inf
  %3058 = vmax.xlane.f32.xlu0 %v3057
  %v3059 = vpop.xlane.xlu0 %3058
  %v3060 = vsel %vm354, %v3024, -inf
  %3061 = vmax.xlane.f32.xlu0 %v3060
  %v3062 = vpop.xlane.xlu0 %3061
  %v3063 = vsub.f32 %v2969, %v3029
  %v3064 = vsub.f32 %v2974, %v3032
  %v3065 = vsub.f32 %v2979, %v3035
  %v3066 = vsub.f32 %v2984, %v3038
  %v3067 = vsub.f32 %v2989, %v3041
  %v3068 = vsub.f32 %v2994, %v3044
  %v3069 = vsub.f32 %v2999, %v3047
  %v3070 = vsub.f32 %v3004, %v3050
  %v3071 = vsub.f32 %v3009, %v3053
  %v3072 = vsub.f32 %v3014, %v3056
  %v3073 = vsub.f32 %v3019, %v3059
  %v3074 = vsub.f32 %v3024, %v3062
  %v3075 = vmul.f32 %v3063, 1.442695
  %v3076 = vpow.pop %v3075
  %v3077 = vmul.f32 %v3064, 1.442695
  %v3078 = vpow.pop %v3077
  %v3079 = vmul.f32 %v3065, 1.442695
  %v3080 = vpow.pop %v3079
  %v3081 = vmul.f32 %v3066, 1.442695
  %v3082 = vpow.pop %v3081
  %v3083 = vmul.f32 %v3067, 1.442695
  %v3084 = vpow.pop %v3083
  %v3085 = vmul.f32 %v3068, 1.442695
  %v3086 = vpow.pop %v3085
  %v3087 = vmul.f32 %v3069, 1.442695
  %v3088 = vpow.pop %v3087
  %v3089 = vmul.f32 %v3070, 1.442695
  %v3090 = vpow.pop %v3089
  %v3091 = vmul.f32 %v3071, 1.442695
  %v3092 = vpow.pop %v3091
  %v3093 = vmul.f32 %v3072, 1.442695
  %v3094 = vpow.pop %v3093
  %v3095 = vmul.f32 %v3073, 1.442695
  %v3096 = vpow.pop %v3095
  %v3097 = vmul.f32 %v3074, 1.442695
  %v3098 = vpow.pop %v3097
  %v3099 = vsel %vm354, %v3076, 0.0
  %3100 = vadd.xlane.f32.xlu0 %v3099
  %v3101 = vpop.xlane.xlu0 %3100
  %v3102 = vsel %vm354, %v3078, 0.0
  %3103 = vadd.xlane.f32.xlu0 %v3102
  %v3104 = vpop.xlane.xlu0 %3103
  %v3105 = vsel %vm354, %v3080, 0.0
  %3106 = vadd.xlane.f32.xlu0 %v3105
  %v3107 = vpop.xlane.xlu0 %3106
  %v3108 = vsel %vm354, %v3082, 0.0
  %3109 = vadd.xlane.f32.xlu0 %v3108
  %v3110 = vpop.xlane.xlu0 %3109
  %v3111 = vsel %vm354, %v3084, 0.0
  %3112 = vadd.xlane.f32.xlu0 %v3111
  %v3113 = vpop.xlane.xlu0 %3112
  %v3114 = vsel %vm354, %v3086, 0.0
  %3115 = vadd.xlane.f32.xlu0 %v3114
  %v3116 = vpop.xlane.xlu0 %3115
  %v3117 = vsel %vm354, %v3088, 0.0
  %3118 = vadd.xlane.f32.xlu0 %v3117
  %v3119 = vpop.xlane.xlu0 %3118
  %v3120 = vsel %vm354, %v3090, 0.0
  %3121 = vadd.xlane.f32.xlu0 %v3120
  %v3122 = vpop.xlane.xlu0 %3121
  %v3123 = vsel %vm354, %v3092, 0.0
  %3124 = vadd.xlane.f32.xlu0 %v3123
  %v3125 = vpop.xlane.xlu0 %3124
  %v3126 = vsel %vm354, %v3094, 0.0
  %3127 = vadd.xlane.f32.xlu0 %v3126
  %v3128 = vpop.xlane.xlu0 %3127
  %v3129 = vsel %vm354, %v3096, 0.0
  %3130 = vadd.xlane.f32.xlu0 %v3129
  %v3131 = vpop.xlane.xlu0 %3130
  %v3132 = vsel %vm354, %v3098, 0.0
  %3133 = vadd.xlane.f32.xlu0 %v3132
  %v3134 = vpop.xlane.xlu0 %3133
  %v3135 = vrcp.pop %v3101
  %v3136 = vrcp.pop %v3104
  %v3137 = vrcp.pop %v3107
  %v3138 = vrcp.pop %v3110
  %v3139 = vrcp.pop %v3113
  %v3140 = vrcp.pop %v3116
  %v3141 = vrcp.pop %v3119
  %v3142 = vrcp.pop %v3122
  %v3143 = vrcp.pop %v3125
  %v3144 = vrcp.pop %v3128
  %v3145 = vrcp.pop %v3131
  %v3146 = vrcp.pop %v3134
  %v3147 = vmul.f32 %v3076, %v3135
  %v3148 = vmul.f32 %v3078, %v3136
  %v3149 = vmul.f32 %v3080, %v3137
  %v3150 = vmul.f32 %v3082, %v3138
  %v3151 = vmul.f32 %v3084, %v3139
  %v3152 = vmul.f32 %v3086, %v3140
  %v3153 = vmul.f32 %v3088, %v3141
  %v3154 = vmul.f32 %v3090, %v3142
  %v3155 = vmul.f32 %v3092, %v3143
  %v3156 = vmul.f32 %v3094, %v3144
  %v3157 = vmul.f32 %v3096, %v3145
  %v3158 = vmul.f32 %v3098, %v3146
  %3159 = vrot.lane.b32.xlu0 %v2794, 64
  %v3160 = vpop.permute.xlu0 %3159
  %3161 = vrot.lane.b32.xlu0 %v2795, 64
  %v3162 = vpop.permute.xlu0 %3161
  %3163 = vrot.lane.b32.xlu0 %v2796, 64
  %v3164 = vpop.permute.xlu0 %3163
  %3165 = vrot.lane.b32.xlu0 %v2797, 64
  %v3166 = vpop.permute.xlu0 %3165
  %3167 = vrot.lane.b32.xlu0 %v2798, 64
  %v3168 = vpop.permute.xlu0 %3167
  %3169 = vrot.lane.b32.xlu0 %v2799, 64
  %v3170 = vpop.permute.xlu0 %3169
  %3171 = vrot.lane.b32.xlu0 %v2800, 64
  %v3172 = vpop.permute.xlu0 %3171
  %3173 = vrot.lane.b32.xlu0 %v2801, 64
  %v3174 = vpop.permute.xlu0 %3173
  %3175 = vrot.lane.b32.xlu0 %v2802, 64
  %v3176 = vpop.permute.xlu0 %3175
  %3177 = vrot.lane.b32.xlu0 %v2803, 64
  %v3178 = vpop.permute.xlu0 %3177
  %3179 = vrot.lane.b32.xlu0 %v2804, 64
  %v3180 = vpop.permute.xlu0 %3179
  %3181 = vrot.lane.b32.xlu0 %v2805, 64
  %v3182 = vpop.permute.xlu0 %3181
  %v3196 = vsel %vm354, %v3147, 0
  %v3199 = vsel %vm354, %v3148, 0
  %v3202 = vsel %vm354, %v3149, 0
  %v3205 = vsel %vm354, %v3150, 0
  %v3208 = vsel %vm354, %v3151, 0
  %v3211 = vsel %vm354, %v3152, 0
  %v3214 = vsel %vm354, %v3153, 0
  %v3217 = vsel %vm354, %v3154, 0
  %v3220 = vsel %vm354, %v3155, 0
  %v3223 = vsel %vm354, %v3156, 0
  %v3226 = vsel %vm354, %v3157, 0
  %v3229 = vsel %vm354, %v3158, 0
  %3231 = vmatprep.subr.mxu0 0.0
  %3232 = vmatpush1.msra.mxu0 %v3160
  %3233 = vmatprep.subr.mxu0 0.0
  %3234 = vmatpush1.msra.mxu0 %v3162
  %3235 = vmatprep.subr.mxu0 0.0
  %3236 = vmatpush1.msra.mxu0 %v3164
  %3237 = vmatprep.subr.mxu0 0.0
  %3238 = vmatpush1.msra.mxu0 %v3166
  %3239 = vmatprep.subr.mxu0 0.0
  %3240 = vmatpush1.msra.mxu0 %v3168
  %3241 = vmatprep.subr.mxu0 0.0
  %3242 = vmatpush1.msra.mxu0 %v3170
  %3243 = vmatprep.subr.mxu0 0.0
  %3244 = vmatpush1.msra.mxu0 %v3172
  %3245 = vmatprep.subr.mxu0 0.0
  %3246 = vmatpush1.msra.mxu0 %v3174
  %3247 = vmatprep.subr.mxu0 0.0
  %3248 = vmatpush1.msra.mxu0 %v3176
  %3249 = vmatprep.subr.mxu0 0.0
  %3250 = vmatpush1.msra.mxu0 %v3178
  %3251 = vmatprep.subr.mxu0 0.0
  %3252 = vmatpush1.msra.mxu0 %v3180
  %3253 = vmatprep.subr.mxu0 0.0
  %3254 = vmatpush1.msra.mxu0 %v3182
  %3255 = vmatprep.subr.mxu0 0.0
  %3256 = vmatpush1.msra.mxu0 0.0
  %3257 = vmatprep.subr.mxu0 0.0
  %3258 = vmatpush1.msra.mxu0 0.0
  %3259 = vmatprep.subr.mxu0 0.0
  %3260 = vmatpush1.msra.mxu0 0.0
  %3261 = vmatprep.subr.mxu0 0.0
  %3262 = vmatpush1.msra.mxu0 0.0
  %3263 = vmatprep.subr.mxu0 0.0
  %3264 = vmatpush1.msra.mxu0 0.0
  %3265 = vmatprep.subr.mxu0 0.0
  %3266 = vmatpush1.msra.mxu0 0.0
  %3267 = vmatprep.subr.mxu0 0.0
  %3268 = vmatpush1.msra.mxu0 0.0
  %3269 = vmatprep.subr.mxu0 0.0
  %3270 = vmatpush1.msra.mxu0 0.0
  %3271 = vmatprep.subr.mxu0 0.0
  %3272 = vmatpush1.msra.mxu0 0.0
  %3273 = vmatprep.subr.mxu0 0.0
  %3274 = vmatpush1.msra.mxu0 0.0
  %3275 = vmatprep.subr.mxu0 0.0
  %3276 = vmatpush1.msra.mxu0 0.0
  %3277 = vmatprep.subr.mxu0 0.0
  %3278 = vmatpush1.msra.mxu0 0.0
  %3279 = vmatprep.subr.mxu0 0.0
  %3280 = vmatpush1.msra.mxu0 0.0
  %3281 = vmatprep.subr.mxu0 0.0
  %3282 = vmatpush1.msra.mxu0 0.0
  %3283 = vmatprep.subr.mxu0 0.0
  %3284 = vmatpush1.msra.mxu0 0.0
  %3285 = vmatprep.subr.mxu0 0.0
  %3286 = vmatpush1.msra.mxu0 0.0
  %3287 = vmatprep.subr.mxu0 0.0
  %3288 = vmatpush1.msra.mxu0 0.0
  %3289 = vmatprep.subr.mxu0 0.0
  %3290 = vmatpush1.msra.mxu0 0.0
  %3291 = vmatprep.subr.mxu0 0.0
  %3292 = vmatpush1.msra.mxu0 0.0
  %3293 = vmatprep.subr.mxu0 0.0
  %3294 = vmatpush1.msra.mxu0 0.0
  %3295 = vmatprep.mubr.f32.mxu0 0.0
  %3296 = vmatmul.mubr.f32.gmra.mrb[0].mxu0 %v3196
  %v3297 = vpop.f32.mrb[0].mxu0
  %v3298 = vadd.f32 0.0, %v3297
  %v3299 = vpop.f32.mrb[0].mxu0
  %3300 = vmatprep.mubr.f32.mxu0 0.0
  %3301 = vmatmul.mubr.f32.gmra.mrb[0].mxu0 %v3199
  %v3302 = vpop.f32.mrb[0].mxu0
  %v3303 = vadd.f32 0.0, %v3302
  %v3304 = vpop.f32.mrb[0].mxu0
  %3305 = vmatprep.mubr.f32.mxu0 0.0
  %3306 = vmatmul.mubr.f32.gmra.mrb[0].mxu0 %v3202
  %v3307 = vpop.f32.mrb[0].mxu0
  %v3308 = vadd.f32 0.0, %v3307
  %v3309 = vpop.f32.mrb[0].mxu0
  %3310 = vmatprep.mubr.f32.mxu0 0.0
  %3311 = vmatmul.mubr.f32.gmra.mrb[0].mxu0 %v3205
  %v3312 = vpop.f32.mrb[0].mxu0
  %v3313 = vadd.f32 0.0, %v3312
  %v3314 = vpop.f32.mrb[0].mxu0
  %3315 = vmatprep.mubr.f32.mxu0 0.0
  %3316 = vmatmul.mubr.f32.gmra.mrb[0].mxu0 %v3208
  %v3317 = vpop.f32.mrb[0].mxu0
  %v3318 = vadd.f32 0.0, %v3317
  %v3319 = vpop.f32.mrb[0].mxu0
  %3320 = vmatprep.mubr.f32.mxu0 0.0
  %3321 = vmatmul.mubr.f32.gmra.mrb[0].mxu0 %v3211
  %v3322 = vpop.f32.mrb[0].mxu0
  %v3323 = vadd.f32 0.0, %v3322
  %v3324 = vpop.f32.mrb[0].mxu0
  %3325 = vmatprep.mubr.f32.mxu0 0.0
  %3326 = vmatmul.mubr.f32.gmra.mrb[0].mxu0 %v3214
  %v3327 = vpop.f32.mrb[0].mxu0
  %v3328 = vadd.f32 0.0, %v3327
  %v3329 = vpop.f32.mrb[0].mxu0
  %3330 = vmatprep.mubr.f32.mxu0 0.0
  %3331 = vmatmul.mubr.f32.gmra.mrb[0].mxu0 %v3217
  %v3332 = vpop.f32.mrb[0].mxu0
  %v3333 = vadd.f32 0.0, %v3332
  %v3334 = vpop.f32.mrb[0].mxu0
  %3335 = vmatprep.mubr.f32.mxu0 0.0
  %3336 = vmatmul.mubr.f32.gmra.mrb[0].mxu0 %v3220
  %v3337 = vpop.f32.mrb[0].mxu0
  %v3338 = vadd.f32 0.0, %v3337
  %v3339 = vpop.f32.mrb[0].mxu0
  %3340 = vmatprep.mubr.f32.mxu0 0.0
  %3341 = vmatmul.mubr.f32.gmra.mrb[0].mxu0 %v3223
  %v3342 = vpop.f32.mrb[0].mxu0
  %v3343 = vadd.f32 0.0, %v3342
  %v3344 = vpop.f32.mrb[0].mxu0
  %3345 = vmatprep.mubr.f32.mxu0 0.0
  %3346 = vmatmul.mubr.f32.gmra.mrb[0].mxu0 %v3226
  %v3347 = vpop.f32.mrb[0].mxu0
  %v3348 = vadd.f32 0.0, %v3347
  %v3349 = vpop.f32.mrb[0].mxu0
  %3350 = vmatprep.mubr.f32.mxu0 0.0
  %3351 = vmatmul.mubr.f32.gmra.mrb[0].mxu0 %v3229
  %v3352 = vpop.f32.mrb[0].mxu0
  %v3353 = vadd.f32 0.0, %v3352
  %v3354 = vpop.f32.mrb[0].mxu0
  %3355 = vdwg.mxu0
  %v3356 = vld [vmem:[%s2455] sm:$0xff]
  %v3357 = vld [vmem:[%s2455 + $0x10] sm:$0xff]
  %3360 = vrot.lane.b32.xlu0 %v3356, 32
  %v3361 = vpop.permute.xlu0 %3360
  %3362 = vrot.lane.b32.xlu0 %v3357, 32
  %v3363 = vpop.permute.xlu0 %3362
  %v3367 = vsel %vm427, %v3298, 0
  %v3370 = vsel %vm427, %v3303, 0
  %v3373 = vsel %vm427, %v3308, 0
  %v3376 = vsel %vm427, %v3313, 0
  %v3379 = vsel %vm427, %v3318, 0
  %v3382 = vsel %vm427, %v3323, 0
  %v3385 = vsel %vm427, %v3328, 0
  %v3388 = vsel %vm427, %v3333, 0
  %v3391 = vsel %vm427, %v3338, 0
  %v3394 = vsel %vm427, %v3343, 0
  %v3397 = vsel %vm427, %v3348, 0
  %v3400 = vsel %vm427, %v3353, 0
  %3402 = vmatprep.subr.mxu0 0.0
  %3403 = vmatpush1.msra.mxu0 %v3361
  %3404 = vmatprep.subr.mxu0 0.0
  %3405 = vmatpush1.msra.mxu0 %v3363
  %3406 = vmatprep.subr.mxu0 0.0
  %3407 = vmatpush1.msra.mxu0 0.0
  %3408 = vmatprep.subr.mxu0 0.0
  %3409 = vmatpush1.msra.mxu0 0.0
  %3410 = vmatprep.subr.mxu0 0.0
  %3411 = vmatpush1.msra.mxu0 0.0
  %3412 = vmatprep.subr.mxu0 0.0
  %3413 = vmatpush1.msra.mxu0 0.0
  %3414 = vmatprep.subr.mxu0 0.0
  %3415 = vmatpush1.msra.mxu0 0.0
  %3416 = vmatprep.subr.mxu0 0.0
  %3417 = vmatpush1.msra.mxu0 0.0
  %3418 = vmatprep.subr.mxu0 0.0
  %3419 = vmatpush1.msra.mxu0 0.0
  %3420 = vmatprep.subr.mxu0 0.0
  %3421 = vmatpush1.msra.mxu0 0.0
  %3422 = vmatprep.subr.mxu0 0.0
  %3423 = vmatpush1.msra.mxu0 0.0
  %3424 = vmatprep.subr.mxu0 0.0
  %3425 = vmatpush1.msra.mxu0 0.0
  %3426 = vmatprep.subr.mxu0 0.0
  %3427 = vmatpush1.msra.mxu0 0.0
  %3428 = vmatprep.subr.mxu0 0.0
  %3429 = vmatpush1.msra.mxu0 0.0
  %3430 = vmatprep.subr.mxu0 0.0
  %3431 = vmatpush1.msra.mxu0 0.0
  %3432 = vmatprep.subr.mxu0 0.0
  %3433 = vmatpush1.msra.mxu0 0.0
  %3434 = vmatprep.subr.mxu0 0.0
  %3435 = vmatpush1.msra.mxu0 0.0
  %3436 = vmatprep.subr.mxu0 0.0
  %3437 = vmatpush1.msra.mxu0 0.0
  %3438 = vmatprep.subr.mxu0 0.0
  %3439 = vmatpush1.msra.mxu0 0.0
  %3440 = vmatprep.subr.mxu0 0.0
  %3441 = vmatpush1.msra.mxu0 0.0
  %3442 = vmatprep.subr.mxu0 0.0
  %3443 = vmatpush1.msra.mxu0 0.0
  %3444 = vmatprep.subr.mxu0 0.0
  %3445 = vmatpush1.msra.mxu0 0.0
  %3446 = vmatprep.subr.mxu0 0.0
  %3447 = vmatpush1.msra.mxu0 0.0
  %3448 = vmatprep.subr.mxu0 0.0
  %3449 = vmatpush1.msra.mxu0 0.0
  %3450 = vmatprep.subr.mxu0 0.0
  %3451 = vmatpush1.msra.mxu0 0.0
  %3452 = vmatprep.subr.mxu0 0.0
  %3453 = vmatpush1.msra.mxu0 0.0
  %3454 = vmatprep.subr.mxu0 0.0
  %3455 = vmatpush1.msra.mxu0 0.0
  %3456 = vmatprep.subr.mxu0 0.0
  %3457 = vmatpush1.msra.mxu0 0.0
  %3458 = vmatprep.subr.mxu0 0.0
  %3459 = vmatpush1.msra.mxu0 0.0
  %3460 = vmatprep.subr.mxu0 0.0
  %3461 = vmatpush1.msra.mxu0 0.0
  %3462 = vmatprep.subr.mxu0 0.0
  %3463 = vmatpush1.msra.mxu0 0.0
  %3464 = vmatprep.subr.mxu0 0.0
  %3465 = vmatpush1.msra.mxu0 0.0
  %3466 = vmatprep.mubr.f32.mxu0 0.0
  %3467 = vmatmul.mubr.f32.gmra.mrb[0].mxu0 %v3367
  %v3468 = vpop.f32.mrb[0].mxu0
  %v3469 = vadd.f32 0.0, %v3468
  %v3470 = vpop.f32.mrb[0].mxu0
  %3471 = vmatprep.mubr.f32.mxu0 0.0
  %3472 = vmatmul.mubr.f32.gmra.mrb[0].mxu0 %v3370
  %v3473 = vpop.f32.mrb[0].mxu0
  %v3474 = vadd.f32 0.0, %v3473
  %v3475 = vpop.f32.mrb[0].mxu0
  %3476 = vmatprep.mubr.f32.mxu0 0.0
  %3477 = vmatmul.mubr.f32.gmra.mrb[0].mxu0 %v3373
  %v3478 = vpop.f32.mrb[0].mxu0
  %v3479 = vadd.f32 0.0, %v3478
  %v3480 = vpop.f32.mrb[0].mxu0
  %3481 = vmatprep.mubr.f32.mxu0 0.0
  %3482 = vmatmul.mubr.f32.gmra.mrb[0].mxu0 %v3376
  %v3483 = vpop.f32.mrb[0].mxu0
  %v3484 = vadd.f32 0.0, %v3483
  %v3485 = vpop.f32.mrb[0].mxu0
  %3486 = vmatprep.mubr.f32.mxu0 0.0
  %3487 = vmatmul.mubr.f32.gmra.mrb[0].mxu0 %v3379
  %v3488 = vpop.f32.mrb[0].mxu0
  %v3489 = vadd.f32 0.0, %v3488
  %v3490 = vpop.f32.mrb[0].mxu0
  %3491 = vmatprep.mubr.f32.mxu0 0.0
  %3492 = vmatmul.mubr.f32.gmra.mrb[0].mxu0 %v3382
  %v3493 = vpop.f32.mrb[0].mxu0
  %v3494 = vadd.f32 0.0, %v3493
  %v3495 = vpop.f32.mrb[0].mxu0
  %3496 = vmatprep.mubr.f32.mxu0 0.0
  %3497 = vmatmul.mubr.f32.gmra.mrb[0].mxu0 %v3385
  %v3498 = vpop.f32.mrb[0].mxu0
  %v3499 = vadd.f32 0.0, %v3498
  %v3500 = vpop.f32.mrb[0].mxu0
  %3501 = vmatprep.mubr.f32.mxu0 0.0
  %3502 = vmatmul.mubr.f32.gmra.mrb[0].mxu0 %v3388
  %v3503 = vpop.f32.mrb[0].mxu0
  %v3504 = vadd.f32 0.0, %v3503
  %v3505 = vpop.f32.mrb[0].mxu0
  %3506 = vmatprep.mubr.f32.mxu0 0.0
  %3507 = vmatmul.mubr.f32.gmra.mrb[0].mxu0 %v3391
  %v3508 = vpop.f32.mrb[0].mxu0
  %v3509 = vadd.f32 0.0, %v3508
  %v3510 = vpop.f32.mrb[0].mxu0
  %3511 = vmatprep.mubr.f32.mxu0 0.0
  %3512 = vmatmul.mubr.f32.gmra.mrb[0].mxu0 %v3394
  %v3513 = vpop.f32.mrb[0].mxu0
  %v3514 = vadd.f32 0.0, %v3513
  %v3515 = vpop.f32.mrb[0].mxu0
  %3516 = vmatprep.mubr.f32.mxu0 0.0
  %3517 = vmatmul.mubr.f32.gmra.mrb[0].mxu0 %v3397
  %v3518 = vpop.f32.mrb[0].mxu0
  %v3519 = vadd.f32 0.0, %v3518
  %v3520 = vpop.f32.mrb[0].mxu0
  %3521 = vmatprep.mubr.f32.mxu0 0.0
  %3522 = vmatmul.mubr.f32.gmra.mrb[0].mxu0 %v3400
  %v3523 = vpop.f32.mrb[0].mxu0
  %v3524 = vadd.f32 0.0, %v3523
  %v3525 = vpop.f32.mrb[0].mxu0
  %3526 = vdwg.mxu0
  %v3527 = vadd.f32 %v2443, %v3469
  %v3528 = vadd.f32 %v2444, %v3474
  %v3529 = vadd.f32 %v2445, %v3479
  %v3530 = vadd.f32 %v2446, %v3484
  %v3531 = vadd.f32 %v2447, %v3489
  %v3532 = vadd.f32 %v2448, %v3494
  %v3533 = vadd.f32 %v2449, %v3499
  %v3534 = vadd.f32 %v2450, %v3504
  %v3535 = vadd.f32 %v2451, %v3509
  %v3536 = vadd.f32 %v2452, %v3514
  %v3537 = vadd.f32 %v2453, %v3519
  %v3538 = vadd.f32 %v2454, %v3524
  %3539 = vrot.lane.b32.xlu0 %v2794, 112
  %v3540 = vpop.permute.xlu0 %3539
  %3541 = vrot.lane.b32.xlu0 %v2795, 112
  %v3542 = vpop.permute.xlu0 %3541
  %3543 = vrot.lane.b32.xlu0 %v2796, 112
  %v3544 = vpop.permute.xlu0 %3543
  %3545 = vrot.lane.b32.xlu0 %v2797, 112
  %v3546 = vpop.permute.xlu0 %3545
  %3547 = vrot.lane.b32.xlu0 %v2798, 112
  %v3548 = vpop.permute.xlu0 %3547
  %3549 = vrot.lane.b32.xlu0 %v2799, 112
  %v3550 = vpop.permute.xlu0 %3549
  %3551 = vrot.lane.b32.xlu0 %v2800, 112
  %v3552 = vpop.permute.xlu0 %3551
  %3553 = vrot.lane.b32.xlu0 %v2801, 112
  %v3554 = vpop.permute.xlu0 %3553
  %3555 = vrot.lane.b32.xlu0 %v2802, 112
  %v3556 = vpop.permute.xlu0 %3555
  %3557 = vrot.lane.b32.xlu0 %v2803, 112
  %v3558 = vpop.permute.xlu0 %3557
  %3559 = vrot.lane.b32.xlu0 %v2804, 112
  %v3560 = vpop.permute.xlu0 %3559
  %3561 = vrot.lane.b32.xlu0 %v2805, 112
  %v3562 = vpop.permute.xlu0 %3561
  %3563 = vrot.lane.b32.xlu0 %v2794, 80
  %v3564 = vpop.permute.xlu0 %3563
  %3565 = vrot.lane.b32.xlu0 %v2795, 80
  %v3566 = vpop.permute.xlu0 %3565
  %3567 = vrot.lane.b32.xlu0 %v2796, 80
  %v3568 = vpop.permute.xlu0 %3567
  %3569 = vrot.lane.b32.xlu0 %v2797, 80
  %v3570 = vpop.permute.xlu0 %3569
  %3571 = vrot.lane.b32.xlu0 %v2798, 80
  %v3572 = vpop.permute.xlu0 %3571
  %3573 = vrot.lane.b32.xlu0 %v2799, 80
  %v3574 = vpop.permute.xlu0 %3573
  %3575 = vrot.lane.b32.xlu0 %v2800, 80
  %v3576 = vpop.permute.xlu0 %3575
  %3577 = vrot.lane.b32.xlu0 %v2801, 80
  %v3578 = vpop.permute.xlu0 %3577
  %3579 = vrot.lane.b32.xlu0 %v2802, 80
  %v3580 = vpop.permute.xlu0 %3579
  %3581 = vrot.lane.b32.xlu0 %v2803, 80
  %v3582 = vpop.permute.xlu0 %3581
  %3583 = vrot.lane.b32.xlu0 %v2804, 80
  %v3584 = vpop.permute.xlu0 %3583
  %3585 = vrot.lane.b32.xlu0 %v2805, 80
  %v3586 = vpop.permute.xlu0 %3585
  %v3587 = vsel %vm427, %v3540, 0
  %v3589 = vsel %vm427, %v3542, 0
  %v3591 = vsel %vm427, %v3544, 0
  %v3593 = vsel %vm427, %v3546, 0
  %v3595 = vsel %vm427, %v3548, 0
  %v3597 = vsel %vm427, %v3550, 0
  %v3599 = vsel %vm427, %v3552, 0
  %v3601 = vsel %vm427, %v3554, 0
  %v3603 = vsel %vm427, %v3556, 0
  %v3605 = vsel %vm427, %v3558, 0
  %v3607 = vsel %vm427, %v3560, 0
  %v3609 = vsel %vm427, %v3562, 0
  %v3611 = vsel %vm427, %v3564, 0
  %v3613 = vsel %vm427, %v3566, 0
  %v3615 = vsel %vm427, %v3568, 0
  %v3617 = vsel %vm427, %v3570, 0
  %v3619 = vsel %vm427, %v3572, 0
  %v3621 = vsel %vm427, %v3574, 0
  %v3623 = vsel %vm427, %v3576, 0
  %v3625 = vsel %vm427, %v3578, 0
  %v3627 = vsel %vm427, %v3580, 0
  %v3629 = vsel %vm427, %v3582, 0
  %v3631 = vsel %vm427, %v3584, 0
  %v3633 = vsel %vm427, %v3586, 0
  %3635 = vmatprep.subr.mxu0 0.0
  %3636 = vmatpush1.xpose.msra.mxu0 %v3611
  %3637 = vmatprep.subr.mxu0 0.0
  %3638 = vmatpush1.xpose.msra.mxu0 %v3613
  %3639 = vmatprep.subr.mxu0 0.0
  %3640 = vmatpush1.xpose.msra.mxu0 %v3615
  %3641 = vmatprep.subr.mxu0 0.0
  %3642 = vmatpush1.xpose.msra.mxu0 %v3617
  %3643 = vmatprep.subr.mxu0 0.0
  %3644 = vmatpush1.xpose.msra.mxu0 %v3619
  %3645 = vmatprep.subr.mxu0 0.0
  %3646 = vmatpush1.xpose.msra.mxu0 %v3621
  %3647 = vmatprep.subr.mxu0 0.0
  %3648 = vmatpush1.xpose.msra.mxu0 %v3623
  %3649 = vmatprep.subr.mxu0 0.0
  %3650 = vmatpush1.xpose.msra.mxu0 %v3625
  %3651 = vmatprep.subr.mxu0 0.0
  %3652 = vmatpush1.xpose.msra.mxu0 %v3627
  %3653 = vmatprep.subr.mxu0 0.0
  %3654 = vmatpush1.xpose.msra.mxu0 %v3629
  %3655 = vmatprep.subr.mxu0 0.0
  %3656 = vmatpush1.xpose.msra.mxu0 %v3631
  %3657 = vmatprep.subr.mxu0 0.0
  %3658 = vmatpush1.xpose.msra.mxu0 %v3633
  %3659 = vmatprep.subr.mxu0 0.0
  %3660 = vmatpush1.xpose.msra.mxu0 0.0
  %3661 = vmatprep.subr.mxu0 0.0
  %3662 = vmatpush1.xpose.msra.mxu0 0.0
  %3663 = vmatprep.subr.mxu0 0.0
  %3664 = vmatpush1.xpose.msra.mxu0 0.0
  %3665 = vmatprep.subr.mxu0 0.0
  %3666 = vmatpush1.xpose.msra.mxu0 0.0
  %3667 = vmatprep.subr.mxu0 0.0
  %3668 = vmatpush1.xpose.msra.mxu0 0.0
  %3669 = vmatprep.subr.mxu0 0.0
  %3670 = vmatpush1.xpose.msra.mxu0 0.0
  %3671 = vmatprep.subr.mxu0 0.0
  %3672 = vmatpush1.xpose.msra.mxu0 0.0
  %3673 = vmatprep.subr.mxu0 0.0
  %3674 = vmatpush1.xpose.msra.mxu0 0.0
  %3675 = vmatprep.subr.mxu0 0.0
  %3676 = vmatpush1.xpose.msra.mxu0 0.0
  %3677 = vmatprep.subr.mxu0 0.0
  %3678 = vmatpush1.xpose.msra.mxu0 0.0
  %3679 = vmatprep.subr.mxu0 0.0
  %3680 = vmatpush1.xpose.msra.mxu0 0.0
  %3681 = vmatprep.subr.mxu0 0.0
  %3682 = vmatpush1.xpose.msra.mxu0 0.0
  %3683 = vmatprep.subr.mxu0 0.0
  %3684 = vmatpush1.xpose.msra.mxu0 0.0
  %3685 = vmatprep.subr.mxu0 0.0
  %3686 = vmatpush1.xpose.msra.mxu0 0.0
  %3687 = vmatprep.subr.mxu0 0.0
  %3688 = vmatpush1.xpose.msra.mxu0 0.0
  %3689 = vmatprep.subr.mxu0 0.0
  %3690 = vmatpush1.xpose.msra.mxu0 0.0
  %3691 = vmatprep.subr.mxu0 0.0
  %3692 = vmatpush1.xpose.msra.mxu0 0.0
  %3693 = vmatprep.subr.mxu0 0.0
  %3694 = vmatpush1.xpose.msra.mxu0 0.0
  %3695 = vmatprep.subr.mxu0 0.0
  %3696 = vmatpush1.xpose.msra.mxu0 0.0
  %3697 = vmatprep.subr.mxu0 0.0
  %3698 = vmatpush1.xpose.msra.mxu0 0.0
  %3699 = vmatprep.mubr.f32.mxu0 0.0
  %3700 = vmatmul.mubr.f32.gmra.mrb[0].mxu0 %v3587
  %v3701 = vpop.f32.mrb[0].mxu0
  %v3702 = vadd.f32 %v2806, %v3701
  %v3703 = vpop.f32.mrb[0].mxu0
  %3704 = vmatprep.mubr.f32.mxu0 0.0
  %3705 = vmatmul.mubr.f32.gmra.mrb[0].mxu0 %v3589
  %v3706 = vpop.f32.mrb[0].mxu0
  %v3707 = vadd.f32 %v2807, %v3706
  %v3708 = vpop.f32.mrb[0].mxu0
  %3709 = vmatprep.mubr.f32.mxu0 0.0
  %3710 = vmatmul.mubr.f32.gmra.mrb[0].mxu0 %v3591
  %v3711 = vpop.f32.mrb[0].mxu0
  %v3712 = vadd.f32 %v2808, %v3711
  %v3713 = vpop.f32.mrb[0].mxu0
  %3714 = vmatprep.mubr.f32.mxu0 0.0
  %3715 = vmatmul.mubr.f32.gmra.mrb[0].mxu0 %v3593
  %v3716 = vpop.f32.mrb[0].mxu0
  %v3717 = vadd.f32 %v2809, %v3716
  %v3718 = vpop.f32.mrb[0].mxu0
  %3719 = vmatprep.mubr.f32.mxu0 0.0
  %3720 = vmatmul.mubr.f32.gmra.mrb[0].mxu0 %v3595
  %v3721 = vpop.f32.mrb[0].mxu0
  %v3722 = vadd.f32 %v2810, %v3721
  %v3723 = vpop.f32.mrb[0].mxu0
  %3724 = vmatprep.mubr.f32.mxu0 0.0
  %3725 = vmatmul.mubr.f32.gmra.mrb[0].mxu0 %v3597
  %v3726 = vpop.f32.mrb[0].mxu0
  %v3727 = vadd.f32 %v2811, %v3726
  %v3728 = vpop.f32.mrb[0].mxu0
  %3729 = vmatprep.mubr.f32.mxu0 0.0
  %3730 = vmatmul.mubr.f32.gmra.mrb[0].mxu0 %v3599
  %v3731 = vpop.f32.mrb[0].mxu0
  %v3732 = vadd.f32 %v2812, %v3731
  %v3733 = vpop.f32.mrb[0].mxu0
  %3734 = vmatprep.mubr.f32.mxu0 0.0
  %3735 = vmatmul.mubr.f32.gmra.mrb[0].mxu0 %v3601
  %v3736 = vpop.f32.mrb[0].mxu0
  %v3737 = vadd.f32 %v2813, %v3736
  %v3738 = vpop.f32.mrb[0].mxu0
  %3739 = vmatprep.mubr.f32.mxu0 0.0
  %3740 = vmatmul.mubr.f32.gmra.mrb[0].mxu0 %v3603
  %v3741 = vpop.f32.mrb[0].mxu0
  %v3742 = vadd.f32 %v2814, %v3741
  %v3743 = vpop.f32.mrb[0].mxu0
  %3744 = vmatprep.mubr.f32.mxu0 0.0
  %3745 = vmatmul.mubr.f32.gmra.mrb[0].mxu0 %v3605
  %v3746 = vpop.f32.mrb[0].mxu0
  %v3747 = vadd.f32 %v2815, %v3746
  %v3748 = vpop.f32.mrb[0].mxu0
  %3749 = vmatprep.mubr.f32.mxu0 0.0
  %3750 = vmatmul.mubr.f32.gmra.mrb[0].mxu0 %v3607
  %v3751 = vpop.f32.mrb[0].mxu0
  %v3752 = vadd.f32 %v2816, %v3751
  %v3753 = vpop.f32.mrb[0].mxu0
  %3754 = vmatprep.mubr.f32.mxu0 0.0
  %3755 = vmatmul.mubr.f32.gmra.mrb[0].mxu0 %v3609
  %v3756 = vpop.f32.mrb[0].mxu0
  %v3757 = vadd.f32 %v2817, %v3756
  %v3758 = vpop.f32.mrb[0].mxu0
  %3759 = vdwg.mxu0
  %v3760 = vsel %vm354, %v3702, -inf
  %3761 = vmax.xlane.f32.xlu0 %v3760
  %v3762 = vpop.xlane.xlu0 %3761
  %v3763 = vsel %vm354, %v3707, -inf
  %3764 = vmax.xlane.f32.xlu0 %v3763
  %v3765 = vpop.xlane.xlu0 %3764
  %v3766 = vsel %vm354, %v3712, -inf
  %3767 = vmax.xlane.f32.xlu0 %v3766
  %v3768 = vpop.xlane.xlu0 %3767
  %v3769 = vsel %vm354, %v3717, -inf
  %3770 = vmax.xlane.f32.xlu0 %v3769
  %v3771 = vpop.xlane.xlu0 %3770
  %v3772 = vsel %vm354, %v3722, -inf
  %3773 = vmax.xlane.f32.xlu0 %v3772
  %v3774 = vpop.xlane.xlu0 %3773
  %v3775 = vsel %vm354, %v3727, -inf
  %3776 = vmax.xlane.f32.xlu0 %v3775
  %v3777 = vpop.xlane.xlu0 %3776
  %v3778 = vsel %vm354, %v3732, -inf
  %3779 = vmax.xlane.f32.xlu0 %v3778
  %v3780 = vpop.xlane.xlu0 %3779
  %v3781 = vsel %vm354, %v3737, -inf
  %3782 = vmax.xlane.f32.xlu0 %v3781
  %v3783 = vpop.xlane.xlu0 %3782
  %v3784 = vsel %vm354, %v3742, -inf
  %3785 = vmax.xlane.f32.xlu0 %v3784
  %v3786 = vpop.xlane.xlu0 %3785
  %v3787 = vsel %vm354, %v3747, -inf
  %3788 = vmax.xlane.f32.xlu0 %v3787
  %v3789 = vpop.xlane.xlu0 %3788
  %v3790 = vsel %vm354, %v3752, -inf
  %3791 = vmax.xlane.f32.xlu0 %v3790
  %v3792 = vpop.xlane.xlu0 %3791
  %v3793 = vsel %vm354, %v3757, -inf
  %3794 = vmax.xlane.f32.xlu0 %v3793
  %v3795 = vpop.xlane.xlu0 %3794
  %v3796 = vsub.f32 %v3702, %v3762
  %v3797 = vsub.f32 %v3707, %v3765
  %v3798 = vsub.f32 %v3712, %v3768
  %v3799 = vsub.f32 %v3717, %v3771
  %v3800 = vsub.f32 %v3722, %v3774
  %v3801 = vsub.f32 %v3727, %v3777
  %v3802 = vsub.f32 %v3732, %v3780
  %v3803 = vsub.f32 %v3737, %v3783
  %v3804 = vsub.f32 %v3742, %v3786
  %v3805 = vsub.f32 %v3747, %v3789
  %v3806 = vsub.f32 %v3752, %v3792
  %v3807 = vsub.f32 %v3757, %v3795
  %v3808 = vmul.f32 %v3796, 1.442695
  %v3809 = vpow.pop %v3808
  %v3810 = vmul.f32 %v3797, 1.442695
  %v3811 = vpow.pop %v3810
  %v3812 = vmul.f32 %v3798, 1.442695
  %v3813 = vpow.pop %v3812
  %v3814 = vmul.f32 %v3799, 1.442695
  %v3815 = vpow.pop %v3814
  %v3816 = vmul.f32 %v3800, 1.442695
  %v3817 = vpow.pop %v3816
  %v3818 = vmul.f32 %v3801, 1.442695
  %v3819 = vpow.pop %v3818
  %v3820 = vmul.f32 %v3802, 1.442695
  %v3821 = vpow.pop %v3820
  %v3822 = vmul.f32 %v3803, 1.442695
  %v3823 = vpow.pop %v3822
  %v3824 = vmul.f32 %v3804, 1.442695
  %v3825 = vpow.pop %v3824
  %v3826 = vmul.f32 %v3805, 1.442695
  %v3827 = vpow.pop %v3826
  %v3828 = vmul.f32 %v3806, 1.442695
  %v3829 = vpow.pop %v3828
  %v3830 = vmul.f32 %v3807, 1.442695
  %v3831 = vpow.pop %v3830
  %v3832 = vsel %vm354, %v3809, 0.0
  %3833 = vadd.xlane.f32.xlu0 %v3832
  %v3834 = vpop.xlane.xlu0 %3833
  %v3835 = vsel %vm354, %v3811, 0.0
  %3836 = vadd.xlane.f32.xlu0 %v3835
  %v3837 = vpop.xlane.xlu0 %3836
  %v3838 = vsel %vm354, %v3813, 0.0
  %3839 = vadd.xlane.f32.xlu0 %v3838
  %v3840 = vpop.xlane.xlu0 %3839
  %v3841 = vsel %vm354, %v3815, 0.0
  %3842 = vadd.xlane.f32.xlu0 %v3841
  %v3843 = vpop.xlane.xlu0 %3842
  %v3844 = vsel %vm354, %v3817, 0.0
  %3845 = vadd.xlane.f32.xlu0 %v3844
  %v3846 = vpop.xlane.xlu0 %3845
  %v3847 = vsel %vm354, %v3819, 0.0
  %3848 = vadd.xlane.f32.xlu0 %v3847
  %v3849 = vpop.xlane.xlu0 %3848
  %v3850 = vsel %vm354, %v3821, 0.0
  %3851 = vadd.xlane.f32.xlu0 %v3850
  %v3852 = vpop.xlane.xlu0 %3851
  %v3853 = vsel %vm354, %v3823, 0.0
  %3854 = vadd.xlane.f32.xlu0 %v3853
  %v3855 = vpop.xlane.xlu0 %3854
  %v3856 = vsel %vm354, %v3825, 0.0
  %3857 = vadd.xlane.f32.xlu0 %v3856
  %v3858 = vpop.xlane.xlu0 %3857
  %v3859 = vsel %vm354, %v3827, 0.0
  %3860 = vadd.xlane.f32.xlu0 %v3859
  %v3861 = vpop.xlane.xlu0 %3860
  %v3862 = vsel %vm354, %v3829, 0.0
  %3863 = vadd.xlane.f32.xlu0 %v3862
  %v3864 = vpop.xlane.xlu0 %3863
  %v3865 = vsel %vm354, %v3831, 0.0
  %3866 = vadd.xlane.f32.xlu0 %v3865
  %v3867 = vpop.xlane.xlu0 %3866
  %v3868 = vrcp.pop %v3834
  %v3869 = vrcp.pop %v3837
  %v3870 = vrcp.pop %v3840
  %v3871 = vrcp.pop %v3843
  %v3872 = vrcp.pop %v3846
  %v3873 = vrcp.pop %v3849
  %v3874 = vrcp.pop %v3852
  %v3875 = vrcp.pop %v3855
  %v3876 = vrcp.pop %v3858
  %v3877 = vrcp.pop %v3861
  %v3878 = vrcp.pop %v3864
  %v3879 = vrcp.pop %v3867
  %v3880 = vmul.f32 %v3809, %v3868
  %v3881 = vmul.f32 %v3811, %v3869
  %v3882 = vmul.f32 %v3813, %v3870
  %v3883 = vmul.f32 %v3815, %v3871
  %v3884 = vmul.f32 %v3817, %v3872
  %v3885 = vmul.f32 %v3819, %v3873
  %v3886 = vmul.f32 %v3821, %v3874
  %v3887 = vmul.f32 %v3823, %v3875
  %v3888 = vmul.f32 %v3825, %v3876
  %v3889 = vmul.f32 %v3827, %v3877
  %v3890 = vmul.f32 %v3829, %v3878
  %v3891 = vmul.f32 %v3831, %v3879
  %3892 = vrot.lane.b32.xlu0 %v2794, 48
  %v3893 = vpop.permute.xlu0 %3892
  %3894 = vrot.lane.b32.xlu0 %v2795, 48
  %v3895 = vpop.permute.xlu0 %3894
  %3896 = vrot.lane.b32.xlu0 %v2796, 48
  %v3897 = vpop.permute.xlu0 %3896
  %3898 = vrot.lane.b32.xlu0 %v2797, 48
  %v3899 = vpop.permute.xlu0 %3898
  %3900 = vrot.lane.b32.xlu0 %v2798, 48
  %v3901 = vpop.permute.xlu0 %3900
  %3902 = vrot.lane.b32.xlu0 %v2799, 48
  %v3903 = vpop.permute.xlu0 %3902
  %3904 = vrot.lane.b32.xlu0 %v2800, 48
  %v3905 = vpop.permute.xlu0 %3904
  %3906 = vrot.lane.b32.xlu0 %v2801, 48
  %v3907 = vpop.permute.xlu0 %3906
  %3908 = vrot.lane.b32.xlu0 %v2802, 48
  %v3909 = vpop.permute.xlu0 %3908
  %3910 = vrot.lane.b32.xlu0 %v2803, 48
  %v3911 = vpop.permute.xlu0 %3910
  %3912 = vrot.lane.b32.xlu0 %v2804, 48
  %v3913 = vpop.permute.xlu0 %3912
  %3914 = vrot.lane.b32.xlu0 %v2805, 48
  %v3915 = vpop.permute.xlu0 %3914
  %v3929 = vsel %vm354, %v3880, 0
  %v3932 = vsel %vm354, %v3881, 0
  %v3935 = vsel %vm354, %v3882, 0
  %v3938 = vsel %vm354, %v3883, 0
  %v3941 = vsel %vm354, %v3884, 0
  %v3944 = vsel %vm354, %v3885, 0
  %v3947 = vsel %vm354, %v3886, 0
  %v3950 = vsel %vm354, %v3887, 0
  %v3953 = vsel %vm354, %v3888, 0
  %v3956 = vsel %vm354, %v3889, 0
  %v3959 = vsel %vm354, %v3890, 0
  %v3962 = vsel %vm354, %v3891, 0
  %3964 = vmatprep.subr.mxu0 0.0
  %3965 = vmatpush1.msra.mxu0 %v3893
  %3966 = vmatprep.subr.mxu0 0.0
  %3967 = vmatpush1.msra.mxu0 %v3895
  %3968 = vmatprep.subr.mxu0 0.0
  %3969 = vmatpush1.msra.mxu0 %v3897
  %3970 = vmatprep.subr.mxu0 0.0
  %3971 = vmatpush1.msra.mxu0 %v3899
  %3972 = vmatprep.subr.mxu0 0.0
  %3973 = vmatpush1.msra.mxu0 %v3901
  %3974 = vmatprep.subr.mxu0 0.0
  %3975 = vmatpush1.msra.mxu0 %v3903
  %3976 = vmatprep.subr.mxu0 0.0
  %3977 = vmatpush1.msra.mxu0 %v3905
  %3978 = vmatprep.subr.mxu0 0.0
  %3979 = vmatpush1.msra.mxu0 %v3907
  %3980 = vmatprep.subr.mxu0 0.0
  %3981 = vmatpush1.msra.mxu0 %v3909
  %3982 = vmatprep.subr.mxu0 0.0
  %3983 = vmatpush1.msra.mxu0 %v3911
  %3984 = vmatprep.subr.mxu0 0.0
  %3985 = vmatpush1.msra.mxu0 %v3913
  %3986 = vmatprep.subr.mxu0 0.0
  %3987 = vmatpush1.msra.mxu0 %v3915
  %3988 = vmatprep.subr.mxu0 0.0
  %3989 = vmatpush1.msra.mxu0 0.0
  %3990 = vmatprep.subr.mxu0 0.0
  %3991 = vmatpush1.msra.mxu0 0.0
  %3992 = vmatprep.subr.mxu0 0.0
  %3993 = vmatpush1.msra.mxu0 0.0
  %3994 = vmatprep.subr.mxu0 0.0
  %3995 = vmatpush1.msra.mxu0 0.0
  %3996 = vmatprep.subr.mxu0 0.0
  %3997 = vmatpush1.msra.mxu0 0.0
  %3998 = vmatprep.subr.mxu0 0.0
  %3999 = vmatpush1.msra.mxu0 0.0
  %4000 = vmatprep.subr.mxu0 0.0
  %4001 = vmatpush1.msra.mxu0 0.0
  %4002 = vmatprep.subr.mxu0 0.0
  %4003 = vmatpush1.msra.mxu0 0.0
  %4004 = vmatprep.subr.mxu0 0.0
  %4005 = vmatpush1.msra.mxu0 0.0
  %4006 = vmatprep.subr.mxu0 0.0
  %4007 = vmatpush1.msra.mxu0 0.0
  %4008 = vmatprep.subr.mxu0 0.0
  %4009 = vmatpush1.msra.mxu0 0.0
  %4010 = vmatprep.subr.mxu0 0.0
  %4011 = vmatpush1.msra.mxu0 0.0
  %4012 = vmatprep.subr.mxu0 0.0
  %4013 = vmatpush1.msra.mxu0 0.0
  %4014 = vmatprep.subr.mxu0 0.0
  %4015 = vmatpush1.msra.mxu0 0.0
  %4016 = vmatprep.subr.mxu0 0.0
  %4017 = vmatpush1.msra.mxu0 0.0
  %4018 = vmatprep.subr.mxu0 0.0
  %4019 = vmatpush1.msra.mxu0 0.0
  %4020 = vmatprep.subr.mxu0 0.0
  %4021 = vmatpush1.msra.mxu0 0.0
  %4022 = vmatprep.subr.mxu0 0.0
  %4023 = vmatpush1.msra.mxu0 0.0
  %4024 = vmatprep.subr.mxu0 0.0
  %4025 = vmatpush1.msra.mxu0 0.0
  %4026 = vmatprep.subr.mxu0 0.0
  %4027 = vmatpush1.msra.mxu0 0.0
  %4028 = vmatprep.mubr.f32.mxu0 0.0
  %4029 = vmatmul.mubr.f32.gmra.mrb[0].mxu0 %v3929
  %v4030 = vpop.f32.mrb[0].mxu0
  %v4031 = vadd.f32 0.0, %v4030
  %v4032 = vpop.f32.mrb[0].mxu0
  %4033 = vmatprep.mubr.f32.mxu0 0.0
  %4034 = vmatmul.mubr.f32.gmra.mrb[0].mxu0 %v3932
  %v4035 = vpop.f32.mrb[0].mxu0
  %v4036 = vadd.f32 0.0, %v4035
  %v4037 = vpop.f32.mrb[0].mxu0
  %4038 = vmatprep.mubr.f32.mxu0 0.0
  %4039 = vmatmul.mubr.f32.gmra.mrb[0].mxu0 %v3935
  %v4040 = vpop.f32.mrb[0].mxu0
  %v4041 = vadd.f32 0.0, %v4040
  %v4042 = vpop.f32.mrb[0].mxu0
  %4043 = vmatprep.mubr.f32.mxu0 0.0
  %4044 = vmatmul.mubr.f32.gmra.mrb[0].mxu0 %v3938
  %v4045 = vpop.f32.mrb[0].mxu0
  %v4046 = vadd.f32 0.0, %v4045
  %v4047 = vpop.f32.mrb[0].mxu0
  %4048 = vmatprep.mubr.f32.mxu0 0.0
  %4049 = vmatmul.mubr.f32.gmra.mrb[0].mxu0 %v3941
  %v4050 = vpop.f32.mrb[0].mxu0
  %v4051 = vadd.f32 0.0, %v4050
  %v4052 = vpop.f32.mrb[0].mxu0
  %4053 = vmatprep.mubr.f32.mxu0 0.0
  %4054 = vmatmul.mubr.f32.gmra.mrb[0].mxu0 %v3944
  %v4055 = vpop.f32.mrb[0].mxu0
  %v4056 = vadd.f32 0.0, %v4055
  %v4057 = vpop.f32.mrb[0].mxu0
  %4058 = vmatprep.mubr.f32.mxu0 0.0
  %4059 = vmatmul.mubr.f32.gmra.mrb[0].mxu0 %v3947
  %v4060 = vpop.f32.mrb[0].mxu0
  %v4061 = vadd.f32 0.0, %v4060
  %v4062 = vpop.f32.mrb[0].mxu0
  %4063 = vmatprep.mubr.f32.mxu0 0.0
  %4064 = vmatmul.mubr.f32.gmra.mrb[0].mxu0 %v3950
  %v4065 = vpop.f32.mrb[0].mxu0
  %v4066 = vadd.f32 0.0, %v4065
  %v4067 = vpop.f32.mrb[0].mxu0
  %4068 = vmatprep.mubr.f32.mxu0 0.0
  %4069 = vmatmul.mubr.f32.gmra.mrb[0].mxu0 %v3953
  %v4070 = vpop.f32.mrb[0].mxu0
  %v4071 = vadd.f32 0.0, %v4070
  %v4072 = vpop.f32.mrb[0].mxu0
  %4073 = vmatprep.mubr.f32.mxu0 0.0
  %4074 = vmatmul.mubr.f32.gmra.mrb[0].mxu0 %v3956
  %v4075 = vpop.f32.mrb[0].mxu0
  %v4076 = vadd.f32 0.0, %v4075
  %v4077 = vpop.f32.mrb[0].mxu0
  %4078 = vmatprep.mubr.f32.mxu0 0.0
  %4079 = vmatmul.mubr.f32.gmra.mrb[0].mxu0 %v3959
  %v4080 = vpop.f32.mrb[0].mxu0
  %v4081 = vadd.f32 0.0, %v4080
  %v4082 = vpop.f32.mrb[0].mxu0
  %4083 = vmatprep.mubr.f32.mxu0 0.0
  %4084 = vmatmul.mubr.f32.gmra.mrb[0].mxu0 %v3962
  %v4085 = vpop.f32.mrb[0].mxu0
  %v4086 = vadd.f32 0.0, %v4085
  %v4087 = vpop.f32.mrb[0].mxu0
  %4088 = vdwg.mxu0
  %v4089 = vld [vmem:[%s2455 + $0x20] sm:$0xff]
  %v4090 = vld [vmem:[%s2455 + $0x30] sm:$0xff]
  %4093 = vrot.lane.b32.xlu0 %v4089, 32
  %v4094 = vpop.permute.xlu0 %4093
  %4095 = vrot.lane.b32.xlu0 %v4090, 32
  %v4096 = vpop.permute.xlu0 %4095
  %v4100 = vsel %vm427, %v4031, 0
  %v4103 = vsel %vm427, %v4036, 0
  %v4106 = vsel %vm427, %v4041, 0
  %v4109 = vsel %vm427, %v4046, 0
  %v4112 = vsel %vm427, %v4051, 0
  %v4115 = vsel %vm427, %v4056, 0
  %v4118 = vsel %vm427, %v4061, 0
  %v4121 = vsel %vm427, %v4066, 0
  %v4124 = vsel %vm427, %v4071, 0
  %v4127 = vsel %vm427, %v4076, 0
  %v4130 = vsel %vm427, %v4081, 0
  %v4133 = vsel %vm427, %v4086, 0
  %4135 = vmatprep.subr.mxu0 0.0
  %4136 = vmatpush1.msra.mxu0 %v4094
  %4137 = vmatprep.subr.mxu0 0.0
  %4138 = vmatpush1.msra.mxu0 %v4096
  %4139 = vmatprep.subr.mxu0 0.0
  %4140 = vmatpush1.msra.mxu0 0.0
  %4141 = vmatprep.subr.mxu0 0.0
  %4142 = vmatpush1.msra.mxu0 0.0
  %4143 = vmatprep.subr.mxu0 0.0
  %4144 = vmatpush1.msra.mxu0 0.0
  %4145 = vmatprep.subr.mxu0 0.0
  %4146 = vmatpush1.msra.mxu0 0.0
  %4147 = vmatprep.subr.mxu0 0.0
  %4148 = vmatpush1.msra.mxu0 0.0
  %4149 = vmatprep.subr.mxu0 0.0
  %4150 = vmatpush1.msra.mxu0 0.0
  %4151 = vmatprep.subr.mxu0 0.0
  %4152 = vmatpush1.msra.mxu0 0.0
  %4153 = vmatprep.subr.mxu0 0.0
  %4154 = vmatpush1.msra.mxu0 0.0
  %4155 = vmatprep.subr.mxu0 0.0
  %4156 = vmatpush1.msra.mxu0 0.0
  %4157 = vmatprep.subr.mxu0 0.0
  %4158 = vmatpush1.msra.mxu0 0.0
  %4159 = vmatprep.subr.mxu0 0.0
  %4160 = vmatpush1.msra.mxu0 0.0
  %4161 = vmatprep.subr.mxu0 0.0
  %4162 = vmatpush1.msra.mxu0 0.0
  %4163 = vmatprep.subr.mxu0 0.0
  %4164 = vmatpush1.msra.mxu0 0.0
  %4165 = vmatprep.subr.mxu0 0.0
  %4166 = vmatpush1.msra.mxu0 0.0
  %4167 = vmatprep.subr.mxu0 0.0
  %4168 = vmatpush1.msra.mxu0 0.0
  %4169 = vmatprep.subr.mxu0 0.0
  %4170 = vmatpush1.msra.mxu0 0.0
  %4171 = vmatprep.subr.mxu0 0.0
  %4172 = vmatpush1.msra.mxu0 0.0
  %4173 = vmatprep.subr.mxu0 0.0
  %4174 = vmatpush1.msra.mxu0 0.0
  %4175 = vmatprep.subr.mxu0 0.0
  %4176 = vmatpush1.msra.mxu0 0.0
  %4177 = vmatprep.subr.mxu0 0.0
  %4178 = vmatpush1.msra.mxu0 0.0
  %4179 = vmatprep.subr.mxu0 0.0
  %4180 = vmatpush1.msra.mxu0 0.0
  %4181 = vmatprep.subr.mxu0 0.0
  %4182 = vmatpush1.msra.mxu0 0.0
  %4183 = vmatprep.subr.mxu0 0.0
  %4184 = vmatpush1.msra.mxu0 0.0
  %4185 = vmatprep.subr.mxu0 0.0
  %4186 = vmatpush1.msra.mxu0 0.0
  %4187 = vmatprep.subr.mxu0 0.0
  %4188 = vmatpush1.msra.mxu0 0.0
  %4189 = vmatprep.subr.mxu0 0.0
  %4190 = vmatpush1.msra.mxu0 0.0
  %4191 = vmatprep.subr.mxu0 0.0
  %4192 = vmatpush1.msra.mxu0 0.0
  %4193 = vmatprep.subr.mxu0 0.0
  %4194 = vmatpush1.msra.mxu0 0.0
  %4195 = vmatprep.subr.mxu0 0.0
  %4196 = vmatpush1.msra.mxu0 0.0
  %4197 = vmatprep.subr.mxu0 0.0
  %4198 = vmatpush1.msra.mxu0 0.0
  %4199 = vmatprep.mubr.f32.mxu0 0.0
  %4200 = vmatmul.mubr.f32.gmra.mrb[0].mxu0 %v4100
  %v4201 = vpop.f32.mrb[0].mxu0
  %v4202 = vadd.f32 0.0, %v4201
  %v4203 = vpop.f32.mrb[0].mxu0
  %4204 = vmatprep.mubr.f32.mxu0 0.0
  %4205 = vmatmul.mubr.f32.gmra.mrb[0].mxu0 %v4103
  %v4206 = vpop.f32.mrb[0].mxu0
  %v4207 = vadd.f32 0.0, %v4206
  %v4208 = vpop.f32.mrb[0].mxu0
  %4209 = vmatprep.mubr.f32.mxu0 0.0
  %4210 = vmatmul.mubr.f32.gmra.mrb[0].mxu0 %v4106
  %v4211 = vpop.f32.mrb[0].mxu0
  %v4212 = vadd.f32 0.0, %v4211
  %v4213 = vpop.f32.mrb[0].mxu0
  %4214 = vmatprep.mubr.f32.mxu0 0.0
  %4215 = vmatmul.mubr.f32.gmra.mrb[0].mxu0 %v4109
  %v4216 = vpop.f32.mrb[0].mxu0
  %v4217 = vadd.f32 0.0, %v4216
  %v4218 = vpop.f32.mrb[0].mxu0
  %4219 = vmatprep.mubr.f32.mxu0 0.0
  %4220 = vmatmul.mubr.f32.gmra.mrb[0].mxu0 %v4112
  %v4221 = vpop.f32.mrb[0].mxu0
  %v4222 = vadd.f32 0.0, %v4221
  %v4223 = vpop.f32.mrb[0].mxu0
  %4224 = vmatprep.mubr.f32.mxu0 0.0
  %4225 = vmatmul.mubr.f32.gmra.mrb[0].mxu0 %v4115
  %v4226 = vpop.f32.mrb[0].mxu0
  %v4227 = vadd.f32 0.0, %v4226
  %v4228 = vpop.f32.mrb[0].mxu0
  %4229 = vmatprep.mubr.f32.mxu0 0.0
  %4230 = vmatmul.mubr.f32.gmra.mrb[0].mxu0 %v4118
  %v4231 = vpop.f32.mrb[0].mxu0
  %v4232 = vadd.f32 0.0, %v4231
  %v4233 = vpop.f32.mrb[0].mxu0
  %4234 = vmatprep.mubr.f32.mxu0 0.0
  %4235 = vmatmul.mubr.f32.gmra.mrb[0].mxu0 %v4121
  %v4236 = vpop.f32.mrb[0].mxu0
  %v4237 = vadd.f32 0.0, %v4236
  %v4238 = vpop.f32.mrb[0].mxu0
  %4239 = vmatprep.mubr.f32.mxu0 0.0
  %4240 = vmatmul.mubr.f32.gmra.mrb[0].mxu0 %v4124
  %v4241 = vpop.f32.mrb[0].mxu0
  %v4242 = vadd.f32 0.0, %v4241
  %v4243 = vpop.f32.mrb[0].mxu0
  %4244 = vmatprep.mubr.f32.mxu0 0.0
  %4245 = vmatmul.mubr.f32.gmra.mrb[0].mxu0 %v4127
  %v4246 = vpop.f32.mrb[0].mxu0
  %v4247 = vadd.f32 0.0, %v4246
  %v4248 = vpop.f32.mrb[0].mxu0
  %4249 = vmatprep.mubr.f32.mxu0 0.0
  %4250 = vmatmul.mubr.f32.gmra.mrb[0].mxu0 %v4130
  %v4251 = vpop.f32.mrb[0].mxu0
  %v4252 = vadd.f32 0.0, %v4251
  %v4253 = vpop.f32.mrb[0].mxu0
  %4254 = vmatprep.mubr.f32.mxu0 0.0
  %4255 = vmatmul.mubr.f32.gmra.mrb[0].mxu0 %v4133
  %v4256 = vpop.f32.mrb[0].mxu0
  %v4257 = vadd.f32 0.0, %v4256
  %v4258 = vpop.f32.mrb[0].mxu0
  %4259 = vdwg.mxu0
  %v4260 = vadd.f32 %v3527, %v4202
  %v4261 = vadd.f32 %v3528, %v4207
  %v4262 = vadd.f32 %v3529, %v4212
  %v4263 = vadd.f32 %v3530, %v4217
  %v4264 = vadd.f32 %v3531, %v4222
  %v4265 = vadd.f32 %v3532, %v4227
  %v4266 = vadd.f32 %v3533, %v4232
  %v4267 = vadd.f32 %v3534, %v4237
  %v4268 = vadd.f32 %v3535, %v4242
  %v4269 = vadd.f32 %v3536, %v4247
  %v4270 = vadd.f32 %v3537, %v4252
  %v4271 = vadd.f32 %v3538, %v4257
  %v4272 = vld [vmem:[%s2 + $0xc5] sm:$0x1]
  %v4273 = vlaneseq
  %v4274 = vshrl.u32 %v4273, 7
  %v4275 = vsub.s32 0, %v4274
  %v4276 = vrot.slane %v4272, %v4275
  %v4277 = vadd.f32 %v4260, %v4276
  %v4278 = vadd.f32 %v4261, %v4276
  %v4279 = vadd.f32 %v4262, %v4276
  %v4280 = vadd.f32 %v4263, %v4276
  %v4281 = vadd.f32 %v4264, %v4276
  %v4282 = vadd.f32 %v4265, %v4276
  %v4283 = vadd.f32 %v4266, %v4276
  %v4284 = vadd.f32 %v4267, %v4276
  %v4285 = vadd.f32 %v4268, %v4276
  %v4286 = vadd.f32 %v4269, %v4276
  %v4287 = vadd.f32 %v4270, %v4276
  %v4288 = vadd.f32 %v4271, %v4276
  %v4289 = vld [vmem:[%s2455 + $0x8] sm:$0xff]
  %v4290 = vld [vmem:[%s2455 + $0x18] sm:$0xff]
  %v4291 = vld [vmem:[%s2455 + $0x28] sm:$0xff]
  %v4292 = vld [vmem:[%s2455 + $0x38] sm:$0xff]
  %v4293 = vld [vmem:[%s2 + $0xc6] sm:$0x1]
  %v4294 = vsel %vm31, %v4277, 0.0
  %4295 = vadd.xlane.f32.xlu0 %v4294
  %v4296 = vpop.xlane.xlu0 %4295
  %v4297 = vsel %vm31, %v4278, 0.0
  %4298 = vadd.xlane.f32.xlu0 %v4297
  %v4299 = vpop.xlane.xlu0 %4298
  %v4300 = vsel %vm31, %v4279, 0.0
  %4301 = vadd.xlane.f32.xlu0 %v4300
  %v4302 = vpop.xlane.xlu0 %4301
  %v4303 = vsel %vm31, %v4280, 0.0
  %4304 = vadd.xlane.f32.xlu0 %v4303
  %v4305 = vpop.xlane.xlu0 %4304
  %v4306 = vsel %vm31, %v4281, 0.0
  %4307 = vadd.xlane.f32.xlu0 %v4306
  %v4308 = vpop.xlane.xlu0 %4307
  %v4309 = vsel %vm31, %v4282, 0.0
  %4310 = vadd.xlane.f32.xlu0 %v4309
  %v4311 = vpop.xlane.xlu0 %4310
  %v4312 = vsel %vm31, %v4283, 0.0
  %4313 = vadd.xlane.f32.xlu0 %v4312
  %v4314 = vpop.xlane.xlu0 %4313
  %v4315 = vsel %vm31, %v4284, 0.0
  %4316 = vadd.xlane.f32.xlu0 %v4315
  %v4317 = vpop.xlane.xlu0 %4316
  %v4318 = vsel %vm31, %v4285, 0.0
  %4319 = vadd.xlane.f32.xlu0 %v4318
  %v4320 = vpop.xlane.xlu0 %4319
  %v4321 = vsel %vm31, %v4286, 0.0
  %4322 = vadd.xlane.f32.xlu0 %v4321
  %v4323 = vpop.xlane.xlu0 %4322
  %v4324 = vsel %vm31, %v4287, 0.0
  %4325 = vadd.xlane.f32.xlu0 %v4324
  %v4326 = vpop.xlane.xlu0 %4325
  %v4327 = vsel %vm31, %v4288, 0.0
  %4328 = vadd.xlane.f32.xlu0 %v4327
  %v4329 = vpop.xlane.xlu0 %4328
  %v4330 = vmul.f32 %v4296, %v68
  %v4331 = vmul.f32 %v4299, %v68
  %v4332 = vmul.f32 %v4302, %v68
  %v4333 = vmul.f32 %v4305, %v68
  %v4334 = vmul.f32 %v4308, %v68
  %v4335 = vmul.f32 %v4311, %v68
  %v4336 = vmul.f32 %v4314, %v68
  %v4337 = vmul.f32 %v4317, %v68
  %v4338 = vmul.f32 %v4320, %v68
  %v4339 = vmul.f32 %v4323, %v68
  %v4340 = vmul.f32 %v4326, %v68
  %v4341 = vmul.f32 %v4329, %v68
  %v4342 = vsub.f32 %v4277, %v4330
  %v4343 = vsub.f32 %v4278, %v4331
  %v4344 = vsub.f32 %v4279, %v4332
  %v4345 = vsub.f32 %v4280, %v4333
  %v4346 = vsub.f32 %v4281, %v4334
  %v4347 = vsub.f32 %v4282, %v4335
  %v4348 = vsub.f32 %v4283, %v4336
  %v4349 = vsub.f32 %v4284, %v4337
  %v4350 = vsub.f32 %v4285, %v4338
  %v4351 = vsub.f32 %v4286, %v4339
  %v4352 = vsub.f32 %v4287, %v4340
  %v4353 = vsub.f32 %v4288, %v4341
  %v4354 = vmul.f32 %v4342, %v4342
  %v4355 = vmul.f32 %v4343, %v4343
  %v4356 = vmul.f32 %v4344, %v4344
  %v4357 = vmul.f32 %v4345, %v4345
  %v4358 = vmul.f32 %v4346, %v4346
  %v4359 = vmul.f32 %v4347, %v4347
  %v4360 = vmul.f32 %v4348, %v4348
  %v4361 = vmul.f32 %v4349, %v4349
  %v4362 = vmul.f32 %v4350, %v4350
  %v4363 = vmul.f32 %v4351, %v4351
  %v4364 = vmul.f32 %v4352, %v4352
  %v4365 = vmul.f32 %v4353, %v4353
  %v4366 = vsel %vm31, %v4354, 0.0
  %4367 = vadd.xlane.f32.xlu0 %v4366
  %v4368 = vpop.xlane.xlu0 %4367
  %v4369 = vsel %vm31, %v4355, 0.0
  %4370 = vadd.xlane.f32.xlu0 %v4369
  %v4371 = vpop.xlane.xlu0 %4370
  %v4372 = vsel %vm31, %v4356, 0.0
  %4373 = vadd.xlane.f32.xlu0 %v4372
  %v4374 = vpop.xlane.xlu0 %4373
  %v4375 = vsel %vm31, %v4357, 0.0
  %4376 = vadd.xlane.f32.xlu0 %v4375
  %v4377 = vpop.xlane.xlu0 %4376
  %v4378 = vsel %vm31, %v4358, 0.0
  %4379 = vadd.xlane.f32.xlu0 %v4378
  %v4380 = vpop.xlane.xlu0 %4379
  %v4381 = vsel %vm31, %v4359, 0.0
  %4382 = vadd.xlane.f32.xlu0 %v4381
  %v4383 = vpop.xlane.xlu0 %4382
  %v4384 = vsel %vm31, %v4360, 0.0
  %4385 = vadd.xlane.f32.xlu0 %v4384
  %v4386 = vpop.xlane.xlu0 %4385
  %v4387 = vsel %vm31, %v4361, 0.0
  %4388 = vadd.xlane.f32.xlu0 %v4387
  %v4389 = vpop.xlane.xlu0 %4388
  %v4390 = vsel %vm31, %v4362, 0.0
  %4391 = vadd.xlane.f32.xlu0 %v4390
  %v4392 = vpop.xlane.xlu0 %4391
  %v4393 = vsel %vm31, %v4363, 0.0
  %4394 = vadd.xlane.f32.xlu0 %v4393
  %v4395 = vpop.xlane.xlu0 %4394
  %v4396 = vsel %vm31, %v4364, 0.0
  %4397 = vadd.xlane.f32.xlu0 %v4396
  %v4398 = vpop.xlane.xlu0 %4397
  %v4399 = vsel %vm31, %v4365, 0.0
  %4400 = vadd.xlane.f32.xlu0 %v4399
  %v4401 = vpop.xlane.xlu0 %4400
  %v4402 = vmul.f32 %v4368, %v68
  %v4403 = vmul.f32 %v4371, %v68
  %v4404 = vmul.f32 %v4374, %v68
  %v4405 = vmul.f32 %v4377, %v68
  %v4406 = vmul.f32 %v4380, %v68
  %v4407 = vmul.f32 %v4383, %v68
  %v4408 = vmul.f32 %v4386, %v68
  %v4409 = vmul.f32 %v4389, %v68
  %v4410 = vmul.f32 %v4392, %v68
  %v4411 = vmul.f32 %v4395, %v68
  %v4412 = vmul.f32 %v4398, %v68
  %v4413 = vmul.f32 %v4401, %v68
  %v4414 = vadd.f32 %v4402, 1e-05
  %v4415 = vadd.f32 %v4403, 1e-05
  %v4416 = vadd.f32 %v4404, 1e-05
  %v4417 = vadd.f32 %v4405, 1e-05
  %v4418 = vadd.f32 %v4406, 1e-05
  %v4419 = vadd.f32 %v4407, 1e-05
  %v4420 = vadd.f32 %v4408, 1e-05
  %v4421 = vadd.f32 %v4409, 1e-05
  %v4422 = vadd.f32 %v4410, 1e-05
  %v4423 = vadd.f32 %v4411, 1e-05
  %v4424 = vadd.f32 %v4412, 1e-05
  %v4425 = vadd.f32 %v4413, 1e-05
  %v4426 = vrsqrt.pop %v4414
  %v4427 = vrsqrt.pop %v4415
  %v4428 = vrsqrt.pop %v4416
  %v4429 = vrsqrt.pop %v4417
  %v4430 = vrsqrt.pop %v4418
  %v4431 = vrsqrt.pop %v4419
  %v4432 = vrsqrt.pop %v4420
  %v4433 = vrsqrt.pop %v4421
  %v4434 = vrsqrt.pop %v4422
  %v4435 = vrsqrt.pop %v4423
  %v4436 = vrsqrt.pop %v4424
  %v4437 = vrsqrt.pop %v4425
  %v4438 = vmul.f32 %v4342, %v4426
  %v4439 = vmul.f32 %v4343, %v4427
  %v4440 = vmul.f32 %v4344, %v4428
  %v4441 = vmul.f32 %v4345, %v4429
  %v4442 = vmul.f32 %v4346, %v4430
  %v4443 = vmul.f32 %v4347, %v4431
  %v4444 = vmul.f32 %v4348, %v4432
  %v4445 = vmul.f32 %v4349, %v4433
  %v4446 = vmul.f32 %v4350, %v4434
  %v4447 = vmul.f32 %v4351, %v4435
  %v4448 = vmul.f32 %v4352, %v4436
  %v4449 = vmul.f32 %v4353, %v4437
  %v4450 = vlaneseq
  %v4451 = vshrl.u32 %v4450, 7
  %v4452 = vsub.s32 0, %v4451
  %v4453 = vrot.slane %v4293, %v4452
  %v4455 = vsel %vm31, %v4438, 0
  %v4458 = vsel %vm31, %v4439, 0
  %v4461 = vsel %vm31, %v4440, 0
  %v4464 = vsel %vm31, %v4441, 0
  %v4467 = vsel %vm31, %v4442, 0
  %v4470 = vsel %vm31, %v4443, 0
  %v4473 = vsel %vm31, %v4444, 0
  %v4476 = vsel %vm31, %v4445, 0
  %v4479 = vsel %vm31, %v4446, 0
  %v4482 = vsel %vm31, %v4447, 0
  %v4485 = vsel %vm31, %v4448, 0
  %v4488 = vsel %vm31, %v4449, 0
  %4490 = vmatprep.subr.mxu0 0.0
  %4491 = vmatpush1.msra.mxu0 %v4289
  %4492 = vmatprep.subr.mxu0 0.0
  %4493 = vmatpush1.msra.mxu0 %v4290
  %4494 = vmatprep.subr.mxu0 0.0
  %4495 = vmatpush1.msra.mxu0 %v4291
  %4496 = vmatprep.subr.mxu0 0.0
  %4497 = vmatpush1.msra.mxu0 %v4292
  %4498 = vmatprep.subr.mxu0 0.0
  %4499 = vmatpush1.msra.mxu0 0.0
  %4500 = vmatprep.subr.mxu0 0.0
  %4501 = vmatpush1.msra.mxu0 0.0
  %4502 = vmatprep.subr.mxu0 0.0
  %4503 = vmatpush1.msra.mxu0 0.0
  %4504 = vmatprep.subr.mxu0 0.0
  %4505 = vmatpush1.msra.mxu0 0.0
  %4506 = vmatprep.subr.mxu0 0.0
  %4507 = vmatpush1.msra.mxu0 0.0
  %4508 = vmatprep.subr.mxu0 0.0
  %4509 = vmatpush1.msra.mxu0 0.0
  %4510 = vmatprep.subr.mxu0 0.0
  %4511 = vmatpush1.msra.mxu0 0.0
  %4512 = vmatprep.subr.mxu0 0.0
  %4513 = vmatpush1.msra.mxu0 0.0
  %4514 = vmatprep.subr.mxu0 0.0
  %4515 = vmatpush1.msra.mxu0 0.0
  %4516 = vmatprep.subr.mxu0 0.0
  %4517 = vmatpush1.msra.mxu0 0.0
  %4518 = vmatprep.subr.mxu0 0.0
  %4519 = vmatpush1.msra.mxu0 0.0
  %4520 = vmatprep.subr.mxu0 0.0
  %4521 = vmatpush1.msra.mxu0 0.0
  %4522 = vmatprep.subr.mxu0 0.0
  %4523 = vmatpush1.msra.mxu0 0.0
  %4524 = vmatprep.subr.mxu0 0.0
  %4525 = vmatpush1.msra.mxu0 0.0
  %4526 = vmatprep.subr.mxu0 0.0
  %4527 = vmatpush1.msra.mxu0 0.0
  %4528 = vmatprep.subr.mxu0 0.0
  %4529 = vmatpush1.msra.mxu0 0.0
  %4530 = vmatprep.subr.mxu0 0.0
  %4531 = vmatpush1.msra.mxu0 0.0
  %4532 = vmatprep.subr.mxu0 0.0
  %4533 = vmatpush1.msra.mxu0 0.0
  %4534 = vmatprep.subr.mxu0 0.0
  %4535 = vmatpush1.msra.mxu0 0.0
  %4536 = vmatprep.subr.mxu0 0.0
  %4537 = vmatpush1.msra.mxu0 0.0
  %4538 = vmatprep.subr.mxu0 0.0
  %4539 = vmatpush1.msra.mxu0 0.0
  %4540 = vmatprep.subr.mxu0 0.0
  %4541 = vmatpush1.msra.mxu0 0.0
  %4542 = vmatprep.subr.mxu0 0.0
  %4543 = vmatpush1.msra.mxu0 0.0
  %4544 = vmatprep.subr.mxu0 0.0
  %4545 = vmatpush1.msra.mxu0 0.0
  %4546 = vmatprep.subr.mxu0 0.0
  %4547 = vmatpush1.msra.mxu0 0.0
  %4548 = vmatprep.subr.mxu0 0.0
  %4549 = vmatpush1.msra.mxu0 0.0
  %4550 = vmatprep.subr.mxu0 0.0
  %4551 = vmatpush1.msra.mxu0 0.0
  %4552 = vmatprep.subr.mxu0 0.0
  %4553 = vmatpush1.msra.mxu0 0.0
  %4554 = vmatprep.mubr.f32.mxu0 0.0
  %4555 = vmatmul.mubr.f32.gmra.mrb[0].mxu0 %v4455
  %v4556 = vpop.f32.mrb[0].mxu0
  %v4557 = vadd.f32 %v4453, %v4556
  %v4558 = vpop.f32.mrb[0].mxu0
  %4559 = vmatprep.mubr.f32.mxu0 0.0
  %4560 = vmatmul.mubr.f32.gmra.mrb[0].mxu0 %v4458
  %v4561 = vpop.f32.mrb[0].mxu0
  %v4562 = vadd.f32 %v4453, %v4561
  %v4563 = vpop.f32.mrb[0].mxu0
  %4564 = vmatprep.mubr.f32.mxu0 0.0
  %4565 = vmatmul.mubr.f32.gmra.mrb[0].mxu0 %v4461
  %v4566 = vpop.f32.mrb[0].mxu0
  %v4567 = vadd.f32 %v4453, %v4566
  %v4568 = vpop.f32.mrb[0].mxu0
  %4569 = vmatprep.mubr.f32.mxu0 0.0
  %4570 = vmatmul.mubr.f32.gmra.mrb[0].mxu0 %v4464
  %v4571 = vpop.f32.mrb[0].mxu0
  %v4572 = vadd.f32 %v4453, %v4571
  %v4573 = vpop.f32.mrb[0].mxu0
  %4574 = vmatprep.mubr.f32.mxu0 0.0
  %4575 = vmatmul.mubr.f32.gmra.mrb[0].mxu0 %v4467
  %v4576 = vpop.f32.mrb[0].mxu0
  %v4577 = vadd.f32 %v4453, %v4576
  %v4578 = vpop.f32.mrb[0].mxu0
  %4579 = vmatprep.mubr.f32.mxu0 0.0
  %4580 = vmatmul.mubr.f32.gmra.mrb[0].mxu0 %v4470
  %v4581 = vpop.f32.mrb[0].mxu0
  %v4582 = vadd.f32 %v4453, %v4581
  %v4583 = vpop.f32.mrb[0].mxu0
  %4584 = vmatprep.mubr.f32.mxu0 0.0
  %4585 = vmatmul.mubr.f32.gmra.mrb[0].mxu0 %v4473
  %v4586 = vpop.f32.mrb[0].mxu0
  %v4587 = vadd.f32 %v4453, %v4586
  %v4588 = vpop.f32.mrb[0].mxu0
  %4589 = vmatprep.mubr.f32.mxu0 0.0
  %4590 = vmatmul.mubr.f32.gmra.mrb[0].mxu0 %v4476
  %v4591 = vpop.f32.mrb[0].mxu0
  %v4592 = vadd.f32 %v4453, %v4591
  %v4593 = vpop.f32.mrb[0].mxu0
  %4594 = vmatprep.mubr.f32.mxu0 0.0
  %4595 = vmatmul.mubr.f32.gmra.mrb[0].mxu0 %v4479
  %v4596 = vpop.f32.mrb[0].mxu0
  %v4597 = vadd.f32 %v4453, %v4596
  %v4598 = vpop.f32.mrb[0].mxu0
  %4599 = vmatprep.mubr.f32.mxu0 0.0
  %4600 = vmatmul.mubr.f32.gmra.mrb[0].mxu0 %v4482
  %v4601 = vpop.f32.mrb[0].mxu0
  %v4602 = vadd.f32 %v4453, %v4601
  %v4603 = vpop.f32.mrb[0].mxu0
  %4604 = vmatprep.mubr.f32.mxu0 0.0
  %4605 = vmatmul.mubr.f32.gmra.mrb[0].mxu0 %v4485
  %v4606 = vpop.f32.mrb[0].mxu0
  %v4607 = vadd.f32 %v4453, %v4606
  %v4608 = vpop.f32.mrb[0].mxu0
  %4609 = vmatprep.mubr.f32.mxu0 0.0
  %4610 = vmatmul.mubr.f32.gmra.mrb[0].mxu0 %v4488
  %v4611 = vpop.f32.mrb[0].mxu0
  %v4612 = vadd.f32 %v4453, %v4611
  %v4613 = vpop.f32.mrb[0].mxu0
  %4614 = vdwg.mxu0
  %v4615 = vmul.f32 %v4557, %v4557
  %v4616 = vmul.f32 %v4562, %v4562
  %v4617 = vmul.f32 %v4567, %v4567
  %v4618 = vmul.f32 %v4572, %v4572
  %v4619 = vmul.f32 %v4577, %v4577
  %v4620 = vmul.f32 %v4582, %v4582
  %v4621 = vmul.f32 %v4587, %v4587
  %v4622 = vmul.f32 %v4592, %v4592
  %v4623 = vmul.f32 %v4597, %v4597
  %v4624 = vmul.f32 %v4602, %v4602
  %v4625 = vmul.f32 %v4607, %v4607
  %v4626 = vmul.f32 %v4612, %v4612
  %v4627 = vmul.f32 %v4557, %v4615
  %v4628 = vmul.f32 %v4562, %v4616
  %v4629 = vmul.f32 %v4567, %v4617
  %v4630 = vmul.f32 %v4572, %v4618
  %v4631 = vmul.f32 %v4577, %v4619
  %v4632 = vmul.f32 %v4582, %v4620
  %v4633 = vmul.f32 %v4587, %v4621
  %v4634 = vmul.f32 %v4592, %v4622
  %v4635 = vmul.f32 %v4597, %v4623
  %v4636 = vmul.f32 %v4602, %v4624
  %v4637 = vmul.f32 %v4607, %v4625
  %v4638 = vmul.f32 %v4612, %v4626
  %v4639 = vmul.f32 %v4627, 0.044715
  %v4640 = vmul.f32 %v4628, 0.044715
  %v4641 = vmul.f32 %v4629, 0.044715
  %v4642 = vmul.f32 %v4630, 0.044715
  %v4643 = vmul.f32 %v4631, 0.044715
  %v4644 = vmul.f32 %v4632, 0.044715
  %v4645 = vmul.f32 %v4633, 0.044715
  %v4646 = vmul.f32 %v4634, 0.044715
  %v4647 = vmul.f32 %v4635, 0.044715
  %v4648 = vmul.f32 %v4636, 0.044715
  %v4649 = vmul.f32 %v4637, 0.044715
  %v4650 = vmul.f32 %v4638, 0.044715
  %v4651 = vadd.f32 %v4557, %v4639
  %v4652 = vadd.f32 %v4562, %v4640
  %v4653 = vadd.f32 %v4567, %v4641
  %v4654 = vadd.f32 %v4572, %v4642
  %v4655 = vadd.f32 %v4577, %v4643
  %v4656 = vadd.f32 %v4582, %v4644
  %v4657 = vadd.f32 %v4587, %v4645
  %v4658 = vadd.f32 %v4592, %v4646
  %v4659 = vadd.f32 %v4597, %v4647
  %v4660 = vadd.f32 %v4602, %v4648
  %v4661 = vadd.f32 %v4607, %v4649
  %v4662 = vadd.f32 %v4612, %v4650
  %v4663 = vmul.f32 %v4651, 0.7978846
  %v4664 = vmul.f32 %v4652, 0.7978846
  %v4665 = vmul.f32 %v4653, 0.7978846
  %v4666 = vmul.f32 %v4654, 0.7978846
  %v4667 = vmul.f32 %v4655, 0.7978846
  %v4668 = vmul.f32 %v4656, 0.7978846
  %v4669 = vmul.f32 %v4657, 0.7978846
  %v4670 = vmul.f32 %v4658, 0.7978846
  %v4671 = vmul.f32 %v4659, 0.7978846
  %v4672 = vmul.f32 %v4660, 0.7978846
  %v4673 = vmul.f32 %v4661, 0.7978846
  %v4674 = vmul.f32 %v4662, 0.7978846
  %v4675 = vtanh.pop %v4663
  %v4676 = vtanh.pop %v4664
  %v4677 = vtanh.pop %v4665
  %v4678 = vtanh.pop %v4666
  %v4679 = vtanh.pop %v4667
  %v4680 = vtanh.pop %v4668
  %v4681 = vtanh.pop %v4669
  %v4682 = vtanh.pop %v4670
  %v4683 = vtanh.pop %v4671
  %v4684 = vtanh.pop %v4672
  %v4685 = vtanh.pop %v4673
  %v4686 = vtanh.pop %v4674
  %v4687 = vadd.f32 %v4675, 1.0
  %v4688 = vadd.f32 %v4676, 1.0
  %v4689 = vadd.f32 %v4677, 1.0
  %v4690 = vadd.f32 %v4678, 1.0
  %v4691 = vadd.f32 %v4679, 1.0
  %v4692 = vadd.f32 %v4680, 1.0
  %v4693 = vadd.f32 %v4681, 1.0
  %v4694 = vadd.f32 %v4682, 1.0
  %v4695 = vadd.f32 %v4683, 1.0
  %v4696 = vadd.f32 %v4684, 1.0
  %v4697 = vadd.f32 %v4685, 1.0
  %v4698 = vadd.f32 %v4686, 1.0
  %v4699 = vmul.f32 %v4687, 0.5
  %v4700 = vmul.f32 %v4688, 0.5
  %v4701 = vmul.f32 %v4689, 0.5
  %v4702 = vmul.f32 %v4690, 0.5
  %v4703 = vmul.f32 %v4691, 0.5
  %v4704 = vmul.f32 %v4692, 0.5
  %v4705 = vmul.f32 %v4693, 0.5
  %v4706 = vmul.f32 %v4694, 0.5
  %v4707 = vmul.f32 %v4695, 0.5
  %v4708 = vmul.f32 %v4696, 0.5
  %v4709 = vmul.f32 %v4697, 0.5
  %v4710 = vmul.f32 %v4698, 0.5
  %v4711 = vmul.f32 %v4557, %v4699
  %v4712 = vmul.f32 %v4562, %v4700
  %v4713 = vmul.f32 %v4567, %v4701
  %v4714 = vmul.f32 %v4572, %v4702
  %v4715 = vmul.f32 %v4577, %v4703
  %v4716 = vmul.f32 %v4582, %v4704
  %v4717 = vmul.f32 %v4587, %v4705
  %v4718 = vmul.f32 %v4592, %v4706
  %v4719 = vmul.f32 %v4597, %v4707
  %v4720 = vmul.f32 %v4602, %v4708
  %v4721 = vmul.f32 %v4607, %v4709
  %v4722 = vmul.f32 %v4612, %v4710
  %v4723 = vld [vmem:[%s2 + $0x80] sm:$0xff]
  %v4724 = vld [vmem:[%s2 + $0x88] sm:$0xff]
  %v4725 = vld [vmem:[%s2 + $0x90] sm:$0xff]
  %v4726 = vld [vmem:[%s2 + $0x98] sm:$0xff]
  %v4727 = vld [vmem:[%s2 + $0xc7] sm:$0x1]
  %4728 = vmatprep.subr.mxu0 0.0
  %4729 = vmatpush1.xpose.msra.mxu0 %v4723
  %4730 = vmatprep.subr.mxu0 0.0
  %4731 = vmatpush1.xpose.msra.mxu0 %v4724
  %4732 = vmatprep.subr.mxu0 0.0
  %4733 = vmatpush1.xpose.msra.mxu0 %v4725
  %4734 = vmatprep.subr.mxu0 0.0
  %4735 = vmatpush1.xpose.msra.mxu0 %v4726
  %4736 = vmatprep.subr.mxu0 0.0
  %4737 = vmatpush1.xpose.msra.mxu0 0.0
  %4738 = vmatprep.subr.mxu0 0.0
  %4739 = vmatpush1.xpose.msra.mxu0 0.0
  %4740 = vmatprep.subr.mxu0 0.0
  %4741 = vmatpush1.xpose.msra.mxu0 0.0
  %4742 = vmatprep.subr.mxu0 0.0
  %4743 = vmatpush1.xpose.msra.mxu0 0.0
  %4744 = vmatprep.subr.mxu0 0.0
  %4745 = vmatpush1.xpose.msra.mxu0 0.0
  %4746 = vmatprep.subr.mxu0 0.0
  %4747 = vmatpush1.xpose.msra.mxu0 0.0
  %4748 = vmatprep.subr.mxu0 0.0
  %4749 = vmatpush1.xpose.msra.mxu0 0.0
  %4750 = vmatprep.subr.mxu0 0.0
  %4751 = vmatpush1.xpose.msra.mxu0 0.0
  %4752 = vmatprep.subr.mxu0 0.0
  %4753 = vmatpush1.xpose.msra.mxu0 0.0
  %4754 = vmatprep.subr.mxu0 0.0
  %4755 = vmatpush1.xpose.msra.mxu0 0.0
  %4756 = vmatprep.subr.mxu0 0.0
  %4757 = vmatpush1.xpose.msra.mxu0 0.0
  %4758 = vmatprep.subr.mxu0 0.0
  %4759 = vmatpush1.xpose.msra.mxu0 0.0
  %4760 = vmatprep.subr.mxu0 0.0
  %4761 = vmatpush1.xpose.msra.mxu0 0.0
  %4762 = vmatprep.subr.mxu0 0.0
  %4763 = vmatpush1.xpose.msra.mxu0 0.0
  %4764 = vmatprep.subr.mxu0 0.0
  %4765 = vmatpush1.xpose.msra.mxu0 0.0
  %4766 = vmatprep.subr.mxu0 0.0
  %4767 = vmatpush1.xpose.msra.mxu0 0.0
  %4768 = vmatprep.subr.mxu0 0.0
  %4769 = vmatpush1.xpose.msra.mxu0 0.0
  %4770 = vmatprep.subr.mxu0 0.0
  %4771 = vmatpush1.xpose.msra.mxu0 0.0
  %4772 = vmatprep.subr.mxu0 0.0
  %4773 = vmatpush1.xpose.msra.mxu0 0.0
  %4774 = vmatprep.subr.mxu0 0.0
  %4775 = vmatpush1.xpose.msra.mxu0 0.0
  %4776 = vmatprep.subr.mxu0 0.0
  %4777 = vmatpush1.xpose.msra.mxu0 0.0
  %4778 = vmatprep.subr.mxu0 0.0
  %4779 = vmatpush1.xpose.msra.mxu0 0.0
  %4780 = vmatprep.subr.mxu0 0.0
  %4781 = vmatpush1.xpose.msra.mxu0 0.0
  %4782 = vmatprep.subr.mxu0 0.0
  %4783 = vmatpush1.xpose.msra.mxu0 0.0
  %4784 = vmatprep.subr.mxu0 0.0
  %4785 = vmatpush1.xpose.msra.mxu0 0.0
  %4786 = vmatprep.subr.mxu0 0.0
  %4787 = vmatpush1.xpose.msra.mxu0 0.0
  %4788 = vmatprep.subr.mxu0 0.0
  %4789 = vmatpush1.xpose.msra.mxu0 0.0
  %4790 = vmatprep.subr.mxu0 0.0
  %4791 = vmatpush1.xpose.msra.mxu0 0.0
  %4792 = vmatprep.mubr.f32.mxu0 0.0
  %4793 = vmatmul.mubr.f32.gmra.mrb[0].mxu0 %v4711
  %v4794 = vpop.f32.mrb[0].mxu0
  %v4795 = vadd.f32 0.0, %v4794
  %v4796 = vpop.f32.mrb[0].mxu0
  %4797 = vmatprep.mubr.f32.mxu0 0.0
  %4798 = vmatmul.mubr.f32.gmra.mrb[0].mxu0 %v4712
  %v4799 = vpop.f32.mrb[0].mxu0
  %v4800 = vadd.f32 0.0, %v4799
  %v4801 = vpop.f32.mrb[0].mxu0
  %4802 = vmatprep.mubr.f32.mxu0 0.0
  %4803 = vmatmul.mubr.f32.gmra.mrb[0].mxu0 %v4713
  %v4804 = vpop.f32.mrb[0].mxu0
  %v4805 = vadd.f32 0.0, %v4804
  %v4806 = vpop.f32.mrb[0].mxu0
  %4807 = vmatprep.mubr.f32.mxu0 0.0
  %4808 = vmatmul.mubr.f32.gmra.mrb[0].mxu0 %v4714
  %v4809 = vpop.f32.mrb[0].mxu0
  %v4810 = vadd.f32 0.0, %v4809
  %v4811 = vpop.f32.mrb[0].mxu0
  %4812 = vmatprep.mubr.f32.mxu0 0.0
  %4813 = vmatmul.mubr.f32.gmra.mrb[0].mxu0 %v4715
  %v4814 = vpop.f32.mrb[0].mxu0
  %v4815 = vpop.f32.mrb[0].mxu0
  %4816 = vmatprep.mubr.f32.mxu0 0.0
  %4817 = vmatmul.mubr.f32.gmra.mrb[0].mxu0 %v4716
  %v4818 = vpop.f32.mrb[0].mxu0
  %v4819 = vpop.f32.mrb[0].mxu0
  %4820 = vmatprep.mubr.f32.mxu0 0.0
  %4821 = vmatmul.mubr.f32.gmra.mrb[0].mxu0 %v4717
  %v4822 = vpop.f32.mrb[0].mxu0
  %v4823 = vpop.f32.mrb[0].mxu0
  %4824 = vmatprep.mubr.f32.mxu0 0.0
  %4825 = vmatmul.mubr.f32.gmra.mrb[0].mxu0 %v4718
  %v4826 = vpop.f32.mrb[0].mxu0
  %v4827 = vpop.f32.mrb[0].mxu0
  %4828 = vmatprep.mubr.f32.mxu0 0.0
  %4829 = vmatmul.mubr.f32.gmra.mrb[0].mxu0 %v4719
  %v4830 = vpop.f32.mrb[0].mxu0
  %v4831 = vpop.f32.mrb[0].mxu0
  %4832 = vmatprep.mubr.f32.mxu0 0.0
  %4833 = vmatmul.mubr.f32.gmra.mrb[0].mxu0 %v4720
  %v4834 = vpop.f32.mrb[0].mxu0
  %v4835 = vpop.f32.mrb[0].mxu0
  %4836 = vmatprep.mubr.f32.mxu0 0.0
  %4837 = vmatmul.mubr.f32.gmra.mrb[0].mxu0 %v4721
  %v4838 = vpop.f32.mrb[0].mxu0
  %v4839 = vpop.f32.mrb[0].mxu0
  %4840 = vmatprep.mubr.f32.mxu0 0.0
  %4841 = vmatmul.mubr.f32.gmra.mrb[0].mxu0 %v4722
  %v4842 = vpop.f32.mrb[0].mxu0
  %v4843 = vpop.f32.mrb[0].mxu0
  %4844 = vdwg.mxu0
  %v4845 = vadd.f32 %v4277, %v4795
  %v4846 = vadd.f32 %v4278, %v4800
  %v4847 = vadd.f32 %v4279, %v4805
  %v4848 = vadd.f32 %v4280, %v4810
  %v4849 = vlaneseq
  %v4850 = vshrl.u32 %v4849, 7
  %v4851 = vsub.s32 0, %v4850
  %v4852 = vrot.slane %v4727, %v4851
  %v4853 = vadd.f32 %v4845, %v4852
  %v4854 = vadd.f32 %v4846, %v4852
  %v4855 = vadd.f32 %v4847, %v4852
  %v4856 = vadd.f32 %v4848, %v4852
  %v4857 = vsel %vm31, %v4853, 0.0
  %4858 = vadd.xlane.f32.xlu0 %v4857
  %v4859 = vpop.xlane.xlu0 %4858
  %v4860 = vsel %vm31, %v4854, 0.0
  %4861 = vadd.xlane.f32.xlu0 %v4860
  %v4862 = vpop.xlane.xlu0 %4861
  %v4863 = vsel %vm31, %v4855, 0.0
  %4864 = vadd.xlane.f32.xlu0 %v4863
  %v4865 = vpop.xlane.xlu0 %4864
  %v4866 = vsel %vm31, %v4856, 0.0
  %4867 = vadd.xlane.f32.xlu0 %v4866
  %v4868 = vpop.xlane.xlu0 %4867
  %v4869 = vmul.f32 %v4859, %v68
  %v4870 = vmul.f32 %v4862, %v68
  %v4871 = vmul.f32 %v4865, %v68
  %v4872 = vmul.f32 %v4868, %v68
  %v4873 = vsub.f32 %v4853, %v4869
  %v4874 = vsub.f32 %v4854, %v4870
  %v4875 = vsub.f32 %v4855, %v4871
  %v4876 = vsub.f32 %v4856, %v4872
  %v4877 = vmul.f32 %v4873, %v4873
  %v4878 = vmul.f32 %v4874, %v4874
  %v4879 = vmul.f32 %v4875, %v4875
  %v4880 = vmul.f32 %v4876, %v4876
  %v4881 = vsel %vm31, %v4877, 0.0
  %4882 = vadd.xlane.f32.xlu0 %v4881
  %v4883 = vpop.xlane.xlu0 %4882
  %v4884 = vsel %vm31, %v4878, 0.0
  %4885 = vadd.xlane.f32.xlu0 %v4884
  %v4886 = vpop.xlane.xlu0 %4885
  %v4887 = vsel %vm31, %v4879, 0.0
  %4888 = vadd.xlane.f32.xlu0 %v4887
  %v4889 = vpop.xlane.xlu0 %4888
  %v4890 = vsel %vm31, %v4880, 0.0
  %4891 = vadd.xlane.f32.xlu0 %v4890
  %v4892 = vpop.xlane.xlu0 %4891
  %v4893 = vmul.f32 %v4883, %v68
  %v4894 = vmul.f32 %v4886, %v68
  %v4895 = vmul.f32 %v4889, %v68
  %v4896 = vmul.f32 %v4892, %v68
  %v4897 = vadd.f32 %v4893, 1e-05
  %v4898 = vadd.f32 %v4894, 1e-05
  %v4899 = vadd.f32 %v4895, 1e-05
  %v4900 = vadd.f32 %v4896, 1e-05
  %v4901 = vrsqrt.pop %v4897
  %v4902 = vrsqrt.pop %v4898
  %v4903 = vrsqrt.pop %v4899
  %v4904 = vrsqrt.pop %v4900
  %v4905 = vmul.f32 %v4873, %v4901
  %v4906 = vmul.f32 %v4874, %v4902
  %v4907 = vmul.f32 %v4875, %v4903
  %v4908 = vmul.f32 %v4876, %v4904
  %v4909 = vld [vmem:[%s2 + $0xa0] sm:$0xff]
  %v4910 = vld [vmem:[%s2 + $0xa8] sm:$0xff]
  %v4911 = vld [vmem:[%s2 + $0xb0] sm:$0xff]
  %v4912 = vld [vmem:[%s2 + $0xb8] sm:$0xff]
  %v4913 = vld [vmem:[%s2 + $0xc8] sm:$0x1]
  %v4914 = vlaneseq
  %v4915 = vshrl.u32 %v4914, 7
  %v4916 = vsub.s32 0, %v4915
  %v4917 = vrot.slane %v4913, %v4916
  %v4919 = vsel %vm31, %v4905, 0
  %v4922 = vsel %vm31, %v4906, 0
  %v4925 = vsel %vm31, %v4907, 0
  %v4928 = vsel %vm31, %v4908, 0
  %4930 = vmatprep.subr.mxu0 0.0
  %4931 = vmatpush1.msra.mxu0 %v4909
  %4932 = vmatprep.subr.mxu0 0.0
  %4933 = vmatpush1.msra.mxu0 %v4910
  %4934 = vmatprep.subr.mxu0 0.0
  %4935 = vmatpush1.msra.mxu0 %v4911
  %4936 = vmatprep.subr.mxu0 0.0
  %4937 = vmatpush1.msra.mxu0 %v4912
  %4938 = vmatprep.subr.mxu0 0.0
  %4939 = vmatpush1.msra.mxu0 0.0
  %4940 = vmatprep.subr.mxu0 0.0
  %4941 = vmatpush1.msra.mxu0 0.0
  %4942 = vmatprep.subr.mxu0 0.0
  %4943 = vmatpush1.msra.mxu0 0.0
  %4944 = vmatprep.subr.mxu0 0.0
  %4945 = vmatpush1.msra.mxu0 0.0
  %4946 = vmatprep.subr.mxu0 0.0
  %4947 = vmatpush1.msra.mxu0 0.0
  %4948 = vmatprep.subr.mxu0 0.0
  %4949 = vmatpush1.msra.mxu0 0.0
  %4950 = vmatprep.subr.mxu0 0.0
  %4951 = vmatpush1.msra.mxu0 0.0
  %4952 = vmatprep.subr.mxu0 0.0
  %4953 = vmatpush1.msra.mxu0 0.0
  %4954 = vmatprep.subr.mxu0 0.0
  %4955 = vmatpush1.msra.mxu0 0.0
  %4956 = vmatprep.subr.mxu0 0.0
  %4957 = vmatpush1.msra.mxu0 0.0
  %4958 = vmatprep.subr.mxu0 0.0
  %4959 = vmatpush1.msra.mxu0 0.0
  %4960 = vmatprep.subr.mxu0 0.0
  %4961 = vmatpush1.msra.mxu0 0.0
  %4962 = vmatprep.subr.mxu0 0.0
  %4963 = vmatpush1.msra.mxu0 0.0
  %4964 = vmatprep.subr.mxu0 0.0
  %4965 = vmatpush1.msra.mxu0 0.0
  %4966 = vmatprep.subr.mxu0 0.0
  %4967 = vmatpush1.msra.mxu0 0.0
  %4968 = vmatprep.subr.mxu0 0.0
  %4969 = vmatpush1.msra.mxu0 0.0
  %4970 = vmatprep.subr.mxu0 0.0
  %4971 = vmatpush1.msra.mxu0 0.0
  %4972 = vmatprep.subr.mxu0 0.0
  %4973 = vmatpush1.msra.mxu0 0.0
  %4974 = vmatprep.subr.mxu0 0.0
  %4975 = vmatpush1.msra.mxu0 0.0
  %4976 = vmatprep.subr.mxu0 0.0
  %4977 = vmatpush1.msra.mxu0 0.0
  %4978 = vmatprep.subr.mxu0 0.0
  %4979 = vmatpush1.msra.mxu0 0.0
  %4980 = vmatprep.subr.mxu0 0.0
  %4981 = vmatpush1.msra.mxu0 0.0
  %4982 = vmatprep.subr.mxu0 0.0
  %4983 = vmatpush1.msra.mxu0 0.0
  %4984 = vmatprep.subr.mxu0 0.0
  %4985 = vmatpush1.msra.mxu0 0.0
  %4986 = vmatprep.subr.mxu0 0.0
  %4987 = vmatpush1.msra.mxu0 0.0
  %4988 = vmatprep.subr.mxu0 0.0
  %4989 = vmatpush1.msra.mxu0 0.0
  %4990 = vmatprep.subr.mxu0 0.0
  %4991 = vmatpush1.msra.mxu0 0.0
  %4992 = vmatprep.subr.mxu0 0.0
  %4993 = vmatpush1.msra.mxu0 0.0
  %4994 = vmatprep.mubr.f32.mxu0 0.0
  %4995 = vmatmul.mubr.f32.gmra.mrb[0].mxu0 %v4919
  %v4996 = vpop.f32.mrb[0].mxu0
  %v4997 = vadd.f32 %v4917, %v4996
  %v4998 = vpop.f32.mrb[0].mxu0
  %4999 = vmatprep.mubr.f32.mxu0 0.0
  %5000 = vmatmul.mubr.f32.gmra.mrb[0].mxu0 %v4922
  %v5001 = vpop.f32.mrb[0].mxu0
  %v5002 = vadd.f32 %v4917, %v5001
  %v5003 = vpop.f32.mrb[0].mxu0
  %5004 = vmatprep.mubr.f32.mxu0 0.0
  %5005 = vmatmul.mubr.f32.gmra.mrb[0].mxu0 %v4925
  %v5006 = vpop.f32.mrb[0].mxu0
  %v5007 = vadd.f32 %v4917, %v5006
  %v5008 = vpop.f32.mrb[0].mxu0
  %5009 = vmatprep.mubr.f32.mxu0 0.0
  %5010 = vmatmul.mubr.f32.gmra.mrb[0].mxu0 %v4928
  %v5011 = vpop.f32.mrb[0].mxu0
  %v5012 = vadd.f32 %v4917, %v5011
  %v5013 = vpop.f32.mrb[0].mxu0
  %5014 = vdwg.mxu0
  %5015 = vst [vmem:[%s3] sm:$0xff] %v4997
  %5016 = vst [vmem:[%s3 + $0x8] sm:$0xff] %v5002
  %5017 = vst [vmem:[%s3 + $0x10] sm:$0xff] %v5007
  %5018 = vst [vmem:[%s3 + $0x18] sm:$0xff] %v5012
  // Predicated region
  $region14: #{forward.1} parent=0 // pred_check
    _
  $region15: #{forward.1} parent=0 // pred_check_branch
    %5020 = sbr.rel (0) target = $region17
  $region16: #{forward.1} parent=0 // pred_region
    _
  $region17: #{forward.1} parent=0 // pred_fallthru
    _
  // Predicated region
  $region18: #{forward.1} parent=0 // pred_check
    _
  $region19: #{forward.1} parent=0 // pred_check_branch
    %5022 = sbr.rel (0) target = $region21
  $region20: #{forward.1} parent=0 // pred_region
    _
  $region21: #{forward.1} parent=0 // pred_fallthru
    _

</llo_original>
